<compile_context>
chip_gen: v7x
topology: tpu7x:2x2x1
jax: 0.10.0
libtpu: 0.0.40
codegen_flags: <defaults>
</compile_context>

<pallas_src>
import functools

import jax
import jax.numpy as jnp
from jax.experimental import pallas as pl
from jax.experimental.pallas import tpu as pltpu

LN_EPS = 1e-12
_VMEM_BUDGET = 24 * 1024 * 1024       # tile-selection budget (safe for v7x 64 MiB)
_VMEM_LIMIT = 32 * 1024 * 1024        # explicit scoped-VMEM limit (safe on v5e..v7x)


def _pick_tile(dim, candidates):
    """Largest candidate that evenly divides `dim`, else the full dim."""
    for c in candidates:
        if c <= dim and dim % c == 0:
            return c
    return dim


def _attn_tile_cap():
    """256-wide attention tiles on v6e/v7x (256-wide MXU), 128 elsewhere (v5e)."""
    try:
        kind = jax.devices()[0].device_kind.lower()
    except Exception:
        return 128
    if "v6" in kind or "v7" in kind:
        return 256
    return 128


# --------------------------------------------------------------------------
# Tiled dense kernel: o = act(x @ w + b), K-axis accumulation in f32 scratch.
# --------------------------------------------------------------------------
def _dense_kernel(x_ref, w_ref, b_ref, o_ref, acc_ref, *, activation):
    k = pl.program_id(2)

    @pl.when(k == 0)
    def _():
        acc_ref[...] = jnp.zeros_like(acc_ref)

    acc_ref[...] += jnp.dot(x_ref[...], w_ref[...],
                            preferred_element_type=jnp.float32)

    @pl.when(k == pl.num_programs(2) - 1)
    def _():
        y = acc_ref[...] + b_ref[...].astype(jnp.float32)
        if activation == "gelu":
            # TODO(synk): HF BERT uses erf-GELU; tanh approximation is ~1e-3 off.
            y = jax.nn.gelu(y, approximate=True)
        elif activation == "tanh":
            y = jnp.tanh(y)
        o_ref[...] = y.astype(o_ref.dtype)


def dense(x2d, w, b, activation="none"):
    M, K = x2d.shape
    N = w.shape[1]
    tm = _pick_tile(M, (1024, 512, 256, 128, 64, 32, 16, 8))
    tn = _pick_tile(N, (512, 256, 128))
    tk = _pick_tile(K, (512, 256, 128))
    ax = x2d.dtype.itemsize
    aw = w.dtype.itemsize

    def _fp(tm_, tn_, tk_):
        db = 2  # double buffering
        return (tm_ * tk_ * ax * db + tk_ * tn_ * aw * db
                + tm_ * tn_ * ax * db + tm_ * tn_ * 4 + tn_ * 4 * db)

    while _fp(tm, tn, tk) > _VMEM_BUDGET:
        cand = [c for c in (512, 256, 128, 64, 32, 16, 8) if c < tm and M % c == 0]
        if not cand:
            break
        tm = cand[0]

    grid = (M // tm, N // tn, K // tk)
    # TODO(synk): on v5e, if the K-loop weight DMA is exposed, add
    # pipeline_mode=pl.Buffered(3) on the weight BlockSpec below.
    return pl.pallas_call(
        functools.partial(_dense_kernel, activation=activation),
        out_shape=jax.ShapeDtypeStruct((M, N), x2d.dtype),
        grid=grid,
        in_specs=[
            pl.BlockSpec((tm, tk), lambda i, j, k: (i, k)),
            pl.BlockSpec((tk, tn), lambda i, j, k: (k, j)),
            pl.BlockSpec((1, tn), lambda i, j, k: (0, j)),
        ],
        out_specs=pl.BlockSpec((tm, tn), lambda i, j, k: (i, j)),
        scratch_shapes=[pltpu.VMEM((tm, tn), jnp.float32)],
        compiler_params=pltpu.CompilerParams(
            dimension_semantics=("parallel", "parallel", "arbitrary"),
            vmem_limit_bytes=_VMEM_LIMIT),
    )(x2d, w, b.reshape(1, N))


# --------------------------------------------------------------------------
# Tiled dense + bias + residual add + LayerNorm (fused epilogue).
# N (= hidden) is kept whole so LN statistics are computed in one block.
# --------------------------------------------------------------------------
def _dense_add_ln_kernel(x_ref, w_ref, b_ref, res_ref, g_ref, bt_ref,
                         o_ref, acc_ref):
    k = pl.program_id(1)

    @pl.when(k == 0)
    def _():
        acc_ref[...] = jnp.zeros_like(acc_ref)

    acc_ref[...] += jnp.dot(x_ref[...], w_ref[...],
                            preferred_element_type=jnp.float32)

    @pl.when(k == pl.num_programs(1) - 1)
    def _():
        y = (acc_ref[...] + b_ref[...].astype(jnp.float32)
             + res_ref[...].astype(jnp.float32))
        mean = jnp.mean(y, axis=-1, keepdims=True)
        var = jnp.mean(jnp.square(y - mean), axis=-1, keepdims=True)
        y = (y - mean) * jax.lax.rsqrt(var + LN_EPS)
        y = y * g_ref[...].astype(jnp.float32) + bt_ref[...].astype(jnp.float32)
        o_ref[...] = y.astype(o_ref.dtype)


def dense_add_ln(x2d, w, b, residual, gamma, beta):
    M, K = x2d.shape
    N = w.shape[1]
    tm = _pick_tile(M, (1024, 512, 256, 128, 64, 32, 16, 8))
    tk = _pick_tile(K, (512, 256, 128))
    ax = x2d.dtype.itemsize
    aw = w.dtype.itemsize

    def _fp(tm_, tk_):
        db = 2  # double buffering
        return (tm_ * tk_ * ax * db + tk_ * N * aw * db      # x, w
                + tm_ * N * ax * db + tm_ * N * ax * db      # residual, out
                + tm_ * N * 4 + 3 * N * 4 * db)              # acc, bias/gamma/beta

    # Re-derive tiles so the full-N-resident footprint fits v7x VMEM as well.
    while _fp(tm, tk) > _VMEM_BUDGET:
        cand = [c for c in (512, 256, 128, 64, 32, 16, 8) if c < tm and M % c == 0]
        if cand:
            tm = cand[0]
            continue
        cand = [c for c in (256, 128) if c < tk and K % c == 0]
        if cand:
            tk = cand[0]
            continue
        break

    grid = (M // tm, K // tk)
    return pl.pallas_call(
        _dense_add_ln_kernel,
        out_shape=jax.ShapeDtypeStruct((M, N), x2d.dtype),
        grid=grid,
        in_specs=[
            pl.BlockSpec((tm, tk), lambda i, k: (i, k)),
            pl.BlockSpec((tk, N), lambda i, k: (k, 0)),
            pl.BlockSpec((1, N), lambda i, k: (0, 0)),
            pl.BlockSpec((tm, N), lambda i, k: (i, 0)),
            pl.BlockSpec((1, N), lambda i, k: (0, 0)),
            pl.BlockSpec((1, N), lambda i, k: (0, 0)),
        ],
        out_specs=pl.BlockSpec((tm, N), lambda i, k: (i, 0)),
        scratch_shapes=[pltpu.VMEM((tm, N), jnp.float32)],
        compiler_params=pltpu.CompilerParams(
            dimension_semantics=("parallel", "arbitrary"),
            vmem_limit_bytes=_VMEM_LIMIT),
    )(x2d, w, b.reshape(1, N), residual, gamma.reshape(1, N), beta.reshape(1, N))


# --------------------------------------------------------------------------
# Embedding epilogue: fused position-embedding add + LayerNorm.
# --------------------------------------------------------------------------
def _embed_ln_kernel(x_ref, pos_ref, g_ref, b_ref, o_ref):
    x = x_ref[0].astype(jnp.float32) + pos_ref[...].astype(jnp.float32)
    mean = jnp.mean(x, axis=-1, keepdims=True)
    var = jnp.mean(jnp.square(x - mean), axis=-1, keepdims=True)
    y = (x - mean) * jax.lax.rsqrt(var + LN_EPS)
    y = y * g_ref[...].astype(jnp.float32) + b_ref[...].astype(jnp.float32)
    o_ref[0] = y.astype(o_ref.dtype)


def embed_layer_norm(tok3d, pos2d, gamma, beta):
    B, S, H = tok3d.shape
    ts = _pick_tile(S, (512, 256, 128, 64, 32, 16, 8))
    return pl.pallas_call(
        _embed_ln_kernel,
        out_shape=jax.ShapeDtypeStruct((B, S, H), tok3d.dtype),
        grid=(B, S // ts),
        in_specs=[
            pl.BlockSpec((1, ts, H), lambda b, s: (b, s, 0)),
            pl.BlockSpec((ts, H), lambda b, s: (s, 0)),
            pl.BlockSpec((1, H), lambda b, s: (0, 0)),
            pl.BlockSpec((1, H), lambda b, s: (0, 0)),
        ],
        out_specs=pl.BlockSpec((1, ts, H), lambda b, s: (b, s, 0)),
        compiler_params=pltpu.CompilerParams(
            dimension_semantics=("parallel", "parallel")),
    )(tok3d, pos2d, gamma.reshape(1, H), beta.reshape(1, H))


# --------------------------------------------------------------------------
# Flash-style attention reading the fused (B, S, 3H) QKV projection directly
# (columns [Q | K | V], head h at columns h*dh:(h+1)*dh within each third) and
# writing a lane-dense (B, S, H) output.  Heads are looped inside the kernel;
# per-(batch, kv-tile) valid-token counts (scalar prefetch) skip fully-masked
# KV tiles.
# --------------------------------------------------------------------------
def _flash_attn_kernel(counts_ref, q_ref, k_ref, v_ref, bias_ref, o_ref,
                       m_sc, l_sc, acc_sc, *, heads, dh, scale):
    b = pl.program_id(0)
    ki = pl.program_id(2)

    @pl.when(ki == 0)
    def _():
        m_sc[...] = jnp.full_like(m_sc, -jnp.inf)
        l_sc[...] = jnp.zeros_like(l_sc)
        acc_sc[...] = jnp.zeros_like(acc_sc)

    @pl.when(counts_ref[b, ki] > 0)
    def _():
        q_all = q_ref[0]                                   # (tq, H) bf16
        k_all = k_ref[0]                                   # (tk, H) bf16
        v_all = v_ref[0]                                   # (tk, H) bf16
        bias = bias_ref[0].astype(jnp.float32)             # (1, tk)
        scale_c = jnp.asarray(scale, q_all.dtype)

        for h in range(heads):                             # static unroll
            sl = slice(h * dh, (h + 1) * dh)
            q = q_all[:, sl] * scale_c                     # scale on (tq, dh)
            k = k_all[:, sl]
            v = v_all[:, sl]
            s = jax.lax.dot_general(q, k, (((1,), (1,)), ((), ())),
                                    preferred_element_type=jnp.float32)
            s = s + bias                                   # (tq, tk) f32

            m_prev = m_sc[h]                               # (tq, 1) f32
            l_prev = l_sc[h]
            m_new = jnp.maximum(m_prev, jnp.max(s, axis=-1, keepdims=True))
            alpha = jnp.exp(m_prev - m_new)
            # exp in the activation dtype (bf16 on v6e/v7x): p feeds the bf16
            # PV matmul anyway; l accumulation stays in f32.
            p = jnp.exp((s - m_new).astype(v.dtype))
            l_sc[h] = alpha * l_prev + jnp.sum(p.astype(jnp.float32),
                                               axis=-1, keepdims=True)
            acc_sc[h] = alpha * acc_sc[h] + jnp.dot(
                p, v, preferred_element_type=jnp.float32)
            m_sc[h] = m_new

    @pl.when(ki == pl.num_programs(2) - 1)
    def _():
        cols = []
        for h in range(heads):
            # guard l == 0 (fully padded row) -> output 0 instead of NaN
            inv = pl.reciprocal(jnp.maximum(l_sc[h], 1e-30), approx=True)
            cols.append(acc_sc[h] * inv)
        o_ref[0] = jnp.concatenate(cols, axis=-1).astype(o_ref.dtype)


def flash_attention(qkv3d, attn_bias, attention_mask, *, heads, scale):
    B, S, threeH = qkv3d.shape
    H = threeH // 3
    dh = H // heads

    cap = _attn_tile_cap()
    cands = tuple(c for c in (256, 128, 64, 32, 16, 8) if c <= cap)
    tq = _pick_tile(S, cands)
    tk = _pick_tile(S, cands)
    nkv = S // tk

    # per-(batch, kv-tile) number of valid (non-padded) tokens -> SMEM prefetch
    kv_counts = attention_mask.reshape(B, nkv, tk).sum(axis=-1).astype(jnp.int32)

    grid = (B, S // tq, nkv)
    q_spec = pl.BlockSpec((1, tq, H), lambda b, qi, ki, cnt: (b, qi, 0))
    k_spec = pl.BlockSpec((1, tk, H), lambda b, qi, ki, cnt: (b, ki, 1))
    v_spec = pl.BlockSpec((1, tk, H), lambda b, qi, ki, cnt: (b, ki, 2))
    bias_spec = pl.BlockSpec((1, 1, tk), lambda b, qi, ki, cnt: (b, 0, ki))
    out_spec = pl.BlockSpec((1, tq, H), lambda b, qi, ki, cnt: (b, qi, 0))

    return pl.pallas_call(
        functools.partial(_flash_attn_kernel, heads=heads, dh=dh, scale=scale),
        out_shape=jax.ShapeDtypeStruct((B, S, H), qkv3d.dtype),
        grid_spec=pltpu.PrefetchScalarGridSpec(
            num_scalar_prefetch=1,
            grid=grid,
            in_specs=[q_spec, k_spec, v_spec, bias_spec],
            out_specs=out_spec,
            scratch_shapes=[
                pltpu.VMEM((heads, tq, 1), jnp.float32),    # running max m
                pltpu.VMEM((heads, tq, 1), jnp.float32),    # running sum l
                pltpu.VMEM((heads, tq, dh), jnp.float32),   # output accumulator
            ]),
        compiler_params=pltpu.CompilerParams(
            dimension_semantics=("parallel", "parallel", "arbitrary")),
    )(kv_counts, qkv3d, qkv3d, qkv3d, attn_bias)


# --------------------------------------------------------------------------
# Parameter construction (deterministic, synthetic; bf16 weights)
# --------------------------------------------------------------------------
def init_params(key, *, vocab, max_pos, hidden, heads, ffn, layers):
    wdtype = jnp.bfloat16

    def nrm(k, shape, scale=0.02):
        return (scale * jax.random.normal(k, shape, dtype=jnp.float32)).astype(wdtype)

    keys = iter(jax.random.split(key, 8 + layers * 8))
    params = {
        "tok_emb": nrm(next(keys), (vocab, hidden)),
        "pos_emb": nrm(next(keys), (max_pos, hidden)),
        "emb_ln_g": jnp.ones((hidden,), jnp.float32),
        "emb_ln_b": jnp.zeros((hidden,), jnp.float32),
        "pool_w": nrm(next(keys), (hidden, hidden)),
        "pool_b": jnp.zeros((hidden,), jnp.float32),
        "layers": [],
    }
    for _ in range(layers):
        layer = {
            # fused QKV projection: output columns are [Q | K | V]
            "w_qkv": nrm(next(keys), (hidden, 3 * hidden)),
            "b_qkv": jnp.zeros((3 * hidden,), jnp.float32),
            "wo": nrm(next(keys), (hidden, hidden)),
            "bo": jnp.zeros((hidden,), jnp.float32),
            "ln1_g": jnp.ones((hidden,), jnp.float32),
            "ln1_b": jnp.zeros((hidden,), jnp.float32),
            "w_ffn1": nrm(next(keys), (hidden, ffn)),
            "b_ffn1": jnp.zeros((ffn,), jnp.float32),
            "w_ffn2": nrm(next(keys), (ffn, hidden)),
            "b_ffn2": jnp.zeros((hidden,), jnp.float32),
            "ln2_g": jnp.ones((hidden,), jnp.float32),
            "ln2_b": jnp.zeros((hidden,), jnp.float32),
        }
        params["layers"].append(layer)
    return params


# --------------------------------------------------------------------------
# Forward pass (glue in JAX, hot paths in Pallas)
# --------------------------------------------------------------------------
def transformer_forward(params, input_ids, attention_mask, *, heads):
    B, S = input_ids.shape
    H = params["tok_emb"].shape[1]
    dh = H // heads
    scale = 1.0 / (dh ** 0.5)

    # token-embedding gather is XLA glue; (+pos, LayerNorm) is one fused kernel
    tok = jnp.take(params["tok_emb"], input_ids, axis=0)          # (B, S, H)
    x = embed_layer_norm(tok, params["pos_emb"][:S],
                         params["emb_ln_g"], params["emb_ln_b"]).reshape(B * S, H)

    # additive attention bias from padding mask: 0 where attended, -1e9 masked
    attn_bias = ((1.0 - attention_mask.astype(jnp.float32)) * -1e9).reshape(B, 1, S)

    for layer in params["layers"]:
        # fused QKV projection: one tiled matmul -> (B, S, 3H); no transposes
        qkv = dense(x, layer["w_qkv"], layer["b_qkv"]).reshape(B, S, 3 * H)
        # flash attention reads QKV columns directly, writes (B, S, H) densely
        ctx = flash_attention(qkv, attn_bias, attention_mask,
                              heads=heads, scale=scale).reshape(B * S, H)
        # output projection + residual + LayerNorm fused in one kernel
        x = dense_add_ln(ctx, layer["wo"], layer["bo"],
                         x, layer["ln1_g"], layer["ln1_b"])
        # feed-forward: GELU matmul, then FFN2 + residual + LayerNorm fused
        h = dense(x, layer["w_ffn1"], layer["b_ffn1"], activation="gelu")
        x = dense_add_ln(h, layer["w_ffn2"], layer["b_ffn2"],
                         x, layer["ln2_g"], layer["ln2_b"])

    last_hidden = x.reshape(B, S, H)
    # pooler: tanh(W @ hidden[:, 0] + b)
    pooled = dense(last_hidden[:, 0, :], params["pool_w"], params["pool_b"],
                   activation="tanh")
    return last_hidden, pooled


# --------------------------------------------------------------------------
# Main
# --------------------------------------------------------------------------
if __name__ == "__main__":
    VOCAB, MAX_POS = 128, 16
    BATCH, SEQ = 2, 8
    # hidden=128 keeps all dense / attention outputs lane-dense on TPU while
    # remaining a small test configuration.
    HIDDEN, HEADS, FFN, LAYERS = 128, 4, 256, 2

    root = jax.random.PRNGKey(0)
    k_params, k_ids = jax.random.split(root)

    params = init_params(
        k_params, vocab=VOCAB, max_pos=MAX_POS, hidden=HIDDEN,
        heads=HEADS, ffn=FFN, layers=LAYERS,
    )

    input_ids = jax.random.randint(k_ids, (BATCH, SEQ), 0, VOCAB, dtype=jnp.int32)
    attention_mask = jnp.ones((BATCH, SEQ), dtype=jnp.int32).at[1, 6:].set(0)

    fwd = jax.jit(functools.partial(transformer_forward, heads=HEADS))
    last_hidden_state, pooler_output = fwd(params, input_ids, attention_mask)
    jax.block_until_ready((last_hidden_state, pooler_output))

    assert last_hidden_state.shape == (BATCH, SEQ, HIDDEN)
    assert pooler_output.shape == (BATCH, HIDDEN)
    assert bool(jnp.all(jnp.isfinite(last_hidden_state.astype(jnp.float32))))
    assert bool(jnp.all(jnp.isfinite(pooler_output.astype(jnp.float32))))
    print("KERNEL_OK")
</pallas_src>

<mosaic_0001>
module attributes {stable_mosaic.version = 11 : i64} {
  func.func @_dense_kernel(%arg0: i32, %arg1: i32, %arg2: i32, %arg3: memref<16x128xbf16, #tpu.memory_space<vmem>>, %arg4: memref<128x128xbf16, #tpu.memory_space<vmem>>, %arg5: memref<1x128xf32, #tpu.memory_space<vmem>>, %arg6: memref<16x128xbf16, #tpu.memory_space<vmem>>, %arg7: memref<16x128xf32, #tpu.memory_space<vmem>>) attributes {dimension_semantics = [#tpu.dimension_semantics<parallel>, #tpu.dimension_semantics<parallel>, #tpu.dimension_semantics<arbitrary>], iteration_bounds = array<i64: 1, 3, 1>, scalar_prefetch = 0 : i64, scratch_operands = 1 : i64, tpu.core_type = #tpu.core_type<tc>, window_params = [{transform_indices = @transform_0, window_bounds = array<i64: 16, 128>}, {transform_indices = @transform_1, window_bounds = array<i64: 128, 128>}, {transform_indices = @transform_2, window_bounds = array<i64: 1, 128>}, {transform_indices = @transform_3, window_bounds = array<i64: 16, 128>}]} {
    %c0_i32 = arith.constant 0 : i32
    %0 = arith.cmpi eq, %arg2, %c0_i32 : i32
    %1 = arith.extui %0 : i1 to i32
    %c0_i32_0 = arith.constant 0 : i32
    %2 = arith.cmpi ne, %1, %c0_i32_0 : i32
    scf.if %2 {
      %cst_10 = arith.constant 0.000000e+00 : f32
      %12 = vector.broadcast %cst_10 : f32 to vector<16x128xf32>
      %c0_11 = arith.constant 0 : index
      %c0_12 = arith.constant 0 : index
      %13 = vector.load %arg7[%c0_11, %c0_12] : memref<16x128xf32, #tpu.memory_space<vmem>>, vector<16x128xf32>
      tpu.vector_store %arg7[%c0_11, %c0_12], %12 {strides = array<i32>} : memref<16x128xf32, #tpu.memory_space<vmem>>, vector<16x128xf32>,
    } else {
    }
    %c0 = arith.constant 0 : index
    %c0_1 = arith.constant 0 : index
    %3 = vector.load %arg7[%c0, %c0_1] : memref<16x128xf32, #tpu.memory_space<vmem>>, vector<16x128xf32>
    %c0_2 = arith.constant 0 : index
    %c0_3 = arith.constant 0 : index
    %4 = vector.load %arg3[%c0_2, %c0_3] : memref<16x128xbf16, #tpu.memory_space<vmem>>, vector<16x128xbf16>
    %c0_4 = arith.constant 0 : index
    %c0_5 = arith.constant 0 : index
    %5 = vector.load %arg4[%c0_4, %c0_5] : memref<128x128xbf16, #tpu.memory_space<vmem>>, vector<128x128xbf16>
    %cst = arith.constant dense<0.000000e+00> : vector<16x128xf32>
    %6 = tpu.matmul %4, %5, %cst {dimension_numbers = #tpu.dot_dimension_numbers<[1], [0], [0], [1], [0, 0, 1, 1], [], []>} : vector<16x128xbf16>, vector<128x128xbf16>, vector<16x128xf32> -> vector<16x128xf32>
    %7 = arith.addf %3, %6 : vector<16x128xf32>
    %c0_6 = arith.constant 0 : index
    %c0_7 = arith.constant 0 : index
    %8 = vector.load %arg7[%c0_6, %c0_7] : memref<16x128xf32, #tpu.memory_space<vmem>>, vector<16x128xf32>
    tpu.vector_store %arg7[%c0_6, %c0_7], %7 {strides = array<i32>} : memref<16x128xf32, #tpu.memory_space<vmem>>, vector<16x128xf32>,
    %c0_i32_8 = arith.constant 0 : i32
    %9 = arith.cmpi eq, %arg2, %c0_i32_8 : i32
    %10 = arith.extui %9 : i1 to i32
    %c0_i32_9 = arith.constant 0 : i32
    %11 = arith.cmpi ne, %10, %c0_i32_9 : i32
    scf.if %11 {
      %c0_10 = arith.constant 0 : index
      %c0_11 = arith.constant 0 : index
      %12 = vector.load %arg7[%c0_10, %c0_11] : memref<16x128xf32, #tpu.memory_space<vmem>>, vector<16x128xf32>
      %c0_12 = arith.constant 0 : index
      %c0_13 = arith.constant 0 : index
      %13 = vector.load %arg5[%c0_12, %c0_13] : memref<1x128xf32, #tpu.memory_space<vmem>>, vector<1x128xf32>
      %14 = vector.broadcast %13 : vector<1x128xf32> to vector<16x128xf32>
      %15 = arith.addf %12, %14 : vector<16x128xf32>
      %16 = arith.truncf %15 : vector<16x128xf32> to vector<16x128xbf16>
      %c0_14 = arith.constant 0 : index
      %c0_15 = arith.constant 0 : index
      %17 = vector.load %arg6[%c0_14, %c0_15] : memref<16x128xbf16, #tpu.memory_space<vmem>>, vector<16x128xbf16>
      tpu.vector_store %arg6[%c0_14, %c0_15], %16 {strides = array<i32>} : memref<16x128xbf16, #tpu.memory_space<vmem>>, vector<16x128xbf16>,
    } else {
    }
    return
  }
  func.func @transform_0(%arg0: i32, %arg1: i32, %arg2: i32) -> (i32, i32) {
    %c0_i32 = arith.constant 0 : i32
    return %arg0, %arg2 : i32, i32
  }
  func.func @transform_1(%arg0: i32, %arg1: i32, %arg2: i32) -> (i32, i32) {
    %c0_i32 = arith.constant 0 : i32
    return %arg2, %arg1 : i32, i32
  }
  func.func @transform_2(%arg0: i32, %arg1: i32, %arg2: i32) -> (i32, i32) {
    %c0_i32 = arith.constant 0 : i32
    %c0_i32_0 = arith.constant 0 : i32
    return %c0_i32, %arg1 : i32, i32
  }
  func.func @transform_3(%arg0: i32, %arg1: i32, %arg2: i32) -> (i32, i32) {
    %c0_i32 = arith.constant 0 : i32
    return %arg0, %arg1 : i32, i32
  }
}

module attributes {stable_mosaic.version = 11 : i64} {
  func.func @_embed_ln_kernel(%arg0: i32, %arg1: i32, %arg2: memref<1x8x128xbf16, #tpu.memory_space<vmem>>, %arg3: memref<8x128xbf16, #tpu.memory_space<vmem>>, %arg4: memref<1x128xf32, #tpu.memory_space<vmem>>, %arg5: memref<1x128xf32, #tpu.memory_space<vmem>>, %arg6: memref<1x8x128xbf16, #tpu.memory_space<vmem>>) attributes {dimension_semantics = [#tpu.dimension_semantics<parallel>, #tpu.dimension_semantics<parallel>], iteration_bounds = array<i64: 2, 1>, scalar_prefetch = 0 : i64, scratch_operands = 0 : i64, tpu.core_type = #tpu.core_type<tc>, window_params = [{transform_indices = @transform_0, window_bounds = array<i64: 1, 8, 128>}, {transform_indices = @transform_1, window_bounds = array<i64: 8, 128>}, {pipeline_mode = #tpu.pipeline_mode<synchronous>, transform_indices = @transform_2, window_bounds = array<i64: 1, 128>}, {pipeline_mode = #tpu.pipeline_mode<synchronous>, transform_indices = @transform_3, window_bounds = array<i64: 1, 128>}, {transform_indices = @transform_4, window_bounds = array<i64: 1, 8, 128>}]} {
    %c0 = arith.constant 0 : index
    %c0_0 = arith.constant 0 : index
    %c0_1 = arith.constant 0 : index
    %0 = vector.load %arg2[%c0, %c0_0, %c0_1] : memref<1x8x128xbf16, #tpu.memory_space<vmem>>, vector<1x8x128xbf16>
    %1 = vector.shape_cast %0 : vector<1x8x128xbf16> to vector<8x128xbf16>
    %2 = arith.extf %1 : vector<8x128xbf16> to vector<8x128xf32>
    %c0_2 = arith.constant 0 : index
    %c0_3 = arith.constant 0 : index
    %3 = vector.load %arg3[%c0_2, %c0_3] : memref<8x128xbf16, #tpu.memory_space<vmem>>, vector<8x128xbf16>
    %4 = arith.extf %3 : vector<8x128xbf16> to vector<8x128xf32>
    %5 = arith.addf %2, %4 : vector<8x128xf32>
    %cst = arith.constant dense<0.000000e+00> : vector<8xf32>
    %6 = vector.multi_reduction <add>, %5, %cst [1] : vector<8x128xf32> to vector<8xf32>
    %7 = vector.shape_cast %6 : vector<8xf32> to vector<8x1xf32>
    %cst_4 = arith.constant 1.280000e+02 : f32
    %8 = vector.broadcast %cst_4 : f32 to vector<8x1xf32>
    %9 = arith.divf %7, %8 : vector<8x1xf32>
    %10 = vector.broadcast %9 : vector<8x1xf32> to vector<8x128xf32>
    %11 = arith.subf %5, %10 : vector<8x128xf32>
    %12 = arith.mulf %11, %11 : vector<8x128xf32>
    %cst_5 = arith.constant dense<0.000000e+00> : vector<8xf32>
    %13 = vector.multi_reduction <add>, %12, %cst_5 [1] : vector<8x128xf32> to vector<8xf32>
    %14 = vector.shape_cast %13 : vector<8xf32> to vector<8x1xf32>
    %cst_6 = arith.constant 1.280000e+02 : f32
    %15 = vector.broadcast %cst_6 : f32 to vector<8x1xf32>
    %16 = arith.divf %14, %15 : vector<8x1xf32>
    %17 = vector.broadcast %9 : vector<8x1xf32> to vector<8x128xf32>
    %18 = arith.subf %5, %17 : vector<8x128xf32>
    %cst_7 = arith.constant 9.99999996E-13 : f32
    %19 = vector.broadcast %cst_7 : f32 to vector<8x1xf32>
    %20 = arith.addf %16, %19 : vector<8x1xf32>
    %21 = math.rsqrt %20 : vector<8x1xf32>
    %22 = vector.broadcast %21 : vector<8x1xf32> to vector<8x128xf32>
    %23 = arith.mulf %18, %22 : vector<8x128xf32>
    %c0_8 = arith.constant 0 : index
    %c0_9 = arith.constant 0 : index
    %24 = vector.load %arg4[%c0_8, %c0_9] : memref<1x128xf32, #tpu.memory_space<vmem>>, vector<1x128xf32>
    %25 = vector.broadcast %24 : vector<1x128xf32> to vector<8x128xf32>
    %26 = arith.mulf %23, %25 : vector<8x128xf32>
    %c0_10 = arith.constant 0 : index
    %c0_11 = arith.constant 0 : index
    %27 = vector.load %arg5[%c0_10, %c0_11] : memref<1x128xf32, #tpu.memory_space<vmem>>, vector<1x128xf32>
    %28 = vector.broadcast %27 : vector<1x128xf32> to vector<8x128xf32>
    %29 = arith.addf %26, %28 : vector<8x128xf32>
    %30 = arith.truncf %29 : vector<8x128xf32> to vector<8x128xbf16>
    %c0_12 = arith.constant 0 : index
    %c0_13 = arith.constant 0 : index
    %c0_14 = arith.constant 0 : index
    %31 = vector.load %arg6[%c0_12, %c0_13, %c0_14] : memref<1x8x128xbf16, #tpu.memory_space<vmem>>, vector<1x8x128xbf16>
    %32 = vector.shape_cast %31 : vector<1x8x128xbf16> to vector<8x128xbf16>
    %33 = vector.shape_cast %30 : vector<8x128xbf16> to vector<1x8x128xbf16>
    tpu.vector_store %arg6[%c0_12, %c0_13, %c0_14], %33 {strides = array<i32>} : memref<1x8x128xbf16, #tpu.memory_space<vmem>>, vector<1x8x128xbf16>,
    return
  }
  func.func @transform_0(%arg0: i32, %arg1: i32) -> (i32, i32, i32) {
    %c0_i32 = arith.constant 0 : i32
    %c0_i32_0 = arith.constant 0 : i32
    return %arg0, %arg1, %c0_i32 : i32, i32, i32
  }
  func.func @transform_1(%arg0: i32, %arg1: i32) -> (i32, i32) {
    %c0_i32 = arith.constant 0 : i32
    %c0_i32_0 = arith.constant 0 : i32
    return %arg1, %c0_i32 : i32, i32
  }
  func.func @transform_2(%arg0: i32, %arg1: i32) -> (i32, i32) {
    %c0_i32 = arith.constant 0 : i32
    %c0_i32_0 = arith.constant 0 : i32
    %c0_i32_1 = arith.constant 0 : i32
    return %c0_i32, %c0_i32_0 : i32, i32
  }
  func.func @transform_3(%arg0: i32, %arg1: i32) -> (i32, i32) {
    %c0_i32 = arith.constant 0 : i32
    %c0_i32_0 = arith.constant 0 : i32
    %c0_i32_1 = arith.constant 0 : i32
    return %c0_i32, %c0_i32_0 : i32, i32
  }
  func.func @transform_4(%arg0: i32, %arg1: i32) -> (i32, i32, i32) {
    %c0_i32 = arith.constant 0 : i32
    %c0_i32_0 = arith.constant 0 : i32
    return %arg0, %arg1, %c0_i32 : i32, i32, i32
  }
}

module attributes {stable_mosaic.version = 11 : i64} {
  func.func @_dense_add_ln_kernel(%arg0: i32, %arg1: i32, %arg2: memref<16x128xbf16, #tpu.memory_space<vmem>>, %arg3: memref<128x128xbf16, #tpu.memory_space<vmem>>, %arg4: memref<1x128xf32, #tpu.memory_space<vmem>>, %arg5: memref<16x128xbf16, #tpu.memory_space<vmem>>, %arg6: memref<1x128xf32, #tpu.memory_space<vmem>>, %arg7: memref<1x128xf32, #tpu.memory_space<vmem>>, %arg8: memref<16x128xbf16, #tpu.memory_space<vmem>>, %arg9: memref<16x128xf32, #tpu.memory_space<vmem>>) attributes {dimension_semantics = [#tpu.dimension_semantics<parallel>, #tpu.dimension_semantics<arbitrary>], iteration_bounds = array<i64: 1, 1>, scalar_prefetch = 0 : i64, scratch_operands = 1 : i64, tpu.core_type = #tpu.core_type<tc>, window_params = [{transform_indices = @transform_0, window_bounds = array<i64: 16, 128>}, {transform_indices = @transform_1, window_bounds = array<i64: 128, 128>}, {pipeline_mode = #tpu.pipeline_mode<synchronous>, transform_indices = @transform_2, window_bounds = array<i64: 1, 128>}, {transform_indices = @transform_3, window_bounds = array<i64: 16, 128>}, {pipeline_mode = #tpu.pipeline_mode<synchronous>, transform_indices = @transform_4, window_bounds = array<i64: 1, 128>}, {pipeline_mode = #tpu.pipeline_mode<synchronous>, transform_indices = @transform_5, window_bounds = array<i64: 1, 128>}, {transform_indices = @transform_6, window_bounds = array<i64: 16, 128>}]} {
    %c0_i32 = arith.constant 0 : i32
    %0 = arith.cmpi eq, %arg1, %c0_i32 : i32
    %1 = arith.extui %0 : i1 to i32
    %c0_i32_0 = arith.constant 0 : i32
    %2 = arith.cmpi ne, %1, %c0_i32_0 : i32
    scf.if %2 {
      %cst_10 = arith.constant 0.000000e+00 : f32
      %12 = vector.broadcast %cst_10 : f32 to vector<16x128xf32>
      %c0_11 = arith.constant 0 : index
      %c0_12 = arith.constant 0 : index
      %13 = vector.load %arg9[%c0_11, %c0_12] : memref<16x128xf32, #tpu.memory_space<vmem>>, vector<16x128xf32>
      tpu.vector_store %arg9[%c0_11, %c0_12], %12 {strides = array<i32>} : memref<16x128xf32, #tpu.memory_space<vmem>>, vector<16x128xf32>,
    } else {
    }
    %c0 = arith.constant 0 : index
    %c0_1 = arith.constant 0 : index
    %3 = vector.load %arg9[%c0, %c0_1] : memref<16x128xf32, #tpu.memory_space<vmem>>, vector<16x128xf32>
    %c0_2 = arith.constant 0 : index
    %c0_3 = arith.constant 0 : index
    %4 = vector.load %arg2[%c0_2, %c0_3] : memref<16x128xbf16, #tpu.memory_space<vmem>>, vector<16x128xbf16>
    %c0_4 = arith.constant 0 : index
    %c0_5 = arith.constant 0 : index
    %5 = vector.load %arg3[%c0_4, %c0_5] : memref<128x128xbf16, #tpu.memory_space<vmem>>, vector<128x128xbf16>
    %cst = arith.constant dense<0.000000e+00> : vector<16x128xf32>
    %6 = tpu.matmul %4, %5, %cst {dimension_numbers = #tpu.dot_dimension_numbers<[1], [0], [0], [1], [0, 0, 1, 1], [], []>} : vector<16x128xbf16>, vector<128x128xbf16>, vector<16x128xf32> -> vector<16x128xf32>
    %7 = arith.addf %3, %6 : vector<16x128xf32>
    %c0_6 = arith.constant 0 : index
    %c0_7 = arith.constant 0 : index
    %8 = vector.load %arg9[%c0_6, %c0_7] : memref<16x128xf32, #tpu.memory_space<vmem>>, vector<16x128xf32>
    tpu.vector_store %arg9[%c0_6, %c0_7], %7 {strides = array<i32>} : memref<16x128xf32, #tpu.memory_space<vmem>>, vector<16x128xf32>,
    %c0_i32_8 = arith.constant 0 : i32
    %9 = arith.cmpi eq, %arg1, %c0_i32_8 : i32
    %10 = arith.extui %9 : i1 to i32
    %c0_i32_9 = arith.constant 0 : i32
    %11 = arith.cmpi ne, %10, %c0_i32_9 : i32
    scf.if %11 {
      %c0_10 = arith.constant 0 : index
      %c0_11 = arith.constant 0 : index
      %12 = vector.load %arg9[%c0_10, %c0_11] : memref<16x128xf32, #tpu.memory_space<vmem>>, vector<16x128xf32>
      %c0_12 = arith.constant 0 : index
      %c0_13 = arith.constant 0 : index
      %13 = vector.load %arg4[%c0_12, %c0_13] : memref<1x128xf32, #tpu.memory_space<vmem>>, vector<1x128xf32>
      %14 = vector.broadcast %13 : vector<1x128xf32> to vector<16x128xf32>
      %15 = arith.addf %12, %14 : vector<16x128xf32>
      %c0_14 = arith.constant 0 : index
      %c0_15 = arith.constant 0 : index
      %16 = vector.load %arg5[%c0_14, %c0_15] : memref<16x128xbf16, #tpu.memory_space<vmem>>, vector<16x128xbf16>
      %17 = arith.extf %16 : vector<16x128xbf16> to vector<16x128xf32>
      %18 = arith.addf %15, %17 : vector<16x128xf32>
      %cst_16 = arith.constant dense<0.000000e+00> : vector<16xf32>
      %19 = vector.multi_reduction <add>, %18, %cst_16 [1] : vector<16x128xf32> to vector<16xf32>
      %20 = vector.shape_cast %19 : vector<16xf32> to vector<16x1xf32>
      %cst_17 = arith.constant 1.280000e+02 : f32
      %21 = vector.broadcast %cst_17 : f32 to vector<16x1xf32>
      %22 = arith.divf %20, %21 : vector<16x1xf32>
      %23 = vector.broadcast %22 : vector<16x1xf32> to vector<16x128xf32>
      %24 = arith.subf %18, %23 : vector<16x128xf32>
      %25 = arith.mulf %24, %24 : vector<16x128xf32>
      %cst_18 = arith.constant dense<0.000000e+00> : vector<16xf32>
      %26 = vector.multi_reduction <add>, %25, %cst_18 [1] : vector<16x128xf32> to vector<16xf32>
      %27 = vector.shape_cast %26 : vector<16xf32> to vector<16x1xf32>
      %cst_19 = arith.constant 1.280000e+02 : f32
      %28 = vector.broadcast %cst_19 : f32 to vector<16x1xf32>
      %29 = arith.divf %27, %28 : vector<16x1xf32>
      %30 = vector.broadcast %22 : vector<16x1xf32> to vector<16x128xf32>
      %31 = arith.subf %18, %30 : vector<16x128xf32>
      %cst_20 = arith.constant 9.99999996E-13 : f32
      %32 = vector.broadcast %cst_20 : f32 to vector<16x1xf32>
      %33 = arith.addf %29, %32 : vector<16x1xf32>
      %34 = math.rsqrt %33 : vector<16x1xf32>
      %35 = vector.broadcast %34 : vector<16x1xf32> to vector<16x128xf32>
      %36 = arith.mulf %31, %35 : vector<16x128xf32>
      %c0_21 = arith.constant 0 : index
      %c0_22 = arith.constant 0 : index
      %37 = vector.load %arg6[%c0_21, %c0_22] : memref<1x128xf32, #tpu.memory_space<vmem>>, vector<1x128xf32>
      %38 = vector.broadcast %37 : vector<1x128xf32> to vector<16x128xf32>
      %39 = arith.mulf %36, %38 : vector<16x128xf32>
      %c0_23 = arith.constant 0 : index
      %c0_24 = arith.constant 0 : index
      %40 = vector.load %arg7[%c0_23, %c0_24] : memref<1x128xf32, #tpu.memory_space<vmem>>, vector<1x128xf32>
      %41 = vector.broadcast %40 : vector<1x128xf32> to vector<16x128xf32>
      %42 = arith.addf %39, %41 : vector<16x128xf32>
      %43 = arith.truncf %42 : vector<16x128xf32> to vector<16x128xbf16>
      %c0_25 = arith.constant 0 : index
      %c0_26 = arith.constant 0 : index
      %44 = vector.load %arg8[%c0_25, %c0_26] : memref<16x128xbf16, #tpu.memory_space<vmem>>, vector<16x128xbf16>
      tpu.vector_store %arg8[%c0_25, %c0_26], %43 {strides = array<i32>} : memref<16x128xbf16, #tpu.memory_space<vmem>>, vector<16x128xbf16>,
    } else {
    }
    return
  }
  func.func @transform_0(%arg0: i32, %arg1: i32) -> (i32, i32) {
    %c0_i32 = arith.constant 0 : i32
    return %arg0, %arg1 : i32, i32
  }
  func.func @transform_1(%arg0: i32, %arg1: i32) -> (i32, i32) {
    %c0_i32 = arith.constant 0 : i32
    %c0_i32_0 = arith.constant 0 : i32
    return %arg1, %c0_i32 : i32, i32
  }
  func.func @transform_2(%arg0: i32, %arg1: i32) -> (i32, i32) {
    %c0_i32 = arith.constant 0 : i32
    %c0_i32_0 = arith.constant 0 : i32
    %c0_i32_1 = arith.constant 0 : i32
    return %c0_i32, %c0_i32_0 : i32, i32
  }
  func.func @transform_3(%arg0: i32, %arg1: i32) -> (i32, i32) {
    %c0_i32 = arith.constant 0 : i32
    %c0_i32_0 = arith.constant 0 : i32
    return %arg0, %c0_i32 : i32, i32
  }
  func.func @transform_4(%arg0: i32, %arg1: i32) -> (i32, i32) {
    %c0_i32 = arith.constant 0 : i32
    %c0_i32_0 = arith.constant 0 : i32
    %c0_i32_1 = arith.constant 0 : i32
    return %c0_i32, %c0_i32_0 : i32, i32
  }
  func.func @transform_5(%arg0: i32, %arg1: i32) -> (i32, i32) {
    %c0_i32 = arith.constant 0 : i32
    %c0_i32_0 = arith.constant 0 : i32
    %c0_i32_1 = arith.constant 0 : i32
    return %c0_i32, %c0_i32_0 : i32, i32
  }
  func.func @transform_6(%arg0: i32, %arg1: i32) -> (i32, i32) {
    %c0_i32 = arith.constant 0 : i32
    %c0_i32_0 = arith.constant 0 : i32
    return %arg0, %c0_i32 : i32, i32
  }
}

module attributes {stable_mosaic.version = 11 : i64} {
  func.func @_flash_attn_kernel(%arg0: i32, %arg1: i32, %arg2: i32, %arg3: memref<2x1xi32, #tpu.memory_space<smem>>, %arg4: memref<1x8x128xbf16, #tpu.memory_space<vmem>>, %arg5: memref<1x8x128xbf16, #tpu.memory_space<vmem>>, %arg6: memref<1x8x128xbf16, #tpu.memory_space<vmem>>, %arg7: memref<1x1x8xf32, #tpu.memory_space<vmem>>, %arg8: memref<1x8x128xbf16, #tpu.memory_space<vmem>>, %arg9: memref<4x8x1xf32, #tpu.memory_space<vmem>>, %arg10: memref<4x8x1xf32, #tpu.memory_space<vmem>>, %arg11: memref<4x8x32xf32, #tpu.memory_space<vmem>>) attributes {dimension_semantics = [#tpu.dimension_semantics<parallel>, #tpu.dimension_semantics<parallel>, #tpu.dimension_semantics<arbitrary>], iteration_bounds = array<i64: 2, 1, 1>, scalar_prefetch = 1 : i64, scratch_operands = 3 : i64, tpu.core_type = #tpu.core_type<tc>, window_params = [{transform_indices = @transform_0, window_bounds = array<i64: 1, 8, 128>}, {transform_indices = @transform_1, window_bounds = array<i64: 1, 8, 128>}, {transform_indices = @transform_2, window_bounds = array<i64: 1, 8, 128>}, {transform_indices = @transform_3, window_bounds = array<i64: 1, 1, 8>}, {transform_indices = @transform_4, window_bounds = array<i64: 1, 8, 128>}]} {
    %c0_i32 = arith.constant 0 : i32
    %0 = arith.cmpi eq, %arg2, %c0_i32 : i32
    %1 = arith.extui %0 : i1 to i32
    %c0_i32_0 = arith.constant 0 : i32
    %2 = arith.cmpi ne, %1, %c0_i32_0 : i32
    scf.if %2 {
      %cst = arith.constant 0xFF800000 : f32
      %12 = vector.broadcast %cst : f32 to vector<4x8x1xf32>
      %c0 = arith.constant 0 : index
      %c0_5 = arith.constant 0 : index
      %c0_6 = arith.constant 0 : index
      %13 = vector.load %arg9[%c0, %c0_5, %c0_6] : memref<4x8x1xf32, #tpu.memory_space<vmem>>, vector<4x8x1xf32>
      tpu.vector_store %arg9[%c0, %c0_5, %c0_6], %12 {strides = array<i32>} : memref<4x8x1xf32, #tpu.memory_space<vmem>>, vector<4x8x1xf32>,
      %cst_7 = arith.constant 0.000000e+00 : f32
      %14 = vector.broadcast %cst_7 : f32 to vector<4x8x1xf32>
      %c0_8 = arith.constant 0 : index
      %c0_9 = arith.constant 0 : index
      %c0_10 = arith.constant 0 : index
      %15 = vector.load %arg10[%c0_8, %c0_9, %c0_10] : memref<4x8x1xf32, #tpu.memory_space<vmem>>, vector<4x8x1xf32>
      tpu.vector_store %arg10[%c0_8, %c0_9, %c0_10], %14 {strides = array<i32>} : memref<4x8x1xf32, #tpu.memory_space<vmem>>, vector<4x8x1xf32>,
      %cst_11 = arith.constant 0.000000e+00 : f32
      %16 = vector.broadcast %cst_11 : f32 to vector<4x8x32xf32>
      %c0_12 = arith.constant 0 : index
      %c0_13 = arith.constant 0 : index
      %c0_14 = arith.constant 0 : index
      %17 = vector.load %arg11[%c0_12, %c0_13, %c0_14] : memref<4x8x32xf32, #tpu.memory_space<vmem>>, vector<4x8x32xf32>
      tpu.vector_store %arg11[%c0_12, %c0_13, %c0_14], %16 {strides = array<i32>} : memref<4x8x32xf32, #tpu.memory_space<vmem>>, vector<4x8x32xf32>,
    } else {
    }
    %3 = arith.index_cast %arg0 : i32 to index
    %4 = arith.index_cast %arg2 : i32 to index
    %5 = memref.load %arg3[%3, %4] : memref<2x1xi32, #tpu.memory_space<smem>>
    %c0_i32_1 = arith.constant 0 : i32
    %6 = arith.cmpi sgt, %5, %c0_i32_1 : i32
    %7 = arith.extui %6 : i1 to i32
    %c0_i32_2 = arith.constant 0 : i32
    %8 = arith.cmpi ne, %7, %c0_i32_2 : i32
    scf.if %8 {
      %c0 = arith.constant 0 : index
      %c0_5 = arith.constant 0 : index
      %c0_6 = arith.constant 0 : index
      %12 = vector.load %arg4[%c0, %c0_5, %c0_6] : memref<1x8x128xbf16, #tpu.memory_space<vmem>>, vector<1x8x128xbf16>
      %13 = vector.shape_cast %12 : vector<1x8x128xbf16> to vector<8x128xbf16>
      %c0_7 = arith.constant 0 : index
      %c0_8 = arith.constant 0 : index
      %c0_9 = arith.constant 0 : index
      %14 = vector.load %arg5[%c0_7, %c0_8, %c0_9] : memref<1x8x128xbf16, #tpu.memory_space<vmem>>, vector<1x8x128xbf16>
      %15 = vector.shape_cast %14 : vector<1x8x128xbf16> to vector<8x128xbf16>
      %c0_10 = arith.constant 0 : index
      %c0_11 = arith.constant 0 : index
      %c0_12 = arith.constant 0 : index
      %16 = vector.load %arg6[%c0_10, %c0_11, %c0_12] : memref<1x8x128xbf16, #tpu.memory_space<vmem>>, vector<1x8x128xbf16>
      %17 = vector.shape_cast %16 : vector<1x8x128xbf16> to vector<8x128xbf16>
      %c0_13 = arith.constant 0 : index
      %c0_14 = arith.constant 0 : index
      %c0_15 = arith.constant 0 : index
      %18 = vector.load %arg7[%c0_13, %c0_14, %c0_15] : memref<1x1x8xf32, #tpu.memory_space<vmem>>, vector<1x1x8xf32>
      %19 = vector.shape_cast %18 : vector<1x1x8xf32> to vector<1x8xf32>
      %20 = vector.extract_strided_slice %13 {offsets = [0, 0], sizes = [8, 32], strides = [1, 1]} : vector<8x128xbf16> to vector<8x32xbf16>
      %cst = arith.constant 1.767580e-01 : bf16
      %21 = vector.broadcast %cst : bf16 to vector<8x32xbf16>
      %22 = arith.mulf %20, %21 : vector<8x32xbf16>
      %23 = vector.extract_strided_slice %15 {offsets = [0, 0], sizes = [8, 32], strides = [1, 1]} : vector<8x128xbf16> to vector<8x32xbf16>
      %24 = vector.extract_strided_slice %17 {offsets = [0, 0], sizes = [8, 32], strides = [1, 1]} : vector<8x128xbf16> to vector<8x32xbf16>
      %cst_16 = arith.constant dense<0.000000e+00> : vector<8x8xf32>
      %25 = tpu.matmul %22, %23, %cst_16 {dimension_numbers = #tpu.dot_dimension_numbers<[1], [1], [0], [0], [0, 0, 1, 0], [], []>} : vector<8x32xbf16>, vector<8x32xbf16>, vector<8x8xf32> -> vector<8x8xf32>
      %26 = vector.broadcast %19 : vector<1x8xf32> to vector<8x8xf32>
      %27 = arith.addf %25, %26 : vector<8x8xf32>
      %c0_17 = arith.constant 0 : index
      %c0_18 = arith.constant 0 : index
      %c0_19 = arith.constant 0 : index
      %28 = vector.load %arg9[%c0_17, %c0_18, %c0_19] : memref<4x8x1xf32, #tpu.memory_space<vmem>>, vector<1x8x1xf32>
      %29 = vector.shape_cast %28 : vector<1x8x1xf32> to vector<8x1xf32>
      %c0_20 = arith.constant 0 : index
      %c0_21 = arith.constant 0 : index
      %c0_22 = arith.constant 0 : index
      %30 = vector.load %arg10[%c0_20, %c0_21, %c0_22] : memref<4x8x1xf32, #tpu.memory_space<vmem>>, vector<1x8x1xf32>
      %31 = vector.shape_cast %30 : vector<1x8x1xf32> to vector<8x1xf32>
      %cst_23 = arith.constant dense<0xFF800000> : vector<8xf32>
      %32 = vector.multi_reduction <maximumf>, %27, %cst_23 [1] : vector<8x8xf32> to vector<8xf32>
      %33 = vector.shape_cast %32 : vector<8xf32> to vector<8x1xf32>
      %34 = arith.maximumf %29, %33 : vector<8x1xf32>
      %35 = arith.subf %29, %34 : vector<8x1xf32>
      %36 = math.exp %35 : vector<8x1xf32>
      %37 = vector.broadcast %34 : vector<8x1xf32> to vector<8x8xf32>
      %38 = arith.subf %27, %37 : vector<8x8xf32>
      %39 = arith.truncf %38 : vector<8x8xf32> to vector<8x8xbf16>
      %40 = math.exp %39 : vector<8x8xbf16>
      %41 = arith.mulf %36, %31 : vector<8x1xf32>
      %42 = arith.extf %40 : vector<8x8xbf16> to vector<8x8xf32>
      %cst_24 = arith.constant dense<0.000000e+00> : vector<8xf32>
      %43 = vector.multi_reduction <add>, %42, %cst_24 [1] : vector<8x8xf32> to vector<8xf32>
      %44 = vector.shape_cast %43 : vector<8xf32> to vector<8x1xf32>
      %45 = arith.addf %41, %44 : vector<8x1xf32>
      %c0_25 = arith.constant 0 : index
      %c0_26 = arith.constant 0 : index
      %c0_27 = arith.constant 0 : index
      %46 = vector.load %arg10[%c0_25, %c0_26, %c0_27] : memref<4x8x1xf32, #tpu.memory_space<vmem>>, vector<1x8x1xf32>
      %47 = vector.shape_cast %46 : vector<1x8x1xf32> to vector<8x1xf32>
      %48 = vector.shape_cast %45 : vector<8x1xf32> to vector<1x8x1xf32>
      tpu.vector_store %arg10[%c0_25, %c0_26, %c0_27], %48 {strides = array<i32>} : memref<4x8x1xf32, #tpu.memory_space<vmem>>, vector<1x8x1xf32>,
      %c0_28 = arith.constant 0 : index
      %c0_29 = arith.constant 0 : index
      %c0_30 = arith.constant 0 : index
      %49 = vector.load %arg11[%c0_28, %c0_29, %c0_30] : memref<4x8x32xf32, #tpu.memory_space<vmem>>, vector<1x8x32xf32>
      %50 = vector.shape_cast %49 : vector<1x8x32xf32> to vector<8x32xf32>
      %51 = vector.broadcast %36 : vector<8x1xf32> to vector<8x32xf32>
      %52 = arith.mulf %51, %50 : vector<8x32xf32>
      %cst_31 = arith.constant dense<0.000000e+00> : vector<8x32xf32>
      %53 = tpu.matmul %40, %24, %cst_31 {dimension_numbers = #tpu.dot_dimension_numbers<[1], [0], [0], [1], [0, 0, 1, 1], [], []>} : vector<8x8xbf16>, vector<8x32xbf16>, vector<8x32xf32> -> vector<8x32xf32>
      %54 = arith.addf %52, %53 : vector<8x32xf32>
      %c0_32 = arith.constant 0 : index
      %c0_33 = arith.constant 0 : index
      %c0_34 = arith.constant 0 : index
      %55 = vector.load %arg11[%c0_32, %c0_33, %c0_34] : memref<4x8x32xf32, #tpu.memory_space<vmem>>, vector<1x8x32xf32>
      %56 = vector.shape_cast %55 : vector<1x8x32xf32> to vector<8x32xf32>
      %57 = vector.shape_cast %54 : vector<8x32xf32> to vector<1x8x32xf32>
      tpu.vector_store %arg11[%c0_32, %c0_33, %c0_34], %57 {strides = array<i32>} : memref<4x8x32xf32, #tpu.memory_space<vmem>>, vector<1x8x32xf32>,
      %c0_35 = arith.constant 0 : index
      %c0_36 = arith.constant 0 : index
      %c0_37 = arith.constant 0 : index
      %58 = vector.load %arg9[%c0_35, %c0_36, %c0_37] : memref<4x8x1xf32, #tpu.memory_space<vmem>>, vector<1x8x1xf32>
      %59 = vector.shape_cast %58 : vector<1x8x1xf32> to vector<8x1xf32>
      %60 = vector.shape_cast %34 : vector<8x1xf32> to vector<1x8x1xf32>
      tpu.vector_store %arg9[%c0_35, %c0_36, %c0_37], %60 {strides = array<i32>} : memref<4x8x1xf32, #tpu.memory_space<vmem>>, vector<1x8x1xf32>,
      %61 = vector.extract_strided_slice %13 {offsets = [0, 32], sizes = [8, 32], strides = [1, 1]} : vector<8x128xbf16> to vector<8x32xbf16>
      %cst_38 = arith.constant 1.767580e-01 : bf16
      %62 = vector.broadcast %cst_38 : bf16 to vector<8x32xbf16>
      %63 = arith.mulf %61, %62 : vector<8x32xbf16>
      %64 = vector.extract_strided_slice %15 {offsets = [0, 32], sizes = [8, 32], strides = [1, 1]} : vector<8x128xbf16> to vector<8x32xbf16>
      %65 = vector.extract_strided_slice %17 {offsets = [0, 32], sizes = [8, 32], strides = [1, 1]} : vector<8x128xbf16> to vector<8x32xbf16>
      %cst_39 = arith.constant dense<0.000000e+00> : vector<8x8xf32>
      %66 = tpu.matmul %63, %64, %cst_39 {dimension_numbers = #tpu.dot_dimension_numbers<[1], [1], [0], [0], [0, 0, 1, 0], [], []>} : vector<8x32xbf16>, vector<8x32xbf16>, vector<8x8xf32> -> vector<8x8xf32>
      %67 = vector.broadcast %19 : vector<1x8xf32> to vector<8x8xf32>
      %68 = arith.addf %66, %67 : vector<8x8xf32>
      %c1 = arith.constant 1 : index
      %c0_40 = arith.constant 0 : index
      %c0_41 = arith.constant 0 : index
      %69 = vector.load %arg9[%c1, %c0_40, %c0_41] : memref<4x8x1xf32, #tpu.memory_space<vmem>>, vector<1x8x1xf32>
      %70 = vector.shape_cast %69 : vector<1x8x1xf32> to vector<8x1xf32>
      %c1_42 = arith.constant 1 : index
      %c0_43 = arith.constant 0 : index
      %c0_44 = arith.constant 0 : index
      %71 = vector.load %arg10[%c1_42, %c0_43, %c0_44] : memref<4x8x1xf32, #tpu.memory_space<vmem>>, vector<1x8x1xf32>
      %72 = vector.shape_cast %71 : vector<1x8x1xf32> to vector<8x1xf32>
      %cst_45 = arith.constant dense<0xFF800000> : vector<8xf32>
      %73 = vector.multi_reduction <maximumf>, %68, %cst_45 [1] : vector<8x8xf32> to vector<8xf32>
      %74 = vector.shape_cast %73 : vector<8xf32> to vector<8x1xf32>
      %75 = arith.maximumf %70, %74 : vector<8x1xf32>
      %76 = arith.subf %70, %75 : vector<8x1xf32>
      %77 = math.exp %76 : vector<8x1xf32>
      %78 = vector.broadcast %75 : vector<8x1xf32> to vector<8x8xf32>
      %79 = arith.subf %68, %78 : vector<8x8xf32>
      %80 = arith.truncf %79 : vector<8x8xf32> to vector<8x8xbf16>
      %81 = math.exp %80 : vector<8x8xbf16>
      %82 = arith.mulf %77, %72 : vector<8x1xf32>
      %83 = arith.extf %81 : vector<8x8xbf16> to vector<8x8xf32>
      %cst_46 = arith.constant dense<0.000000e+00> : vector<8xf32>
      %84 = vector.multi_reduction <add>, %83, %cst_46 [1] : vector<8x8xf32> to vector<8xf32>
      %85 = vector.shape_cast %84 : vector<8xf32> to vector<8x1xf32>
      %86 = arith.addf %82, %85 : vector<8x1xf32>
      %c1_47 = arith.constant 1 : index
      %c0_48 = arith.constant 0 : index
      %c0_49 = arith.constant 0 : index
      %87 = vector.load %arg10[%c1_47, %c0_48, %c0_49] : memref<4x8x1xf32, #tpu.memory_space<vmem>>, vector<1x8x1xf32>
      %88 = vector.shape_cast %87 : vector<1x8x1xf32> to vector<8x1xf32>
      %89 = vector.shape_cast %86 : vector<8x1xf32> to vector<1x8x1xf32>
      tpu.vector_store %arg10[%c1_47, %c0_48, %c0_49], %89 {strides = array<i32>} : memref<4x8x1xf32, #tpu.memory_space<vmem>>, vector<1x8x1xf32>,
      %c1_50 = arith.constant 1 : index
      %c0_51 = arith.constant 0 : index
      %c0_52 = arith.constant 0 : index
      %90 = vector.load %arg11[%c1_50, %c0_51, %c0_52] : memref<4x8x32xf32, #tpu.memory_space<vmem>>, vector<1x8x32xf32>
      %91 = vector.shape_cast %90 : vector<1x8x32xf32> to vector<8x32xf32>
      %92 = vector.broadcast %77 : vector<8x1xf32> to vector<8x32xf32>
      %93 = arith.mulf %92, %91 : vector<8x32xf32>
      %cst_53 = arith.constant dense<0.000000e+00> : vector<8x32xf32>
      %94 = tpu.matmul %81, %65, %cst_53 {dimension_numbers = #tpu.dot_dimension_numbers<[1], [0], [0], [1], [0, 0, 1, 1], [], []>} : vector<8x8xbf16>, vector<8x32xbf16>, vector<8x32xf32> -> vector<8x32xf32>
      %95 = arith.addf %93, %94 : vector<8x32xf32>
      %c1_54 = arith.constant 1 : index
      %c0_55 = arith.constant 0 : index
      %c0_56 = arith.constant 0 : index
      %96 = vector.load %arg11[%c1_54, %c0_55, %c0_56] : memref<4x8x32xf32, #tpu.memory_space<vmem>>, vector<1x8x32xf32>
      %97 = vector.shape_cast %96 : vector<1x8x32xf32> to vector<8x32xf32>
      %98 = vector.shape_cast %95 : vector<8x32xf32> to vector<1x8x32xf32>
      tpu.vector_store %arg11[%c1_54, %c0_55, %c0_56], %98 {strides = array<i32>} : memref<4x8x32xf32, #tpu.memory_space<vmem>>, vector<1x8x32xf32>,
      %c1_57 = arith.constant 1 : index
      %c0_58 = arith.constant 0 : index
      %c0_59 = arith.constant 0 : index
      %99 = vector.load %arg9[%c1_57, %c0_58, %c0_59] : memref<4x8x1xf32, #tpu.memory_space<vmem>>, vector<1x8x1xf32>
      %100 = vector.shape_cast %99 : vector<1x8x1xf32> to vector<8x1xf32>
      %101 = vector.shape_cast %75 : vector<8x1xf32> to vector<1x8x1xf32>
      tpu.vector_store %arg9[%c1_57, %c0_58, %c0_59], %101 {strides = array<i32>} : memref<4x8x1xf32, #tpu.memory_space<vmem>>, vector<1x8x1xf32>,
      %102 = vector.extract_strided_slice %13 {offsets = [0, 64], sizes = [8, 32], strides = [1, 1]} : vector<8x128xbf16> to vector<8x32xbf16>
      %cst_60 = arith.constant 1.767580e-01 : bf16
      %103 = vector.broadcast %cst_60 : bf16 to vector<8x32xbf16>
      %104 = arith.mulf %102, %103 : vector<8x32xbf16>
      %105 = vector.extract_strided_slice %15 {offsets = [0, 64], sizes = [8, 32], strides = [1, 1]} : vector<8x128xbf16> to vector<8x32xbf16>
      %106 = vector.extract_strided_slice %17 {offsets = [0, 64], sizes = [8, 32], strides = [1, 1]} : vector<8x128xbf16> to vector<8x32xbf16>
      %cst_61 = arith.constant dense<0.000000e+00> : vector<8x8xf32>
      %107 = tpu.matmul %104, %105, %cst_61 {dimension_numbers = #tpu.dot_dimension_numbers<[1], [1], [0], [0], [0, 0, 1, 0], [], []>} : vector<8x32xbf16>, vector<8x32xbf16>, vector<8x8xf32> -> vector<8x8xf32>
      %108 = vector.broadcast %19 : vector<1x8xf32> to vector<8x8xf32>
      %109 = arith.addf %107, %108 : vector<8x8xf32>
      %c2 = arith.constant 2 : index
      %c0_62 = arith.constant 0 : index
      %c0_63 = arith.constant 0 : index
      %110 = vector.load %arg9[%c2, %c0_62, %c0_63] : memref<4x8x1xf32, #tpu.memory_space<vmem>>, vector<1x8x1xf32>
      %111 = vector.shape_cast %110 : vector<1x8x1xf32> to vector<8x1xf32>
      %c2_64 = arith.constant 2 : index
      %c0_65 = arith.constant 0 : index
      %c0_66 = arith.constant 0 : index
      %112 = vector.load %arg10[%c2_64, %c0_65, %c0_66] : memref<4x8x1xf32, #tpu.memory_space<vmem>>, vector<1x8x1xf32>
      %113 = vector.shape_cast %112 : vector<1x8x1xf32> to vector<8x1xf32>
      %cst_67 = arith.constant dense<0xFF800000> : vector<8xf32>
      %114 = vector.multi_reduction <maximumf>, %109, %cst_67 [1] : vector<8x8xf32> to vector<8xf32>
      %115 = vector.shape_cast %114 : vector<8xf32> to vector<8x1xf32>
      %116 = arith.maximumf %111, %115 : vector<8x1xf32>
      %117 = arith.subf %111, %116 : vector<8x1xf32>
      %118 = math.exp %117 : vector<8x1xf32>
      %119 = vector.broadcast %116 : vector<8x1xf32> to vector<8x8xf32>
      %120 = arith.subf %109, %119 : vector<8x8xf32>
      %121 = arith.truncf %120 : vector<8x8xf32> to vector<8x8xbf16>
      %122 = math.exp %121 : vector<8x8xbf16>
      %123 = arith.mulf %118, %113 : vector<8x1xf32>
      %124 = arith.extf %122 : vector<8x8xbf16> to vector<8x8xf32>
      %cst_68 = arith.constant dense<0.000000e+00> : vector<8xf32>
      %125 = vector.multi_reduction <add>, %124, %cst_68 [1] : vector<8x8xf32> to vector<8xf32>
      %126 = vector.shape_cast %125 : vector<8xf32> to vector<8x1xf32>
      %127 = arith.addf %123, %126 : vector<8x1xf32>
      %c2_69 = arith.constant 2 : index
      %c0_70 = arith.constant 0 : index
      %c0_71 = arith.constant 0 : index
      %128 = vector.load %arg10[%c2_69, %c0_70, %c0_71] : memref<4x8x1xf32, #tpu.memory_space<vmem>>, vector<1x8x1xf32>
      %129 = vector.shape_cast %128 : vector<1x8x1xf32> to vector<8x1xf32>
      %130 = vector.shape_cast %127 : vector<8x1xf32> to vector<1x8x1xf32>
      tpu.vector_store %arg10[%c2_69, %c0_70, %c0_71], %130 {strides = array<i32>} : memref<4x8x1xf32, #tpu.memory_space<vmem>>, vector<1x8x1xf32>,
      %c2_72 = arith.constant 2 : index
      %c0_73 = arith.constant 0 : index
      %c0_74 = arith.constant 0 : index
      %131 = vector.load %arg11[%c2_72, %c0_73, %c0_74] : memref<4x8x32xf32, #tpu.memory_space<vmem>>, vector<1x8x32xf32>
      %132 = vector.shape_cast %131 : vector<1x8x32xf32> to vector<8x32xf32>
      %133 = vector.broadcast %118 : vector<8x1xf32> to vector<8x32xf32>
      %134 = arith.mulf %133, %132 : vector<8x32xf32>
      %cst_75 = arith.constant dense<0.000000e+00> : vector<8x32xf32>
      %135 = tpu.matmul %122, %106, %cst_75 {dimension_numbers = #tpu.dot_dimension_numbers<[1], [0], [0], [1], [0, 0, 1, 1], [], []>} : vector<8x8xbf16>, vector<8x32xbf16>, vector<8x32xf32> -> vector<8x32xf32>
      %136 = arith.addf %134, %135 : vector<8x32xf32>
      %c2_76 = arith.constant 2 : index
      %c0_77 = arith.constant 0 : index
      %c0_78 = arith.constant 0 : index
      %137 = vector.load %arg11[%c2_76, %c0_77, %c0_78] : memref<4x8x32xf32, #tpu.memory_space<vmem>>, vector<1x8x32xf32>
      %138 = vector.shape_cast %137 : vector<1x8x32xf32> to vector<8x32xf32>
      %139 = vector.shape_cast %136 : vector<8x32xf32> to vector<1x8x32xf32>
      tpu.vector_store %arg11[%c2_76, %c0_77, %c0_78], %139 {strides = array<i32>} : memref<4x8x32xf32, #tpu.memory_space<vmem>>, vector<1x8x32xf32>,
      %c2_79 = arith.constant 2 : index
      %c0_80 = arith.constant 0 : index
      %c0_81 = arith.constant 0 : index
      %140 = vector.load %arg9[%c2_79, %c0_80, %c0_81] : memref<4x8x1xf32, #tpu.memory_space<vmem>>, vector<1x8x1xf32>
      %141 = vector.shape_cast %140 : vector<1x8x1xf32> to vector<8x1xf32>
      %142 = vector.shape_cast %116 : vector<8x1xf32> to vector<1x8x1xf32>
      tpu.vector_store %arg9[%c2_79, %c0_80, %c0_81], %142 {strides = array<i32>} : memref<4x8x1xf32, #tpu.memory_space<vmem>>, vector<1x8x1xf32>,
      %143 = vector.extract_strided_slice %13 {offsets = [0, 96], sizes = [8, 32], strides = [1, 1]} : vector<8x128xbf16> to vector<8x32xbf16>
      %cst_82 = arith.constant 1.767580e-01 : bf16
      %144 = vector.broadcast %cst_82 : bf16 to vector<8x32xbf16>
      %145 = arith.mulf %143, %144 : vector<8x32xbf16>
      %146 = vector.extract_strided_slice %15 {offsets = [0, 96], sizes = [8, 32], strides = [1, 1]} : vector<8x128xbf16> to vector<8x32xbf16>
      %147 = vector.extract_strided_slice %17 {offsets = [0, 96], sizes = [8, 32], strides = [1, 1]} : vector<8x128xbf16> to vector<8x32xbf16>
      %cst_83 = arith.constant dense<0.000000e+00> : vector<8x8xf32>
      %148 = tpu.matmul %145, %146, %cst_83 {dimension_numbers = #tpu.dot_dimension_numbers<[1], [1], [0], [0], [0, 0, 1, 0], [], []>} : vector<8x32xbf16>, vector<8x32xbf16>, vector<8x8xf32> -> vector<8x8xf32>
      %149 = vector.broadcast %19 : vector<1x8xf32> to vector<8x8xf32>
      %150 = arith.addf %148, %149 : vector<8x8xf32>
      %c3 = arith.constant 3 : index
      %c0_84 = arith.constant 0 : index
      %c0_85 = arith.constant 0 : index
      %151 = vector.load %arg9[%c3, %c0_84, %c0_85] : memref<4x8x1xf32, #tpu.memory_space<vmem>>, vector<1x8x1xf32>
      %152 = vector.shape_cast %151 : vector<1x8x1xf32> to vector<8x1xf32>
      %c3_86 = arith.constant 3 : index
      %c0_87 = arith.constant 0 : index
      %c0_88 = arith.constant 0 : index
      %153 = vector.load %arg10[%c3_86, %c0_87, %c0_88] : memref<4x8x1xf32, #tpu.memory_space<vmem>>, vector<1x8x1xf32>
      %154 = vector.shape_cast %153 : vector<1x8x1xf32> to vector<8x1xf32>
      %cst_89 = arith.constant dense<0xFF800000> : vector<8xf32>
      %155 = vector.multi_reduction <maximumf>, %150, %cst_89 [1] : vector<8x8xf32> to vector<8xf32>
      %156 = vector.shape_cast %155 : vector<8xf32> to vector<8x1xf32>
      %157 = arith.maximumf %152, %156 : vector<8x1xf32>
      %158 = arith.subf %152, %157 : vector<8x1xf32>
      %159 = math.exp %158 : vector<8x1xf32>
      %160 = vector.broadcast %157 : vector<8x1xf32> to vector<8x8xf32>
      %161 = arith.subf %150, %160 : vector<8x8xf32>
      %162 = arith.truncf %161 : vector<8x8xf32> to vector<8x8xbf16>
      %163 = math.exp %162 : vector<8x8xbf16>
      %164 = arith.mulf %159, %154 : vector<8x1xf32>
      %165 = arith.extf %163 : vector<8x8xbf16> to vector<8x8xf32>
      %cst_90 = arith.constant dense<0.000000e+00> : vector<8xf32>
      %166 = vector.multi_reduction <add>, %165, %cst_90 [1] : vector<8x8xf32> to vector<8xf32>
      %167 = vector.shape_cast %166 : vector<8xf32> to vector<8x1xf32>
      %168 = arith.addf %164, %167 : vector<8x1xf32>
      %c3_91 = arith.constant 3 : index
      %c0_92 = arith.constant 0 : index
      %c0_93 = arith.constant 0 : index
      %169 = vector.load %arg10[%c3_91, %c0_92, %c0_93] : memref<4x8x1xf32, #tpu.memory_space<vmem>>, vector<1x8x1xf32>
      %170 = vector.shape_cast %169 : vector<1x8x1xf32> to vector<8x1xf32>
      %171 = vector.shape_cast %168 : vector<8x1xf32> to vector<1x8x1xf32>
      tpu.vector_store %arg10[%c3_91, %c0_92, %c0_93], %171 {strides = array<i32>} : memref<4x8x1xf32, #tpu.memory_space<vmem>>, vector<1x8x1xf32>,
      %c3_94 = arith.constant 3 : index
      %c0_95 = arith.constant 0 : index
      %c0_96 = arith.constant 0 : index
      %172 = vector.load %arg11[%c3_94, %c0_95, %c0_96] : memref<4x8x32xf32, #tpu.memory_space<vmem>>, vector<1x8x32xf32>
      %173 = vector.shape_cast %172 : vector<1x8x32xf32> to vector<8x32xf32>
      %174 = vector.broadcast %159 : vector<8x1xf32> to vector<8x32xf32>
      %175 = arith.mulf %174, %173 : vector<8x32xf32>
      %cst_97 = arith.constant dense<0.000000e+00> : vector<8x32xf32>
      %176 = tpu.matmul %163, %147, %cst_97 {dimension_numbers = #tpu.dot_dimension_numbers<[1], [0], [0], [1], [0, 0, 1, 1], [], []>} : vector<8x8xbf16>, vector<8x32xbf16>, vector<8x32xf32> -> vector<8x32xf32>
      %177 = arith.addf %175, %176 : vector<8x32xf32>
      %c3_98 = arith.constant 3 : index
      %c0_99 = arith.constant 0 : index
      %c0_100 = arith.constant 0 : index
      %178 = vector.load %arg11[%c3_98, %c0_99, %c0_100] : memref<4x8x32xf32, #tpu.memory_space<vmem>>, vector<1x8x32xf32>
      %179 = vector.shape_cast %178 : vector<1x8x32xf32> to vector<8x32xf32>
      %180 = vector.shape_cast %177 : vector<8x32xf32> to vector<1x8x32xf32>
      tpu.vector_store %arg11[%c3_98, %c0_99, %c0_100], %180 {strides = array<i32>} : memref<4x8x32xf32, #tpu.memory_space<vmem>>, vector<1x8x32xf32>,
      %c3_101 = arith.constant 3 : index
      %c0_102 = arith.constant 0 : index
      %c0_103 = arith.constant 0 : index
      %181 = vector.load %arg9[%c3_101, %c0_102, %c0_103] : memref<4x8x1xf32, #tpu.memory_space<vmem>>, vector<1x8x1xf32>
      %182 = vector.shape_cast %181 : vector<1x8x1xf32> to vector<8x1xf32>
      %183 = vector.shape_cast %157 : vector<8x1xf32> to vector<1x8x1xf32>
      tpu.vector_store %arg9[%c3_101, %c0_102, %c0_103], %183 {strides = array<i32>} : memref<4x8x1xf32, #tpu.memory_space<vmem>>, vector<1x8x1xf32>,
    } else {
    }
    %c0_i32_3 = arith.constant 0 : i32
    %9 = arith.cmpi eq, %arg2, %c0_i32_3 : i32
    %10 = arith.extui %9 : i1 to i32
    %c0_i32_4 = arith.constant 0 : i32
    %11 = arith.cmpi ne, %10, %c0_i32_4 : i32
    scf.if %11 {
      %c0 = arith.constant 0 : index
      %c0_5 = arith.constant 0 : index
      %c0_6 = arith.constant 0 : index
      %12 = vector.load %arg10[%c0, %c0_5, %c0_6] : memref<4x8x1xf32, #tpu.memory_space<vmem>>, vector<1x8x1xf32>
      %13 = vector.shape_cast %12 : vector<1x8x1xf32> to vector<8x1xf32>
      %cst = arith.constant 1.000000e-30 : f32
      %14 = vector.broadcast %cst : f32 to vector<8x1xf32>
      %15 = arith.maximumf %13, %14 : vector<8x1xf32>
      %16 = tpu.reciprocal %15 {approx = true} : vector<8x1xf32> -> vector<8x1xf32>
      %c0_7 = arith.constant 0 : index
      %c0_8 = arith.constant 0 : index
      %c0_9 = arith.constant 0 : index
      %17 = vector.load %arg11[%c0_7, %c0_8, %c0_9] : memref<4x8x32xf32, #tpu.memory_space<vmem>>, vector<1x8x32xf32>
      %18 = vector.shape_cast %17 : vector<1x8x32xf32> to vector<8x32xf32>
      %19 = vector.broadcast %16 : vector<8x1xf32> to vector<8x32xf32>
      %20 = arith.mulf %18, %19 : vector<8x32xf32>
      %c1 = arith.constant 1 : index
      %c0_10 = arith.constant 0 : index
      %c0_11 = arith.constant 0 : index
      %21 = vector.load %arg10[%c1, %c0_10, %c0_11] : memref<4x8x1xf32, #tpu.memory_space<vmem>>, vector<1x8x1xf32>
      %22 = vector.shape_cast %21 : vector<1x8x1xf32> to vector<8x1xf32>
      %cst_12 = arith.constant 1.000000e-30 : f32
      %23 = vector.broadcast %cst_12 : f32 to vector<8x1xf32>
      %24 = arith.maximumf %22, %23 : vector<8x1xf32>
      %25 = tpu.reciprocal %24 {approx = true} : vector<8x1xf32> -> vector<8x1xf32>
      %c1_13 = arith.constant 1 : index
      %c0_14 = arith.constant 0 : index
      %c0_15 = arith.constant 0 : index
      %26 = vector.load %arg11[%c1_13, %c0_14, %c0_15] : memref<4x8x32xf32, #tpu.memory_space<vmem>>, vector<1x8x32xf32>
      %27 = vector.shape_cast %26 : vector<1x8x32xf32> to vector<8x32xf32>
      %28 = vector.broadcast %25 : vector<8x1xf32> to vector<8x32xf32>
      %29 = arith.mulf %27, %28 : vector<8x32xf32>
      %c2 = arith.constant 2 : index
      %c0_16 = arith.constant 0 : index
      %c0_17 = arith.constant 0 : index
      %30 = vector.load %arg10[%c2, %c0_16, %c0_17] : memref<4x8x1xf32, #tpu.memory_space<vmem>>, vector<1x8x1xf32>
      %31 = vector.shape_cast %30 : vector<1x8x1xf32> to vector<8x1xf32>
      %cst_18 = arith.constant 1.000000e-30 : f32
      %32 = vector.broadcast %cst_18 : f32 to vector<8x1xf32>
      %33 = arith.maximumf %31, %32 : vector<8x1xf32>
      %34 = tpu.reciprocal %33 {approx = true} : vector<8x1xf32> -> vector<8x1xf32>
      %c2_19 = arith.constant 2 : index
      %c0_20 = arith.constant 0 : index
      %c0_21 = arith.constant 0 : index
      %35 = vector.load %arg11[%c2_19, %c0_20, %c0_21] : memref<4x8x32xf32, #tpu.memory_space<vmem>>, vector<1x8x32xf32>
      %36 = vector.shape_cast %35 : vector<1x8x32xf32> to vector<8x32xf32>
      %37 = vector.broadcast %34 : vector<8x1xf32> to vector<8x32xf32>
      %38 = arith.mulf %36, %37 : vector<8x32xf32>
      %c3 = arith.constant 3 : index
      %c0_22 = arith.constant 0 : index
      %c0_23 = arith.constant 0 : index
      %39 = vector.load %arg10[%c3, %c0_22, %c0_23] : memref<4x8x1xf32, #tpu.memory_space<vmem>>, vector<1x8x1xf32>
      %40 = vector.shape_cast %39 : vector<1x8x1xf32> to vector<8x1xf32>
      %cst_24 = arith.constant 1.000000e-30 : f32
      %41 = vector.broadcast %cst_24 : f32 to vector<8x1xf32>
      %42 = arith.maximumf %40, %41 : vector<8x1xf32>
      %43 = tpu.reciprocal %42 {approx = true} : vector<8x1xf32> -> vector<8x1xf32>
      %c3_25 = arith.constant 3 : index
      %c0_26 = arith.constant 0 : index
      %c0_27 = arith.constant 0 : index
      %44 = vector.load %arg11[%c3_25, %c0_26, %c0_27] : memref<4x8x32xf32, #tpu.memory_space<vmem>>, vector<1x8x32xf32>
      %45 = vector.shape_cast %44 : vector<1x8x32xf32> to vector<8x32xf32>
      %46 = vector.broadcast %43 : vector<8x1xf32> to vector<8x32xf32>
      %47 = arith.mulf %45, %46 : vector<8x32xf32>
      %48 = tpu.concatenate %20, %29, %38, %47 in 1 : vector<8x32xf32>, vector<8x32xf32>, vector<8x32xf32>, vector<8x32xf32> -> vector<8x128xf32>
      %49 = arith.truncf %48 : vector<8x128xf32> to vector<8x128xbf16>
      %c0_28 = arith.constant 0 : index
      %c0_29 = arith.constant 0 : index
      %c0_30 = arith.constant 0 : index
      %50 = vector.load %arg8[%c0_28, %c0_29, %c0_30] : memref<1x8x128xbf16, #tpu.memory_space<vmem>>, vector<1x8x128xbf16>
      %51 = vector.shape_cast %50 : vector<1x8x128xbf16> to vector<8x128xbf16>
      %52 = vector.shape_cast %49 : vector<8x128xbf16> to vector<1x8x128xbf16>
      tpu.vector_store %arg8[%c0_28, %c0_29, %c0_30], %52 {strides = array<i32>} : memref<1x8x128xbf16, #tpu.memory_space<vmem>>, vector<1x8x128xbf16>,
    } else {
    }
    return
  }
  func.func @transform_0(%arg0: i32, %arg1: i32, %arg2: i32, %arg3: memref<2x1xi32, #tpu.memory_space<smem>>) -> (i32, i32, i32) {
    %c0_i32 = arith.constant 0 : i32
    %c0_i32_0 = arith.constant 0 : i32
    return %arg0, %arg1, %c0_i32 : i32, i32, i32
  }
  func.func @transform_1(%arg0: i32, %arg1: i32, %arg2: i32, %arg3: memref<2x1xi32, #tpu.memory_space<smem>>) -> (i32, i32, i32) {
    %c1_i32 = arith.constant 1 : i32
    %c0_i32 = arith.constant 0 : i32
    return %arg0, %arg2, %c1_i32 : i32, i32, i32
  }
  func.func @transform_2(%arg0: i32, %arg1: i32, %arg2: i32, %arg3: memref<2x1xi32, #tpu.memory_space<smem>>) -> (i32, i32, i32) {
    %c2_i32 = arith.constant 2 : i32
    %c0_i32 = arith.constant 0 : i32
    return %arg0, %arg2, %c2_i32 : i32, i32, i32
  }
  func.func @transform_3(%arg0: i32, %arg1: i32, %arg2: i32, %arg3: memref<2x1xi32, #tpu.memory_space<smem>>) -> (i32, i32, i32) {
    %c0_i32 = arith.constant 0 : i32
    %c0_i32_0 = arith.constant 0 : i32
    return %arg0, %c0_i32, %arg2 : i32, i32, i32
  }
  func.func @transform_4(%arg0: i32, %arg1: i32, %arg2: i32, %arg3: memref<2x1xi32, #tpu.memory_space<smem>>) -> (i32, i32, i32) {
    %c0_i32 = arith.constant 0 : i32
    %c0_i32_0 = arith.constant 0 : i32
    return %arg0, %arg1, %c0_i32 : i32, i32, i32
  }
}

module attributes {stable_mosaic.version = 11 : i64} {
  func.func @_dense_kernel(%arg0: i32, %arg1: i32, %arg2: i32, %arg3: memref<16x128xbf16, #tpu.memory_space<vmem>>, %arg4: memref<128x256xbf16, #tpu.memory_space<vmem>>, %arg5: memref<1x256xf32, #tpu.memory_space<vmem>>, %arg6: memref<16x256xbf16, #tpu.memory_space<vmem>>, %arg7: memref<16x256xf32, #tpu.memory_space<vmem>>) attributes {dimension_semantics = [#tpu.dimension_semantics<parallel>, #tpu.dimension_semantics<parallel>, #tpu.dimension_semantics<arbitrary>], iteration_bounds = array<i64: 1, 1, 1>, scalar_prefetch = 0 : i64, scratch_operands = 1 : i64, tpu.core_type = #tpu.core_type<tc>, window_params = [{transform_indices = @transform_0, window_bounds = array<i64: 16, 128>}, {transform_indices = @transform_1, window_bounds = array<i64: 128, 256>}, {transform_indices = @transform_2, window_bounds = array<i64: 1, 256>}, {transform_indices = @transform_3, window_bounds = array<i64: 16, 256>}]} {
    %c0_i32 = arith.constant 0 : i32
    %0 = arith.cmpi eq, %arg2, %c0_i32 : i32
    %1 = arith.extui %0 : i1 to i32
    %c0_i32_0 = arith.constant 0 : i32
    %2 = arith.cmpi ne, %1, %c0_i32_0 : i32
    scf.if %2 {
      %cst_10 = arith.constant 0.000000e+00 : f32
      %12 = vector.broadcast %cst_10 : f32 to vector<16x256xf32>
      %c0_11 = arith.constant 0 : index
      %c0_12 = arith.constant 0 : index
      %13 = vector.load %arg7[%c0_11, %c0_12] : memref<16x256xf32, #tpu.memory_space<vmem>>, vector<16x256xf32>
      tpu.vector_store %arg7[%c0_11, %c0_12], %12 {strides = array<i32>} : memref<16x256xf32, #tpu.memory_space<vmem>>, vector<16x256xf32>,
    } else {
    }
    %c0 = arith.constant 0 : index
    %c0_1 = arith.constant 0 : index
    %3 = vector.load %arg7[%c0, %c0_1] : memref<16x256xf32, #tpu.memory_space<vmem>>, vector<16x256xf32>
    %c0_2 = arith.constant 0 : index
    %c0_3 = arith.constant 0 : index
    %4 = vector.load %arg3[%c0_2, %c0_3] : memref<16x128xbf16, #tpu.memory_space<vmem>>, vector<16x128xbf16>
    %c0_4 = arith.constant 0 : index
    %c0_5 = arith.constant 0 : index
    %5 = vector.load %arg4[%c0_4, %c0_5] : memref<128x256xbf16, #tpu.memory_space<vmem>>, vector<128x256xbf16>
    %cst = arith.constant dense<0.000000e+00> : vector<16x256xf32>
    %6 = tpu.matmul %4, %5, %cst {dimension_numbers = #tpu.dot_dimension_numbers<[1], [0], [0], [1], [0, 0, 1, 1], [], []>} : vector<16x128xbf16>, vector<128x256xbf16>, vector<16x256xf32> -> vector<16x256xf32>
    %7 = arith.addf %3, %6 : vector<16x256xf32>
    %c0_6 = arith.constant 0 : index
    %c0_7 = arith.constant 0 : index
    %8 = vector.load %arg7[%c0_6, %c0_7] : memref<16x256xf32, #tpu.memory_space<vmem>>, vector<16x256xf32>
    tpu.vector_store %arg7[%c0_6, %c0_7], %7 {strides = array<i32>} : memref<16x256xf32, #tpu.memory_space<vmem>>, vector<16x256xf32>,
    %c0_i32_8 = arith.constant 0 : i32
    %9 = arith.cmpi eq, %arg2, %c0_i32_8 : i32
    %10 = arith.extui %9 : i1 to i32
    %c0_i32_9 = arith.constant 0 : i32
    %11 = arith.cmpi ne, %10, %c0_i32_9 : i32
    scf.if %11 {
      %c0_10 = arith.constant 0 : index
      %c0_11 = arith.constant 0 : index
      %12 = vector.load %arg7[%c0_10, %c0_11] : memref<16x256xf32, #tpu.memory_space<vmem>>, vector<16x256xf32>
      %c0_12 = arith.constant 0 : index
      %c0_13 = arith.constant 0 : index
      %13 = vector.load %arg5[%c0_12, %c0_13] : memref<1x256xf32, #tpu.memory_space<vmem>>, vector<1x256xf32>
      %14 = vector.broadcast %13 : vector<1x256xf32> to vector<16x256xf32>
      %15 = arith.addf %12, %14 : vector<16x256xf32>
      %16 = arith.mulf %15, %15 : vector<16x256xf32>
      %17 = arith.mulf %15, %16 : vector<16x256xf32>
      %cst_14 = arith.constant 4.471500e-02 : f32
      %18 = vector.broadcast %cst_14 : f32 to vector<16x256xf32>
      %19 = arith.mulf %18, %17 : vector<16x256xf32>
      %20 = arith.addf %15, %19 : vector<16x256xf32>
      %cst_15 = arith.constant 0.797884583 : f32
      %21 = vector.broadcast %cst_15 : f32 to vector<16x256xf32>
      %22 = arith.mulf %21, %20 : vector<16x256xf32>
      %23 = math.tanh %22 : vector<16x256xf32>
      %cst_16 = arith.constant 1.000000e+00 : f32
      %24 = vector.broadcast %cst_16 : f32 to vector<16x256xf32>
      %25 = arith.addf %24, %23 : vector<16x256xf32>
      %cst_17 = arith.constant 5.000000e-01 : f32
      %26 = vector.broadcast %cst_17 : f32 to vector<16x256xf32>
      %27 = arith.mulf %26, %25 : vector<16x256xf32>
      %28 = arith.mulf %15, %27 : vector<16x256xf32>
      %29 = arith.truncf %28 : vector<16x256xf32> to vector<16x256xbf16>
      %c0_18 = arith.constant 0 : index
      %c0_19 = arith.constant 0 : index
      %30 = vector.load %arg6[%c0_18, %c0_19] : memref<16x256xbf16, #tpu.memory_space<vmem>>, vector<16x256xbf16>
      tpu.vector_store %arg6[%c0_18, %c0_19], %29 {strides = array<i32>} : memref<16x256xbf16, #tpu.memory_space<vmem>>, vector<16x256xbf16>,
    } else {
    }
    return
  }
  func.func @transform_0(%arg0: i32, %arg1: i32, %arg2: i32) -> (i32, i32) {
    %c0_i32 = arith.constant 0 : i32
    return %arg0, %arg2 : i32, i32
  }
  func.func @transform_1(%arg0: i32, %arg1: i32, %arg2: i32) -> (i32, i32) {
    %c0_i32 = arith.constant 0 : i32
    return %arg2, %arg1 : i32, i32
  }
  func.func @transform_2(%arg0: i32, %arg1: i32, %arg2: i32) -> (i32, i32) {
    %c0_i32 = arith.constant 0 : i32
    %c0_i32_0 = arith.constant 0 : i32
    return %c0_i32, %arg1 : i32, i32
  }
  func.func @transform_3(%arg0: i32, %arg1: i32, %arg2: i32) -> (i32, i32) {
    %c0_i32 = arith.constant 0 : i32
    return %arg0, %arg1 : i32, i32
  }
}

module attributes {stable_mosaic.version = 11 : i64} {
  func.func @_dense_add_ln_kernel(%arg0: i32, %arg1: i32, %arg2: memref<16x256xbf16, #tpu.memory_space<vmem>>, %arg3: memref<256x128xbf16, #tpu.memory_space<vmem>>, %arg4: memref<1x128xf32, #tpu.memory_space<vmem>>, %arg5: memref<16x128xbf16, #tpu.memory_space<vmem>>, %arg6: memref<1x128xf32, #tpu.memory_space<vmem>>, %arg7: memref<1x128xf32, #tpu.memory_space<vmem>>, %arg8: memref<16x128xbf16, #tpu.memory_space<vmem>>, %arg9: memref<16x128xf32, #tpu.memory_space<vmem>>) attributes {dimension_semantics = [#tpu.dimension_semantics<parallel>, #tpu.dimension_semantics<arbitrary>], iteration_bounds = array<i64: 1, 1>, scalar_prefetch = 0 : i64, scratch_operands = 1 : i64, tpu.core_type = #tpu.core_type<tc>, window_params = [{transform_indices = @transform_0, window_bounds = array<i64: 16, 256>}, {transform_indices = @transform_1, window_bounds = array<i64: 256, 128>}, {pipeline_mode = #tpu.pipeline_mode<synchronous>, transform_indices = @transform_2, window_bounds = array<i64: 1, 128>}, {transform_indices = @transform_3, window_bounds = array<i64: 16, 128>}, {pipeline_mode = #tpu.pipeline_mode<synchronous>, transform_indices = @transform_4, window_bounds = array<i64: 1, 128>}, {pipeline_mode = #tpu.pipeline_mode<synchronous>, transform_indices = @transform_5, window_bounds = array<i64: 1, 128>}, {transform_indices = @transform_6, window_bounds = array<i64: 16, 128>}]} {
    %c0_i32 = arith.constant 0 : i32
    %0 = arith.cmpi eq, %arg1, %c0_i32 : i32
    %1 = arith.extui %0 : i1 to i32
    %c0_i32_0 = arith.constant 0 : i32
    %2 = arith.cmpi ne, %1, %c0_i32_0 : i32
    scf.if %2 {
      %cst_10 = arith.constant 0.000000e+00 : f32
      %12 = vector.broadcast %cst_10 : f32 to vector<16x128xf32>
      %c0_11 = arith.constant 0 : index
      %c0_12 = arith.constant 0 : index
      %13 = vector.load %arg9[%c0_11, %c0_12] : memref<16x128xf32, #tpu.memory_space<vmem>>, vector<16x128xf32>
      tpu.vector_store %arg9[%c0_11, %c0_12], %12 {strides = array<i32>} : memref<16x128xf32, #tpu.memory_space<vmem>>, vector<16x128xf32>,
    } else {
    }
    %c0 = arith.constant 0 : index
    %c0_1 = arith.constant 0 : index
    %3 = vector.load %arg9[%c0, %c0_1] : memref<16x128xf32, #tpu.memory_space<vmem>>, vector<16x128xf32>
    %c0_2 = arith.constant 0 : index
    %c0_3 = arith.constant 0 : index
    %4 = vector.load %arg2[%c0_2, %c0_3] : memref<16x256xbf16, #tpu.memory_space<vmem>>, vector<16x256xbf16>
    %c0_4 = arith.constant 0 : index
    %c0_5 = arith.constant 0 : index
    %5 = vector.load %arg3[%c0_4, %c0_5] : memref<256x128xbf16, #tpu.memory_space<vmem>>, vector<256x128xbf16>
    %cst = arith.constant dense<0.000000e+00> : vector<16x128xf32>
    %6 = tpu.matmul %4, %5, %cst {dimension_numbers = #tpu.dot_dimension_numbers<[1], [0], [0], [1], [0, 0, 1, 1], [], []>} : vector<16x256xbf16>, vector<256x128xbf16>, vector<16x128xf32> -> vector<16x128xf32>
    %7 = arith.addf %3, %6 : vector<16x128xf32>
    %c0_6 = arith.constant 0 : index
    %c0_7 = arith.constant 0 : index
    %8 = vector.load %arg9[%c0_6, %c0_7] : memref<16x128xf32, #tpu.memory_space<vmem>>, vector<16x128xf32>
    tpu.vector_store %arg9[%c0_6, %c0_7], %7 {strides = array<i32>} : memref<16x128xf32, #tpu.memory_space<vmem>>, vector<16x128xf32>,
    %c0_i32_8 = arith.constant 0 : i32
    %9 = arith.cmpi eq, %arg1, %c0_i32_8 : i32
    %10 = arith.extui %9 : i1 to i32
    %c0_i32_9 = arith.constant 0 : i32
    %11 = arith.cmpi ne, %10, %c0_i32_9 : i32
    scf.if %11 {
      %c0_10 = arith.constant 0 : index
      %c0_11 = arith.constant 0 : index
      %12 = vector.load %arg9[%c0_10, %c0_11] : memref<16x128xf32, #tpu.memory_space<vmem>>, vector<16x128xf32>
      %c0_12 = arith.constant 0 : index
      %c0_13 = arith.constant 0 : index
      %13 = vector.load %arg4[%c0_12, %c0_13] : memref<1x128xf32, #tpu.memory_space<vmem>>, vector<1x128xf32>
      %14 = vector.broadcast %13 : vector<1x128xf32> to vector<16x128xf32>
      %15 = arith.addf %12, %14 : vector<16x128xf32>
      %c0_14 = arith.constant 0 : index
      %c0_15 = arith.constant 0 : index
      %16 = vector.load %arg5[%c0_14, %c0_15] : memref<16x128xbf16, #tpu.memory_space<vmem>>, vector<16x128xbf16>
      %17 = arith.extf %16 : vector<16x128xbf16> to vector<16x128xf32>
      %18 = arith.addf %15, %17 : vector<16x128xf32>
      %cst_16 = arith.constant dense<0.000000e+00> : vector<16xf32>
      %19 = vector.multi_reduction <add>, %18, %cst_16 [1] : vector<16x128xf32> to vector<16xf32>
      %20 = vector.shape_cast %19 : vector<16xf32> to vector<16x1xf32>
      %cst_17 = arith.constant 1.280000e+02 : f32
      %21 = vector.broadcast %cst_17 : f32 to vector<16x1xf32>
      %22 = arith.divf %20, %21 : vector<16x1xf32>
      %23 = vector.broadcast %22 : vector<16x1xf32> to vector<16x128xf32>
      %24 = arith.subf %18, %23 : vector<16x128xf32>
      %25 = arith.mulf %24, %24 : vector<16x128xf32>
      %cst_18 = arith.constant dense<0.000000e+00> : vector<16xf32>
      %26 = vector.multi_reduction <add>, %25, %cst_18 [1] : vector<16x128xf32> to vector<16xf32>
      %27 = vector.shape_cast %26 : vector<16xf32> to vector<16x1xf32>
      %cst_19 = arith.constant 1.280000e+02 : f32
      %28 = vector.broadcast %cst_19 : f32 to vector<16x1xf32>
      %29 = arith.divf %27, %28 : vector<16x1xf32>
      %30 = vector.broadcast %22 : vector<16x1xf32> to vector<16x128xf32>
      %31 = arith.subf %18, %30 : vector<16x128xf32>
      %cst_20 = arith.constant 9.99999996E-13 : f32
      %32 = vector.broadcast %cst_20 : f32 to vector<16x1xf32>
      %33 = arith.addf %29, %32 : vector<16x1xf32>
      %34 = math.rsqrt %33 : vector<16x1xf32>
      %35 = vector.broadcast %34 : vector<16x1xf32> to vector<16x128xf32>
      %36 = arith.mulf %31, %35 : vector<16x128xf32>
      %c0_21 = arith.constant 0 : index
      %c0_22 = arith.constant 0 : index
      %37 = vector.load %arg6[%c0_21, %c0_22] : memref<1x128xf32, #tpu.memory_space<vmem>>, vector<1x128xf32>
      %38 = vector.broadcast %37 : vector<1x128xf32> to vector<16x128xf32>
      %39 = arith.mulf %36, %38 : vector<16x128xf32>
      %c0_23 = arith.constant 0 : index
      %c0_24 = arith.constant 0 : index
      %40 = vector.load %arg7[%c0_23, %c0_24] : memref<1x128xf32, #tpu.memory_space<vmem>>, vector<1x128xf32>
      %41 = vector.broadcast %40 : vector<1x128xf32> to vector<16x128xf32>
      %42 = arith.addf %39, %41 : vector<16x128xf32>
      %43 = arith.truncf %42 : vector<16x128xf32> to vector<16x128xbf16>
      %c0_25 = arith.constant 0 : index
      %c0_26 = arith.constant 0 : index
      %44 = vector.load %arg8[%c0_25, %c0_26] : memref<16x128xbf16, #tpu.memory_space<vmem>>, vector<16x128xbf16>
      tpu.vector_store %arg8[%c0_25, %c0_26], %43 {strides = array<i32>} : memref<16x128xbf16, #tpu.memory_space<vmem>>, vector<16x128xbf16>,
    } else {
    }
    return
  }
  func.func @transform_0(%arg0: i32, %arg1: i32) -> (i32, i32) {
    %c0_i32 = arith.constant 0 : i32
    return %arg0, %arg1 : i32, i32
  }
  func.func @transform_1(%arg0: i32, %arg1: i32) -> (i32, i32) {
    %c0_i32 = arith.constant 0 : i32
    %c0_i32_0 = arith.constant 0 : i32
    return %arg1, %c0_i32 : i32, i32
  }
  func.func @transform_2(%arg0: i32, %arg1: i32) -> (i32, i32) {
    %c0_i32 = arith.constant 0 : i32
    %c0_i32_0 = arith.constant 0 : i32
    %c0_i32_1 = arith.constant 0 : i32
    return %c0_i32, %c0_i32_0 : i32, i32
  }
  func.func @transform_3(%arg0: i32, %arg1: i32) -> (i32, i32) {
    %c0_i32 = arith.constant 0 : i32
    %c0_i32_0 = arith.constant 0 : i32
    return %arg0, %c0_i32 : i32, i32
  }
  func.func @transform_4(%arg0: i32, %arg1: i32) -> (i32, i32) {
    %c0_i32 = arith.constant 0 : i32
    %c0_i32_0 = arith.constant 0 : i32
    %c0_i32_1 = arith.constant 0 : i32
    return %c0_i32, %c0_i32_0 : i32, i32
  }
  func.func @transform_5(%arg0: i32, %arg1: i32) -> (i32, i32) {
    %c0_i32 = arith.constant 0 : i32
    %c0_i32_0 = arith.constant 0 : i32
    %c0_i32_1 = arith.constant 0 : i32
    return %c0_i32, %c0_i32_0 : i32, i32
  }
  func.func @transform_6(%arg0: i32, %arg1: i32) -> (i32, i32) {
    %c0_i32 = arith.constant 0 : i32
    %c0_i32_0 = arith.constant 0 : i32
    return %arg0, %c0_i32 : i32, i32
  }
}

module attributes {stable_mosaic.version = 11 : i64} {
  func.func @_dense_kernel(%arg0: i32, %arg1: i32, %arg2: i32, %arg3: memref<2x128xbf16, #tpu.memory_space<vmem>>, %arg4: memref<128x128xbf16, #tpu.memory_space<vmem>>, %arg5: memref<1x128xf32, #tpu.memory_space<vmem>>, %arg6: memref<2x128xbf16, #tpu.memory_space<vmem>>, %arg7: memref<2x128xf32, #tpu.memory_space<vmem>>) attributes {dimension_semantics = [#tpu.dimension_semantics<parallel>, #tpu.dimension_semantics<parallel>, #tpu.dimension_semantics<arbitrary>], iteration_bounds = array<i64: 1, 1, 1>, scalar_prefetch = 0 : i64, scratch_operands = 1 : i64, tpu.core_type = #tpu.core_type<tc>, window_params = [{transform_indices = @transform_0, window_bounds = array<i64: 2, 128>}, {transform_indices = @transform_1, window_bounds = array<i64: 128, 128>}, {transform_indices = @transform_2, window_bounds = array<i64: 1, 128>}, {transform_indices = @transform_3, window_bounds = array<i64: 2, 128>}]} {
    %c0_i32 = arith.constant 0 : i32
    %0 = arith.cmpi eq, %arg2, %c0_i32 : i32
    %1 = arith.extui %0 : i1 to i32
    %c0_i32_0 = arith.constant 0 : i32
    %2 = arith.cmpi ne, %1, %c0_i32_0 : i32
    scf.if %2 {
      %cst_10 = arith.constant 0.000000e+00 : f32
      %12 = vector.broadcast %cst_10 : f32 to vector<2x128xf32>
      %c0_11 = arith.constant 0 : index
      %c0_12 = arith.constant 0 : index
      %13 = vector.load %arg7[%c0_11, %c0_12] : memref<2x128xf32, #tpu.memory_space<vmem>>, vector<2x128xf32>
      tpu.vector_store %arg7[%c0_11, %c0_12], %12 {strides = array<i32>} : memref<2x128xf32, #tpu.memory_space<vmem>>, vector<2x128xf32>,
    } else {
    }
    %c0 = arith.constant 0 : index
    %c0_1 = arith.constant 0 : index
    %3 = vector.load %arg7[%c0, %c0_1] : memref<2x128xf32, #tpu.memory_space<vmem>>, vector<2x128xf32>
    %c0_2 = arith.constant 0 : index
    %c0_3 = arith.constant 0 : index
    %4 = vector.load %arg3[%c0_2, %c0_3] : memref<2x128xbf16, #tpu.memory_space<vmem>>, vector<2x128xbf16>
    %c0_4 = arith.constant 0 : index
    %c0_5 = arith.constant 0 : index
    %5 = vector.load %arg4[%c0_4, %c0_5] : memref<128x128xbf16, #tpu.memory_space<vmem>>, vector<128x128xbf16>
    %cst = arith.constant dense<0.000000e+00> : vector<2x128xf32>
    %6 = tpu.matmul %4, %5, %cst {dimension_numbers = #tpu.dot_dimension_numbers<[1], [0], [0], [1], [0, 0, 1, 1], [], []>} : vector<2x128xbf16>, vector<128x128xbf16>, vector<2x128xf32> -> vector<2x128xf32>
    %7 = arith.addf %3, %6 : vector<2x128xf32>
    %c0_6 = arith.constant 0 : index
    %c0_7 = arith.constant 0 : index
    %8 = vector.load %arg7[%c0_6, %c0_7] : memref<2x128xf32, #tpu.memory_space<vmem>>, vector<2x128xf32>
    tpu.vector_store %arg7[%c0_6, %c0_7], %7 {strides = array<i32>} : memref<2x128xf32, #tpu.memory_space<vmem>>, vector<2x128xf32>,
    %c0_i32_8 = arith.constant 0 : i32
    %9 = arith.cmpi eq, %arg2, %c0_i32_8 : i32
    %10 = arith.extui %9 : i1 to i32
    %c0_i32_9 = arith.constant 0 : i32
    %11 = arith.cmpi ne, %10, %c0_i32_9 : i32
    scf.if %11 {
      %c0_10 = arith.constant 0 : index
      %c0_11 = arith.constant 0 : index
      %12 = vector.load %arg7[%c0_10, %c0_11] : memref<2x128xf32, #tpu.memory_space<vmem>>, vector<2x128xf32>
      %c0_12 = arith.constant 0 : index
      %c0_13 = arith.constant 0 : index
      %13 = vector.load %arg5[%c0_12, %c0_13] : memref<1x128xf32, #tpu.memory_space<vmem>>, vector<1x128xf32>
      %14 = vector.broadcast %13 : vector<1x128xf32> to vector<2x128xf32>
      %15 = arith.addf %12, %14 : vector<2x128xf32>
      %16 = math.tanh %15 : vector<2x128xf32>
      %17 = arith.truncf %16 : vector<2x128xf32> to vector<2x128xbf16>
      %c0_14 = arith.constant 0 : index
      %c0_15 = arith.constant 0 : index
      %18 = vector.load %arg6[%c0_14, %c0_15] : memref<2x128xbf16, #tpu.memory_space<vmem>>, vector<2x128xbf16>
      tpu.vector_store %arg6[%c0_14, %c0_15], %17 {strides = array<i32>} : memref<2x128xbf16, #tpu.memory_space<vmem>>, vector<2x128xbf16>,
    } else {
    }
    return
  }
  func.func @transform_0(%arg0: i32, %arg1: i32, %arg2: i32) -> (i32, i32) {
    %c0_i32 = arith.constant 0 : i32
    return %arg0, %arg2 : i32, i32
  }
  func.func @transform_1(%arg0: i32, %arg1: i32, %arg2: i32) -> (i32, i32) {
    %c0_i32 = arith.constant 0 : i32
    return %arg2, %arg1 : i32, i32
  }
  func.func @transform_2(%arg0: i32, %arg1: i32, %arg2: i32) -> (i32, i32) {
    %c0_i32 = arith.constant 0 : i32
    %c0_i32_0 = arith.constant 0 : i32
    return %c0_i32, %arg1 : i32, i32
  }
  func.func @transform_3(%arg0: i32, %arg1: i32, %arg2: i32) -> (i32, i32) {
    %c0_i32 = arith.constant 0 : i32
    return %arg0, %arg1 : i32, i32
  }
}

</mosaic_0001>

<llo_original>
// kernel: transformer_forward.12
$region0: #{transformer_forward.12}
  #allocation0 [shape = 'u32[]', space=smem, size = 0x4, offset = 0x4, fixed_abs, tag = 'smem constant byte address 0x4 - core index']
  #allocation1 [shape = 'u32[144,128]{1,0:T(1,128)}', space=vmem, size = 0x12000, scoped, tag = 'internal scratch']
  %s0 = inlined_call_operand.vmem [shape: bf16[2,8,128], index: 0, kind: input, shape index: {}]
  %s1 = inlined_call_operand.vmem [shape: bf16[8,128], index: 1, kind: input, shape index: {}]
  %s2 = inlined_call_operand.vmem [shape: f32[1,128], index: 2, kind: input, shape index: {}]
  %s3 = inlined_call_operand.vmem [shape: f32[1,128], index: 3, kind: input, shape index: {}]
  %s4 = inlined_call_operand.vmem [shape: bf16[2,8,128], index: 4, kind: output, shape index: {}]
  %s5 = sld [smem:[#allocation0]]
  $region49: #{transformer_forward.12} parent=0
    _
  %s7 = ssub.s32 1, %s5
  %s8 = scalar_select 0, %s7, %s5
  loop: start=0, step=1, limit=4
  $region2: #{transformer_forward.12} parent=0 // loop_pre_header
    _
  $region3: #{transformer_forward.12} parent=0 // loop_header
    %s10 = sphi 0, %s14
    %p11 = scmp.ge.s32.totalorder %s10, 4
    %s17 = sphi 0, %s29
    %s18 = sphi 0, %s25
    %s19 = sphi 0, %s17
    %s20 = sphi 0, %s18
    %s21 = sphi 0, %s19
    %s22 = sphi 0, %s20
    %s34 = sphi 0, %s36
    %s37 = sphi 0, %s34
    %s38 = sphi 0, %s37
    %s54 = sphi 0, %s38
    %s60 = sphi 0, %s62
    %s63 = sphi 0, %s60
    %s64 = sphi 0, %s63
    %s80 = sphi 0, %s64
    %s84 = sphi 0, %s84
    %s86 = sphi 0, %s84
    %s87 = sphi 0, %s86
    %s101 = sphi 0, %s87
    %s105 = sphi 0, %s105
    %s107 = sphi 0, %s105
    %s108 = sphi 0, %s107
    %s122 = sphi 0, %s108
    %s130 = sphi 0, %s132
    %s133 = sphi 0, %s130
    %s134 = sphi 0, %s133
    %s150 = sphi 0, %s134
  $region4: #{transformer_forward.12} parent=0 // loop_header_branch
    %13 = sbr.rel (%p11) target = $region8
  $region5: #{transformer_forward.12} parent=0 // loop_body
    %s15 = ssub.s32 %s10, 1
    %s16 = ssub.s32 %s10, 2
    %s23 = sadd.s32 1, %s18
    %p24 = scmp.ge.s32.totalorder %s23, 1
    %s25 = scalar_select %p24, 0, %s23
    %s26 = sadd.s32 1, %s17
    %s27 = scalar_select %p24, %s26, %s17
    %p28 = scmp.ge.s32.totalorder %s27, 2
    %s29 = scalar_select %p28, 0, %s27
    %s30 = ssub.s32 %s17, %s29
    %s31 = ssub.s32 %s18, %s25
    %s32 = sor.u32 %s30, %s31
    %p33 = scmp.eq.s32.totalorder %s32, 0
    %s35 = sadd.s32 %s34, 1
    %s36 = scalar_select %p33, %s34, %s35
    %p39 = pneg %p33
    %p40 = scmp.eq.s32.totalorder %s10, 1
    %p41 = por %p39, %p40
    %p42 = scmp.ne.s32.totalorder %s34, %s37
    %p43 = scmp.eq.s32.totalorder %s10, 0
    %p44 = por %p42, %p43
    %p45 = scmp.ne.s32.totalorder %s34, %s37
    %p46 = scmp.eq.s32.totalorder %s15, 1
    %p47 = por %p45, %p46
    %p48 = scmp.ne.s32.totalorder %s37, %s38
    %p49 = scmp.eq.s32.totalorder %s15, 0
    %p50 = por %p48, %p49
    %p51 = scmp.ne.s32.totalorder %s37, %s38
    %p52 = scmp.eq.s32.totalorder %s16, 1
    %p53 = por %p51, %p52
    %p55 = scmp.ne.s32.totalorder %s38, %s54
    %p56 = scmp.eq.s32.totalorder %s16, 0
    %p57 = por %p55, %p56
    %s58 = ssub.s32 %s18, %s25
    %p59 = scmp.eq.s32.totalorder %s58, 0
    %s61 = sadd.s32 %s60, 1
    %s62 = scalar_select %p59, %s60, %s61
    %p65 = pneg %p59
    %p66 = scmp.eq.s32.totalorder %s10, 1
    %p67 = por %p65, %p66
    %p68 = scmp.ne.s32.totalorder %s60, %s63
    %p69 = scmp.eq.s32.totalorder %s10, 0
    %p70 = por %p68, %p69
    %p71 = scmp.ne.s32.totalorder %s60, %s63
    %p72 = scmp.eq.s32.totalorder %s15, 1
    %p73 = por %p71, %p72
    %p74 = scmp.ne.s32.totalorder %s63, %s64
    %p75 = scmp.eq.s32.totalorder %s15, 0
    %p76 = por %p74, %p75
    %p77 = scmp.ne.s32.totalorder %s63, %s64
    %p78 = scmp.eq.s32.totalorder %s16, 1
    %p79 = por %p77, %p78
    %p81 = scmp.ne.s32.totalorder %s64, %s80
    %p82 = scmp.eq.s32.totalorder %s16, 0
    %p83 = por %p81, %p82
    %s85 = sadd.s32 %s84, 1
    %p88 = scmp.eq.s32.totalorder %s10, 1
    %p89 = scmp.ne.s32.totalorder %s84, %s86
    %p90 = scmp.eq.s32.totalorder %s10, 0
    %p91 = por %p89, %p90
    %p92 = scmp.ne.s32.totalorder %s84, %s86
    %p93 = scmp.eq.s32.totalorder %s15, 1
    %p94 = por %p92, %p93
    %p95 = scmp.ne.s32.totalorder %s86, %s87
    %p96 = scmp.eq.s32.totalorder %s15, 0
    %p97 = por %p95, %p96
    %p98 = scmp.ne.s32.totalorder %s86, %s87
    %p99 = scmp.eq.s32.totalorder %s16, 1
    %p100 = por %p98, %p99
    %p102 = scmp.ne.s32.totalorder %s87, %s101
    %p103 = scmp.eq.s32.totalorder %s16, 0
    %p104 = por %p102, %p103
    %s106 = sadd.s32 %s105, 1
    %p109 = scmp.eq.s32.totalorder %s10, 1
    %p110 = scmp.ne.s32.totalorder %s105, %s107
    %p111 = scmp.eq.s32.totalorder %s10, 0
    %p112 = por %p110, %p111
    %p113 = scmp.ne.s32.totalorder %s105, %s107
    %p114 = scmp.eq.s32.totalorder %s15, 1
    %p115 = por %p113, %p114
    %p116 = scmp.ne.s32.totalorder %s107, %s108
    %p117 = scmp.eq.s32.totalorder %s15, 0
    %p118 = por %p116, %p117
    %p119 = scmp.ne.s32.totalorder %s107, %s108
    %p120 = scmp.eq.s32.totalorder %s16, 1
    %p121 = por %p119, %p120
    %p123 = scmp.ne.s32.totalorder %s108, %s122
    %p124 = scmp.eq.s32.totalorder %s16, 0
    %p125 = por %p123, %p124
    %s126 = ssub.s32 %s17, %s29
    %s127 = ssub.s32 %s18, %s25
    %s128 = sor.u32 %s126, %s127
    %p129 = scmp.eq.s32.totalorder %s128, 0
    %s131 = sadd.s32 %s130, 1
    %s132 = scalar_select %p129, %s130, %s131
    %p135 = pneg %p129
    %p136 = scmp.eq.s32.totalorder %s10, 1
    %p137 = por %p135, %p136
    %p138 = scmp.ne.s32.totalorder %s130, %s133
    %p139 = scmp.eq.s32.totalorder %s10, 0
    %p140 = por %p138, %p139
    %p141 = scmp.ne.s32.totalorder %s130, %s133
    %p142 = scmp.eq.s32.totalorder %s15, 1
    %p143 = por %p141, %p142
    %p144 = scmp.ne.s32.totalorder %s133, %s134
    %p145 = scmp.eq.s32.totalorder %s15, 0
    %p146 = por %p144, %p145
    %p147 = scmp.ne.s32.totalorder %s133, %s134
    %p148 = scmp.eq.s32.totalorder %s16, 1
    %p149 = por %p147, %p148
    %p151 = scmp.ne.s32.totalorder %s134, %s150
    %p152 = scmp.eq.s32.totalorder %s16, 0
    %p153 = por %p151, %p152
    %p154 = scmp.le.s32.totalorder 1, %s10
    %p155 = scmp.lt.s32.totalorder %s10, 3
    %p156 = pnand %p154, %p155
    %p157 = pneg %p156
    // Predicated region
    $region9: #{transformer_forward.12} parent=5 // pred_check
      _
    $region10: #{transformer_forward.12} parent=5 // pred_check_branch
      %159 = sbr.rel (%p156) target = $region12
    $region11: #{transformer_forward.12} parent=5 // pred_region
      %s160 = ssub.s32 %s10, 1
      // Predicated region
      $region13: #{transformer_forward.12} parent=11 // pred_check
        %p161 = pneg %p76
      $region14: #{transformer_forward.12} parent=11 // pred_check_branch
        %163 = sbr.rel (%p161) target = $region16
      $region15: #{transformer_forward.12} parent=11 // pred_region
        %p164 = scmp.lt.s32.totalorder %s20, 0
        %s165 = scalar_select %p164, %s20, 0
        %s166 = smul.addr %s165, 4
        %s167 = scalar_lea.vmem %s1, %s166
      $region16: #{transformer_forward.12} parent=11 // pred_fallthru
        _
      // Predicated region
      $region17: #{transformer_forward.12} parent=11 // pred_check
        %p168 = pneg %p97
      $region18: #{transformer_forward.12} parent=11 // pred_check_branch
        %170 = sbr.rel (%p168) target = $region20
      $region19: #{transformer_forward.12} parent=11 // pred_region
        _
      $region20: #{transformer_forward.12} parent=11 // pred_fallthru
        _
      // Predicated region
      $region21: #{transformer_forward.12} parent=11 // pred_check
        %p171 = pneg %p118
      $region22: #{transformer_forward.12} parent=11 // pred_check_branch
        %173 = sbr.rel (%p171) target = $region24
      $region23: #{transformer_forward.12} parent=11 // pred_region
        _
      $region24: #{transformer_forward.12} parent=11 // pred_fallthru
        _
    $region12: #{transformer_forward.12} parent=5 // pred_fallthru
      _
    %p174 = scmp.lt.s32.totalorder %s10, 2
    // Predicated region
    $region25: #{transformer_forward.12} parent=5 // pred_check
      %p175 = pneg %p174
    $region26: #{transformer_forward.12} parent=5 // pred_check_branch
      %177 = sbr.rel (%p175) target = $region28
    $region27: #{transformer_forward.12} parent=5 // pred_region
      // Predicated region
      $region29: #{transformer_forward.12} parent=27 // pred_check
        %p178 = pneg %p44
      $region30: #{transformer_forward.12} parent=27 // pred_check_branch
        %180 = sbr.rel (%p178) target = $region32
      $region31: #{transformer_forward.12} parent=27 // pred_region
        %p181 = scmp.lt.s32.totalorder %s17, 1
        %s182 = scalar_select %p181, %s17, 1
        %p183 = scmp.lt.s32.totalorder %s18, 0
        %s184 = scalar_select %p183, %s18, 0
        %s185 = sadd.s32 %s184, %s182
        %s186 = smul.addr %s185, 4
        %s187 = scalar_lea.vmem %s0, %s186
      $region32: #{transformer_forward.12} parent=27 // pred_fallthru
        _
    $region28: #{transformer_forward.12} parent=5 // pred_fallthru
      _
    %p188 = scmp.le.s32.totalorder 1, %s10
    %p189 = scmp.lt.s32.totalorder %s10, 3
    %p190 = pnand %p188, %p189
    %p191 = pneg %p190
    // Predicated region
    $region33: #{transformer_forward.12} parent=5 // pred_check
      _
    $region34: #{transformer_forward.12} parent=5 // pred_check_branch
      %193 = sbr.rel (%p190) target = $region36
    $region35: #{transformer_forward.12} parent=5 // pred_region
      %s194 = ssub.s32 %s10, 1
      %p195 = scmp.lt.s32.totalorder %s19, 1
      %s196 = scalar_select %p195, %s19, 1
      %p197 = scmp.lt.s32.totalorder %s20, 0
      %s198 = scalar_select %p197, %s20, 0
      %s199 = sadd.s32 %s198, %s196
      %s200 = smul.addr %s199, 4
      %s201 = scalar_lea.vmem %s0, %s200
      %p202 = pneg %p50
      %p203 = pneg %p47
      %p204 = scmp.lt.s32.totalorder %s20, 0
      %s205 = scalar_select %p204, %s20, 0
      %s206 = smul.addr %s205, 4
      %s207 = scalar_lea.vmem %s1, %s206
      %p208 = pneg %p76
      %p209 = pneg %p73
      %p210 = pneg %p97
      %p211 = pneg %p94
      %p212 = pneg %p118
      %p213 = pneg %p115
      %p214 = pneg %p146
      %p215 = pneg %p143
      %p216 = scmp.lt.s32.totalorder %s19, 1
      %s217 = scalar_select %p216, %s19, 1
      %p218 = scmp.lt.s32.totalorder %s20, 0
      %s219 = scalar_select %p218, %s20, 0
      %s220 = sadd.s32 %s219, %s217
      %s221 = smul.addr %s220, 4
      %s222 = scalar_lea.vmem %s4, %s221
      %p223 = scmp.lt.s32.totalorder %s19, 1
      %s224 = scalar_select %p223, %s19, 1
      %p225 = scmp.lt.s32.totalorder %s20, 0
      %s226 = scalar_select %p225, %s20, 0
      %s227 = sadd.s32 %s226, %s224
      %s228 = smul.addr %s227, 4
      %s229 = scalar_lea.vmem %s0, %s228
      %p230 = scmp.lt.s32.totalorder %s20, 0
      %s231 = scalar_select %p230, %s20, 0
      %s232 = smul.addr %s231, 4
      %s233 = scalar_lea.vmem %s1, %s232
      %p234 = scmp.lt.s32.totalorder %s19, 1
      %s235 = scalar_select %p234, %s19, 1
      %p236 = scmp.lt.s32.totalorder %s20, 0
      %s237 = scalar_select %p236, %s20, 0
      %s238 = sadd.s32 %s237, %s235
      %s239 = smul.addr %s238, 4
      %s240 = scalar_lea.vmem %s4, %s239
      %v241 = vld [vmem:[%s229] sm:$0xf]
      %v242 = vunpack.c.l.bf16 %v241
      %v243 = vld [vmem:[%s233] sm:$0xf]
      %v244 = vunpack.c.l.bf16 %v243
      %v245 = vadd.f32 %v242, %v244
      %246 = vadd.xlane.f32.xlu0 %v245
      %v247 = vpop.xlane.xlu0 %246
      %v248 = vrcp.pop 128.0
      %v249 = vmul.f32 %v247, %v248
      %v250 = vsub.f32 %v245, %v249
      %v251 = vmul.f32 %v250, %v250
      %252 = vadd.xlane.f32.xlu0 %v251
      %v253 = vpop.xlane.xlu0 %252
      %v254 = vmul.f32 %v253, %v248
      %v255 = vadd.f32 %v254, 1e-12
      %v256 = vrsqrt.pop %v255
      %v257 = vmul.f32 %v250, %v256
      %v258 = vld [vmem:[%s2] sm:$0x1]
      %v260 = vlaneseq
      %v261 = vshrl.u32 %v260, 7
      %v262 = vsub.s32 0, %v261
      %v263 = vrot.slane %v258, %v262
      %v265 = vmul.f32 %v257, %v263
      %v266 = vld [vmem:[%s3] sm:$0x1]
      %v268 = vlaneseq
      %v269 = vshrl.u32 %v268, 7
      %v270 = vsub.s32 0, %v269
      %v271 = vrot.slane %v266, %v270
      %v273 = vadd.f32 %v265, %v271
      %v274 = vpack.c.bf16 %v273, %v273
      %275 = vst [vmem:[%s240] sm:$0xf] %v274
      %p276 = scmp.lt.s32.totalorder %s19, 1
      %s277 = scalar_select %p276, %s19, 1
      %p278 = scmp.lt.s32.totalorder %s20, 0
      %s279 = scalar_select %p278, %s20, 0
      %s280 = sadd.s32 %s279, %s277
      %s281 = smul.addr %s280, 4
      %s282 = scalar_lea.vmem %s4, %s281
      // Predicated region
      $region37: #{transformer_forward.12} parent=35 // pred_check
        %p283 = pneg %p143
      $region38: #{transformer_forward.12} parent=35 // pred_check_branch
        %285 = sbr.rel (%p283) target = $region40
      $region39: #{transformer_forward.12} parent=35 // pred_region
        _
      $region40: #{transformer_forward.12} parent=35 // pred_fallthru
        _
    $region36: #{transformer_forward.12} parent=5 // pred_fallthru
      _
    %p286 = scmp.le.s32.totalorder 2, %s10
    // Predicated region
    $region41: #{transformer_forward.12} parent=5 // pred_check
      %p287 = pneg %p286
    $region42: #{transformer_forward.12} parent=5 // pred_check_branch
      %289 = sbr.rel (%p287) target = $region44
    $region43: #{transformer_forward.12} parent=5 // pred_region
      %s290 = ssub.s32 %s10, 2
      // Predicated region
      $region45: #{transformer_forward.12} parent=43 // pred_check
        %p291 = pneg %p149
      $region46: #{transformer_forward.12} parent=43 // pred_check_branch
        %293 = sbr.rel (%p291) target = $region48
      $region47: #{transformer_forward.12} parent=43 // pred_region
        %p294 = scmp.lt.s32.totalorder %s21, 1
        %s295 = scalar_select %p294, %s21, 1
        %p296 = scmp.lt.s32.totalorder %s22, 0
        %s297 = scalar_select %p296, %s22, 0
        %s298 = sadd.s32 %s297, %s295
        %s299 = smul.addr %s298, 4
        %s300 = scalar_lea.vmem %s4, %s299
      $region48: #{transformer_forward.12} parent=43 // pred_fallthru
        _
    $region44: #{transformer_forward.12} parent=5 // pred_fallthru
      _
  $region6: #{transformer_forward.12} parent=0 // loop_footer
    %s14 = sadd.s32 1, %s10
  $region7: #{transformer_forward.12} parent=0 // loop_footer_branch
    %9 = sbr.rel target = $region3
  $region8: #{transformer_forward.12} parent=0 // loop_exit
    _

// kernel: transformer_forward.15
$region0: #{transformer_forward.15}
  #allocation0 [shape = 'u32[]', space=smem, size = 0x4, offset = 0x4, fixed_abs, tag = 'smem constant byte address 0x4 - core index']
  #allocation1 [shape = 'u32[144,128]{1,0:T(1,128)}', space=vmem, size = 0x12000, scoped, tag = 'internal scratch']
  #allocation2 [shape = 'f32[16,128]{1,0:T(8,128)}', space=vmem, size = 0x2000, scoped, tag = 'scratch operand']
  %s0 = inlined_call_operand.vmem [shape: bf16[16,128], index: 0, kind: input, shape index: {}]
  %s1 = inlined_call_operand.vmem [shape: bf16[128,128], index: 1, kind: input, shape index: {}]
  %s2 = inlined_call_operand.vmem [shape: f32[1,128], index: 2, kind: input, shape index: {}]
  %s3 = inlined_call_operand.vmem [shape: bf16[16,128], index: 3, kind: input, shape index: {}]
  %s4 = inlined_call_operand.vmem [shape: f32[1,128], index: 4, kind: input, shape index: {}]
  %s5 = inlined_call_operand.vmem [shape: f32[1,128], index: 5, kind: input, shape index: {}]
  %s6 = inlined_call_operand.vmem [shape: bf16[16,128], index: 6, kind: output, shape index: {}]
  %s7 = sld [smem:[#allocation0]]
  $region42: #{transformer_forward.15} parent=0
    _
  %s9 = ssub.s32 1, %s7
  %s10 = scalar_select 0, %s9, %s7
  // Predicated region
  $region2: #{transformer_forward.15} parent=0 // pred_check
    _
  $region3: #{transformer_forward.15} parent=0 // pred_check_branch
    %12 = sbr.rel (0) target = $region5
  $region4: #{transformer_forward.15} parent=0 // pred_region
    _
  $region5: #{transformer_forward.15} parent=0 // pred_fallthru
    _
  // Predicated region
  $region6: #{transformer_forward.15} parent=0 // pred_check
    _
  $region7: #{transformer_forward.15} parent=0 // pred_check_branch
    %14 = sbr.rel (0) target = $region9
  $region8: #{transformer_forward.15} parent=0 // pred_region
    _
  $region9: #{transformer_forward.15} parent=0 // pred_fallthru
    _
  // Predicated region
  $region10: #{transformer_forward.15} parent=0 // pred_check
    _
  $region11: #{transformer_forward.15} parent=0 // pred_check_branch
    %16 = sbr.rel (0) target = $region13
  $region12: #{transformer_forward.15} parent=0 // pred_region
    _
  $region13: #{transformer_forward.15} parent=0 // pred_fallthru
    _
  // Predicated region
  $region14: #{transformer_forward.15} parent=0 // pred_check
    _
  $region15: #{transformer_forward.15} parent=0 // pred_check_branch
    %18 = sbr.rel (0) target = $region17
  $region16: #{transformer_forward.15} parent=0 // pred_region
    _
  $region17: #{transformer_forward.15} parent=0 // pred_fallthru
    _
  // Predicated region
  $region18: #{transformer_forward.15} parent=0 // pred_check
    _
  $region19: #{transformer_forward.15} parent=0 // pred_check_branch
    %20 = sbr.rel (0) target = $region21
  $region20: #{transformer_forward.15} parent=0 // pred_region
    _
  $region21: #{transformer_forward.15} parent=0 // pred_fallthru
    _
  // Predicated region
  $region22: #{transformer_forward.15} parent=0 // pred_check
    _
  $region23: #{transformer_forward.15} parent=0 // pred_check_branch
    %22 = sbr.rel (0) target = $region25
  $region24: #{transformer_forward.15} parent=0 // pred_region
    _
  $region25: #{transformer_forward.15} parent=0 // pred_fallthru
    _
  %p24 = scmp.eq.s32.totalorder 0, 0
  // Predicated region
  $region26: #{transformer_forward.15} parent=0 // pred_check
    %p25 = pneg %p24
  $region27: #{transformer_forward.15} parent=0 // pred_check_branch
    %27 = sbr.rel (%p25) target = $region29
  $region28: #{transformer_forward.15} parent=0 // pred_region
    %28 = vst [vmem:[#allocation2] sm:$0xff] 0.0
    %29 = vst [vmem:[#allocation2 + $0x8] sm:$0xff] 0.0
  $region29: #{transformer_forward.15} parent=0 // pred_fallthru
    _
  %v30 = vld [vmem:[#allocation2] sm:$0xff]
  %v31 = vld [vmem:[#allocation2 + $0x8] sm:$0xff]
  %v32 = vld [vmem:[%s0] sm:$0xf]
  %v33 = vld [vmem:[%s0 + $0x4] sm:$0xf]
  %v34 = vld [vmem:[%s1] sm:$0xf]
  %v35 = vld [vmem:[%s1 + $0x4] sm:$0xf]
  %v36 = vld [vmem:[%s1 + $0x8] sm:$0xf]
  %v37 = vld [vmem:[%s1 + $0xc] sm:$0xf]
  %v38 = vld [vmem:[%s1 + $0x10] sm:$0xf]
  %v39 = vld [vmem:[%s1 + $0x14] sm:$0xf]
  %v40 = vld [vmem:[%s1 + $0x18] sm:$0xf]
  %v41 = vld [vmem:[%s1 + $0x1c] sm:$0xf]
  %v42 = vld [vmem:[%s1 + $0x20] sm:$0xf]
  %v43 = vld [vmem:[%s1 + $0x24] sm:$0xf]
  %v44 = vld [vmem:[%s1 + $0x28] sm:$0xf]
  %v45 = vld [vmem:[%s1 + $0x2c] sm:$0xf]
  %v46 = vld [vmem:[%s1 + $0x30] sm:$0xf]
  %v47 = vld [vmem:[%s1 + $0x34] sm:$0xf]
  %v48 = vld [vmem:[%s1 + $0x38] sm:$0xf]
  %v49 = vld [vmem:[%s1 + $0x3c] sm:$0xf]
  %v52 = vunpack.c.l.b16 %v32
  %v53 = vunpack.c.l.b16 %v33
  %v54 = vpack.c.b16 %v53, %v52
  %v72 = vunpack.c.l.b16 %v34
  %v73 = vunpack.c.l.b16 %v35
  %v74 = vunpack.c.l.b16 %v36
  %v75 = vunpack.c.l.b16 %v37
  %v76 = vunpack.c.l.b16 %v38
  %v77 = vunpack.c.l.b16 %v39
  %v78 = vunpack.c.l.b16 %v40
  %v79 = vunpack.c.l.b16 %v41
  %v80 = vunpack.c.l.b16 %v42
  %v81 = vunpack.c.l.b16 %v43
  %v82 = vunpack.c.l.b16 %v44
  %v83 = vunpack.c.l.b16 %v45
  %v84 = vunpack.c.l.b16 %v46
  %v85 = vunpack.c.l.b16 %v47
  %v86 = vunpack.c.l.b16 %v48
  %v87 = vunpack.c.l.b16 %v49
  %v88 = vpack.c.b16 %v73, %v72
  %v89 = vpack.c.b16 %v75, %v74
  %v90 = vpack.c.b16 %v77, %v76
  %v91 = vpack.c.b16 %v79, %v78
  %v92 = vpack.c.b16 %v81, %v80
  %v93 = vpack.c.b16 %v83, %v82
  %v94 = vpack.c.b16 %v85, %v84
  %v95 = vpack.c.b16 %v87, %v86
  %104 = vmatprep.subr.bf16.mxu0 0
  %105 = vmatpush1.bf16.msra.mxu0 %v88
  %106 = vmatprep.subr.bf16.mxu0 0
  %107 = vmatpush1.bf16.msra.mxu0 %v89
  %108 = vmatprep.subr.bf16.mxu0 0
  %109 = vmatpush1.bf16.msra.mxu0 %v90
  %110 = vmatprep.subr.bf16.mxu0 0
  %111 = vmatpush1.bf16.msra.mxu0 %v91
  %112 = vmatprep.subr.bf16.mxu0 0
  %113 = vmatpush1.bf16.msra.mxu0 %v92
  %114 = vmatprep.subr.bf16.mxu0 0
  %115 = vmatpush1.bf16.msra.mxu0 %v93
  %116 = vmatprep.subr.bf16.mxu0 0
  %117 = vmatpush1.bf16.msra.mxu0 %v94
  %118 = vmatprep.subr.bf16.mxu0 0
  %119 = vmatpush1.bf16.msra.mxu0 %v95
  %120 = vmatprep.subr.bf16.mxu0 0
  %121 = vmatpush1.bf16.msra.mxu0 0
  %122 = vmatprep.subr.bf16.mxu0 0
  %123 = vmatpush1.bf16.msra.mxu0 0
  %124 = vmatprep.subr.bf16.mxu0 0
  %125 = vmatpush1.bf16.msra.mxu0 0
  %126 = vmatprep.subr.bf16.mxu0 0
  %127 = vmatpush1.bf16.msra.mxu0 0
  %128 = vmatprep.subr.bf16.mxu0 0
  %129 = vmatpush1.bf16.msra.mxu0 0
  %130 = vmatprep.subr.bf16.mxu0 0
  %131 = vmatpush1.bf16.msra.mxu0 0
  %132 = vmatprep.subr.bf16.mxu0 0
  %133 = vmatpush1.bf16.msra.mxu0 0
  %134 = vmatprep.subr.bf16.mxu0 0
  %135 = vmatpush1.bf16.msra.mxu0 0
  %136 = vmatprep.mubr.bf16.mxu0 0
  %137 = vmatmul.mubr.bf16.gmra.mrb[0].mxu0 %v54
  %v138 = vpop.f32.mrb[0].mxu0
  %v139 = vadd.f32 0.0, %v138
  %v140 = vpop.f32.mrb[0].mxu0
  %v141 = vpop.f32.mrb[0].mxu0
  %v142 = vadd.f32 0.0, %v141
  %v143 = vpop.f32.mrb[0].mxu0
  %144 = vdwg.mxu0
  %v145 = vadd.f32 %v30, %v139
  %v146 = vadd.f32 %v31, %v142
  %147 = vst [vmem:[#allocation2] sm:$0xff] %v145
  %148 = vst [vmem:[#allocation2 + $0x8] sm:$0xff] %v146
  // Predicated region
  $region30: #{transformer_forward.15} parent=0 // pred_check
    %p149 = pneg %p24
  $region31: #{transformer_forward.15} parent=0 // pred_check_branch
    %151 = sbr.rel (%p149) target = $region33
  $region32: #{transformer_forward.15} parent=0 // pred_region
    %v152 = vld [vmem:[#allocation2] sm:$0xff]
    %v153 = vld [vmem:[#allocation2 + $0x8] sm:$0xff]
    %v154 = vld [vmem:[%s2] sm:$0x1]
    %v156 = vlaneseq
    %v157 = vshrl.u32 %v156, 7
    %v158 = vsub.s32 0, %v157
    %v159 = vrot.slane %v154, %v158
    %v161 = vadd.f32 %v152, %v159
    %v162 = vadd.f32 %v153, %v159
    %v163 = vld [vmem:[%s3] sm:$0xf]
    %v164 = vld [vmem:[%s3 + $0x4] sm:$0xf]
    %v165 = vunpack.c.l.bf16 %v163
    %v166 = vunpack.c.l.bf16 %v164
    %v167 = vadd.f32 %v161, %v165
    %v168 = vadd.f32 %v162, %v166
    %169 = vadd.xlane.f32.xlu0 %v167
    %v170 = vpop.xlane.xlu0 %169
    %171 = vadd.xlane.f32.xlu0 %v168
    %v172 = vpop.xlane.xlu0 %171
    %v173 = vrcp.pop 128.0
    %v174 = vmul.f32 %v170, %v173
    %v175 = vmul.f32 %v172, %v173
    %v176 = vsub.f32 %v167, %v174
    %v177 = vsub.f32 %v168, %v175
    %v178 = vmul.f32 %v176, %v176
    %v179 = vmul.f32 %v177, %v177
    %180 = vadd.xlane.f32.xlu0 %v178
    %v181 = vpop.xlane.xlu0 %180
    %182 = vadd.xlane.f32.xlu0 %v179
    %v183 = vpop.xlane.xlu0 %182
    %v184 = vmul.f32 %v181, %v173
    %v185 = vmul.f32 %v183, %v173
    %v186 = vadd.f32 %v184, 1e-12
    %v187 = vadd.f32 %v185, 1e-12
    %v188 = vrsqrt.pop %v186
    %v189 = vrsqrt.pop %v187
    %v190 = vmul.f32 %v176, %v188
    %v191 = vmul.f32 %v177, %v189
    %v192 = vld [vmem:[%s4] sm:$0x1]
    %v194 = vlaneseq
    %v195 = vshrl.u32 %v194, 7
    %v196 = vsub.s32 0, %v195
    %v197 = vrot.slane %v192, %v196
    %v199 = vmul.f32 %v190, %v197
    %v200 = vmul.f32 %v191, %v197
    %v201 = vld [vmem:[%s5] sm:$0x1]
    %v203 = vlaneseq
    %v204 = vshrl.u32 %v203, 7
    %v205 = vsub.s32 0, %v204
    %v206 = vrot.slane %v201, %v205
    %v208 = vadd.f32 %v199, %v206
    %v209 = vadd.f32 %v200, %v206
    %v210 = vpack.c.bf16 %v209, %v208
    %v212 = vunpack.c.l.b16 %v210
    %v213 = vunpack.c.h.b16 %v210
    %v214 = vpack.c.b16 %v212, %v212
    %v215 = vpack.c.b16 %v213, %v213
    %218 = vst [vmem:[%s6] sm:$0xf] %v214
    %219 = vst [vmem:[%s6 + $0x4] sm:$0xf] %v215
  $region33: #{transformer_forward.15} parent=0 // pred_fallthru
    _
  // Predicated region
  $region34: #{transformer_forward.15} parent=0 // pred_check
    _
  $region35: #{transformer_forward.15} parent=0 // pred_check_branch
    %221 = sbr.rel (0) target = $region37
  $region36: #{transformer_forward.15} parent=0 // pred_region
    _
  $region37: #{transformer_forward.15} parent=0 // pred_fallthru
    _
  // Predicated region
  $region38: #{transformer_forward.15} parent=0 // pred_check
    _
  $region39: #{transformer_forward.15} parent=0 // pred_check_branch
    %223 = sbr.rel (0) target = $region41
  $region40: #{transformer_forward.15} parent=0 // pred_region
    _
  $region41: #{transformer_forward.15} parent=0 // pred_fallthru
    _

// kernel: transformer_forward.13
$region0: #{transformer_forward.13}
  #allocation0 [shape = 'u32[]', space=smem, size = 0x4, offset = 0x4, fixed_abs, tag = 'smem constant byte address 0x4 - core index']
  #allocation1 [shape = 'u32[144,128]{1,0:T(1,128)}', space=vmem, size = 0x12000, scoped, tag = 'internal scratch']
  #allocation2 [shape = 'f32[16,128]{1,0:T(8,128)}', space=vmem, size = 0x2000, scoped, tag = 'scratch operand']
  %s0 = inlined_call_operand.vmem [shape: bf16[16,128], index: 0, kind: input, shape index: {}]
  %s1 = inlined_call_operand.vmem [shape: bf16[128,384], index: 1, kind: input, shape index: {}]
  %s2 = inlined_call_operand.vmem [shape: f32[1,384], index: 2, kind: input, shape index: {}]
  %s3 = inlined_call_operand.vmem [shape: bf16[16,384], index: 3, kind: output, shape index: {}]
  %s4 = sld [smem:[#allocation0]]
  $region131: #{transformer_forward.13} parent=0
    _
  %s6 = ssub.s32 1, %s4
  %s7 = scalar_select 0, %s6, %s4
  $region1: #{transformer_forward.13} parent=0
    #allocation3 [shape = 'u8[65536]{0}', space=vmem, size = 0x10000, scoped, tag = 'input window, operand 1']
    #allocation4 [shape = 'u8[8192]{0}', space=vmem, size = 0x2000, scoped, tag = 'output window, operand 0']
    loop: start=0, step=1, limit=5
    $region2: #{transformer_forward.13} parent=1 // loop_pre_header
      _
    $region3: #{transformer_forward.13} parent=1 // loop_header
      %s9 = sphi 0, %s13
      %p10 = scmp.ge.s32.totalorder %s9, 5
      %s16 = sphi 0, %s35
      %s17 = sphi 0, %s31
      %s18 = sphi 0, %s27
      %s19 = sphi 0, %s16
      %s20 = sphi 0, %s17
      %s21 = sphi 0, %s18
      %s22 = sphi 0, %s19
      %s23 = sphi 0, %s20
      %s24 = sphi 0, %s21
      %s40 = sphi 0, %s42
      %s43 = sphi 0, %s40
      %s44 = sphi 0, %s43
      %s60 = sphi 0, %s44
      %s68 = sphi 0, %s70
      %s71 = sphi 0, %s68
      %s72 = sphi 0, %s71
      %s88 = sphi 0, %s72
      %s94 = sphi 0, %s96
      %s97 = sphi 0, %s94
      %s98 = sphi 0, %s97
      %s114 = sphi 0, %s98
      %s122 = sphi 0, %s124
      %s125 = sphi 0, %s122
      %s126 = sphi 0, %s125
      %s142 = sphi 0, %s126
    $region4: #{transformer_forward.13} parent=1 // loop_header_branch
      %12 = sbr.rel (%p10) target = $region8
    $region5: #{transformer_forward.13} parent=1 // loop_body
      %s14 = ssub.s32 %s9, 1
      %s15 = ssub.s32 %s9, 2
      %s25 = sadd.s32 1, %s18
      %p26 = scmp.ge.s32.totalorder %s25, 1
      %s27 = scalar_select %p26, 0, %s25
      %s28 = sadd.s32 1, %s17
      %s29 = scalar_select %p26, %s28, %s17
      %p30 = scmp.ge.s32.totalorder %s29, 3
      %s31 = scalar_select %p30, 0, %s29
      %s32 = sadd.s32 1, %s16
      %s33 = scalar_select %p30, %s32, %s16
      %p34 = scmp.ge.s32.totalorder %s33, 1
      %s35 = scalar_select %p34, 0, %s33
      %s36 = ssub.s32 %s16, %s35
      %s37 = ssub.s32 %s18, %s27
      %s38 = sor.u32 %s36, %s37
      %p39 = scmp.eq.s32.totalorder %s38, 0
      %s41 = sadd.s32 %s40, 1
      %s42 = scalar_select %p39, %s40, %s41
      %p45 = pneg %p39
      %p46 = scmp.eq.s32.totalorder %s9, 2
      %p47 = por %p45, %p46
      %p48 = scmp.ne.s32.totalorder %s40, %s43
      %p49 = scmp.eq.s32.totalorder %s9, 0
      %p50 = por %p48, %p49
      %p51 = scmp.ne.s32.totalorder %s40, %s43
      %p52 = scmp.eq.s32.totalorder %s14, 2
      %p53 = por %p51, %p52
      %p54 = scmp.ne.s32.totalorder %s43, %s44
      %p55 = scmp.eq.s32.totalorder %s14, 0
      %p56 = por %p54, %p55
      %p57 = scmp.ne.s32.totalorder %s43, %s44
      %p58 = scmp.eq.s32.totalorder %s15, 2
      %p59 = por %p57, %p58
      %p61 = scmp.ne.s32.totalorder %s44, %s60
      %p62 = scmp.eq.s32.totalorder %s15, 0
      %p63 = por %p61, %p62
      %s64 = ssub.s32 %s18, %s27
      %s65 = ssub.s32 %s17, %s31
      %s66 = sor.u32 %s64, %s65
      %p67 = scmp.eq.s32.totalorder %s66, 0
      %s69 = sadd.s32 %s68, 1
      %s70 = scalar_select %p67, %s68, %s69
      %p73 = pneg %p67
      %p74 = scmp.eq.s32.totalorder %s9, 2
      %p75 = por %p73, %p74
      %p76 = scmp.ne.s32.totalorder %s68, %s71
      %p77 = scmp.eq.s32.totalorder %s9, 0
      %p78 = por %p76, %p77
      %p79 = scmp.ne.s32.totalorder %s68, %s71
      %p80 = scmp.eq.s32.totalorder %s14, 2
      %p81 = por %p79, %p80
      %p82 = scmp.ne.s32.totalorder %s71, %s72
      %p83 = scmp.eq.s32.totalorder %s14, 0
      %p84 = por %p82, %p83
      %p85 = scmp.ne.s32.totalorder %s71, %s72
      %p86 = scmp.eq.s32.totalorder %s15, 2
      %p87 = por %p85, %p86
      %p89 = scmp.ne.s32.totalorder %s72, %s88
      %p90 = scmp.eq.s32.totalorder %s15, 0
      %p91 = por %p89, %p90
      %s92 = ssub.s32 %s17, %s31
      %p93 = scmp.eq.s32.totalorder %s92, 0
      %s95 = sadd.s32 %s94, 1
      %s96 = scalar_select %p93, %s94, %s95
      %p99 = pneg %p93
      %p100 = scmp.eq.s32.totalorder %s9, 2
      %p101 = por %p99, %p100
      %p102 = scmp.ne.s32.totalorder %s94, %s97
      %p103 = scmp.eq.s32.totalorder %s9, 0
      %p104 = por %p102, %p103
      %p105 = scmp.ne.s32.totalorder %s94, %s97
      %p106 = scmp.eq.s32.totalorder %s14, 2
      %p107 = por %p105, %p106
      %p108 = scmp.ne.s32.totalorder %s97, %s98
      %p109 = scmp.eq.s32.totalorder %s14, 0
      %p110 = por %p108, %p109
      %p111 = scmp.ne.s32.totalorder %s97, %s98
      %p112 = scmp.eq.s32.totalorder %s15, 2
      %p113 = por %p111, %p112
      %p115 = scmp.ne.s32.totalorder %s98, %s114
      %p116 = scmp.eq.s32.totalorder %s15, 0
      %p117 = por %p115, %p116
      %s118 = ssub.s32 %s16, %s35
      %s119 = ssub.s32 %s17, %s31
      %s120 = sor.u32 %s118, %s119
      %p121 = scmp.eq.s32.totalorder %s120, 0
      %s123 = sadd.s32 %s122, 1
      %s124 = scalar_select %p121, %s122, %s123
      %p127 = pneg %p121
      %p128 = scmp.eq.s32.totalorder %s9, 2
      %p129 = por %p127, %p128
      %p130 = scmp.ne.s32.totalorder %s122, %s125
      %p131 = scmp.eq.s32.totalorder %s9, 0
      %p132 = por %p130, %p131
      %p133 = scmp.ne.s32.totalorder %s122, %s125
      %p134 = scmp.eq.s32.totalorder %s14, 2
      %p135 = por %p133, %p134
      %p136 = scmp.ne.s32.totalorder %s125, %s126
      %p137 = scmp.eq.s32.totalorder %s14, 0
      %p138 = por %p136, %p137
      %p139 = scmp.ne.s32.totalorder %s125, %s126
      %p140 = scmp.eq.s32.totalorder %s15, 2
      %p141 = por %p139, %p140
      %p143 = scmp.ne.s32.totalorder %s126, %s142
      %p144 = scmp.eq.s32.totalorder %s15, 0
      %p145 = por %p143, %p144
      %p146 = scmp.le.s32.totalorder 1, %s9
      %p147 = scmp.lt.s32.totalorder %s9, 4
      %p148 = pnand %p146, %p147
      %p149 = pneg %p148
      // Predicated region
      $region9: #{transformer_forward.13} parent=5 // pred_check
        _
      $region10: #{transformer_forward.13} parent=5 // pred_check_branch
        %151 = sbr.rel (%p148) target = $region12
      $region11: #{transformer_forward.13} parent=5 // pred_region
        %s152 = ssub.s32 %s9, 1
        // Predicated region
        $region13: #{transformer_forward.13} parent=11 // pred_check
          %p153 = pneg %p56
        $region14: #{transformer_forward.13} parent=11 // pred_check_branch
          %155 = sbr.rel (%p153) target = $region16
        $region15: #{transformer_forward.13} parent=11 // pred_region
          %s156 = smul.u32 2, %s19
          %p157 = scmp.lt.s32.totalorder %s156, 1
          %s158 = scalar_select %p157, %s156, 1
          %p159 = scmp.lt.s32.totalorder %s21, 0
          %s160 = scalar_select %p159, %s21, 0
          %s161 = sadd.s32 %s160, %s158
          %s162 = smul.addr %s161, 4
          %s163 = scalar_lea.vmem %s0, %s162
          %s164 = smul.u32 2, %s19
        $region16: #{transformer_forward.13} parent=11 // pred_fallthru
          _
      $region12: #{transformer_forward.13} parent=5 // pred_fallthru
        _
      %p165 = scmp.lt.s32.totalorder %s9, 3
      // Predicated region
      $region17: #{transformer_forward.13} parent=5 // pred_check
        %p166 = pneg %p165
      $region18: #{transformer_forward.13} parent=5 // pred_check_branch
        %168 = sbr.rel (%p166) target = $region20
      $region19: #{transformer_forward.13} parent=5 // pred_region
        // Predicated region
        $region21: #{transformer_forward.13} parent=19 // pred_check
          %p169 = pneg %p78
        $region22: #{transformer_forward.13} parent=19 // pred_check_branch
          %171 = sbr.rel (%p169) target = $region24
        $region23: #{transformer_forward.13} parent=19 // pred_region
          %s172 = sand.u32 %s68, 1
          %s173 = sand.u32 %s68, 1
          %s174 = smul.addr %s173, 64
          %s175 = scalar_lea.vmem [#allocation3], %s174
          %s176 = smul.u32 16, %s18
          %s177 = smul.addr %s176, 3
          %s178 = sadd.s32 %s17, %s177
          %s179 = smul.addr %s178, 4
          %s180 = scalar_lea.vmem %s1, %s179
          // Predicated region
          $region25: #{transformer_forward.13} parent=23 // pred_check
            _
          $region26: #{transformer_forward.13} parent=23 // pred_check_branch
            %182 = sbr.rel (0) target = $region28
          $region27: #{transformer_forward.13} parent=23 // pred_region
            // Predicated region
            $region29: #{transformer_forward.13} parent=27 // pred_check
              _
            $region30: #{transformer_forward.13} parent=27 // pred_check_branch
              %184 = sbr.rel target = $region32
            $region31: #{transformer_forward.13} parent=27 // pred_region
              // Predicated region
              $region44: #{transformer_forward.13} parent=31 // pred_check
                _
              $region45: #{transformer_forward.13} parent=31 // pred_check_branch
                %229 = sbr.rel (0) target = $region47
              $region46: #{transformer_forward.13} parent=31 // pred_region
                loop: start=0, step=1, limit=1
                $region48: #{transformer_forward.13} parent=46 // loop_pre_header
                  _
                $region49: #{transformer_forward.13} parent=46 // loop_header
                  %s231 = sphi 0, %s235
                  %p232 = scmp.ge.s32.totalorder %s231, 1
                  %s236 = sphi %s180, %s180
                  %s237 = sphi %s175, %s175
                $region50: #{transformer_forward.13} parent=46 // loop_header_branch
                  %234 = sbr.rel (%p232) target = $region54
                $region51: #{transformer_forward.13} parent=46 // loop_body
                  _
                $region52: #{transformer_forward.13} parent=46 // loop_footer
                  %s235 = sadd.s32 1, %s231
                $region53: #{transformer_forward.13} parent=46 // loop_footer_branch
                  %230 = sbr.rel target = $region49
                $region54: #{transformer_forward.13} parent=46 // loop_exit
                  _
                loop: start=0, step=1, limit=1
                $region55: #{transformer_forward.13} parent=46 // loop_pre_header
                  _
                $region56: #{transformer_forward.13} parent=46 // loop_header
                  %s240 = sphi 0, %s244
                  %p241 = scmp.ge.s32.totalorder %s240, 1
                  %s245 = sphi %s180, %s180
                  %s246 = sphi %s175, %s175
                $region57: #{transformer_forward.13} parent=46 // loop_header_branch
                  %243 = sbr.rel (%p241) target = $region61
                $region58: #{transformer_forward.13} parent=46 // loop_body
                  %v247 = vld [vmem:[%s245] sm:$0xf]
                  %248 = vst [vmem:[%s246] sm:$0xf] %v247
                  %v249 = vld [vmem:[%s245 + $0xc] sm:$0xf]
                  %250 = vst [vmem:[%s246 + $0x4] sm:$0xf] %v249
                  %v251 = vld [vmem:[%s245 + $0x18] sm:$0xf]
                  %252 = vst [vmem:[%s246 + $0x8] sm:$0xf] %v251
                  %v253 = vld [vmem:[%s245 + $0x24] sm:$0xf]
                  %254 = vst [vmem:[%s246 + $0xc] sm:$0xf] %v253
                  %v255 = vld [vmem:[%s245 + $0x30] sm:$0xf]
                  %256 = vst [vmem:[%s246 + $0x10] sm:$0xf] %v255
                  %v257 = vld [vmem:[%s245 + $0x3c] sm:$0xf]
                  %258 = vst [vmem:[%s246 + $0x14] sm:$0xf] %v257
                  %v259 = vld [vmem:[%s245 + $0x48] sm:$0xf]
                  %260 = vst [vmem:[%s246 + $0x18] sm:$0xf] %v259
                  %v261 = vld [vmem:[%s245 + $0x54] sm:$0xf]
                  %262 = vst [vmem:[%s246 + $0x1c] sm:$0xf] %v261
                  %v263 = vld [vmem:[%s245 + $0x60] sm:$0xf]
                  %264 = vst [vmem:[%s246 + $0x20] sm:$0xf] %v263
                  %v265 = vld [vmem:[%s245 + $0x6c] sm:$0xf]
                  %266 = vst [vmem:[%s246 + $0x24] sm:$0xf] %v265
                  %v267 = vld [vmem:[%s245 + $0x78] sm:$0xf]
                  %268 = vst [vmem:[%s246 + $0x28] sm:$0xf] %v267
                  %v269 = vld [vmem:[%s245 + $0x84] sm:$0xf]
                  %270 = vst [vmem:[%s246 + $0x2c] sm:$0xf] %v269
                  %v271 = vld [vmem:[%s245 + $0x90] sm:$0xf]
                  %272 = vst [vmem:[%s246 + $0x30] sm:$0xf] %v271
                  %v273 = vld [vmem:[%s245 + $0x9c] sm:$0xf]
                  %274 = vst [vmem:[%s246 + $0x34] sm:$0xf] %v273
                  %v275 = vld [vmem:[%s245 + $0xa8] sm:$0xf]
                  %276 = vst [vmem:[%s246 + $0x38] sm:$0xf] %v275
                  %v277 = vld [vmem:[%s245 + $0xb4] sm:$0xf]
                  %278 = vst [vmem:[%s246 + $0x3c] sm:$0xf] %v277
                $region59: #{transformer_forward.13} parent=46 // loop_footer
                  %s244 = sadd.s32 1, %s240
                $region60: #{transformer_forward.13} parent=46 // loop_footer_branch
                  %239 = sbr.rel target = $region56
                $region61: #{transformer_forward.13} parent=46 // loop_exit
                  _
              $region47: #{transformer_forward.13} parent=31 // pred_fallthru
                _
            $region32: #{transformer_forward.13} parent=27 // pred_fallthru
              _
            // Predicated region
            $region33: #{transformer_forward.13} parent=27 // pred_check
              _
            $region34: #{transformer_forward.13} parent=27 // pred_check_branch
              %186 = sbr.rel (0) target = $region36
            $region35: #{transformer_forward.13} parent=27 // pred_region
              loop: start=0, step=1, limit=1
              $region37: #{transformer_forward.13} parent=35 // loop_pre_header
                _
              $region38: #{transformer_forward.13} parent=35 // loop_header
                %s189 = sphi 0, %s193
                %p190 = scmp.ge.s32.totalorder %s189, 1
                %s194 = sphi %s180, %s180
                %s195 = sphi %s175, %s175
              $region39: #{transformer_forward.13} parent=35 // loop_header_branch
                %192 = sbr.rel (%p190) target = $region43
              $region40: #{transformer_forward.13} parent=35 // loop_body
                %v196 = vld [vmem:[%s194] sm:$0xf]
                %197 = vst [vmem:[%s195] sm:$0xf] %v196
                %v198 = vld [vmem:[%s194 + $0xc] sm:$0xf]
                %199 = vst [vmem:[%s195 + $0x4] sm:$0xf] %v198
                %v200 = vld [vmem:[%s194 + $0x18] sm:$0xf]
                %201 = vst [vmem:[%s195 + $0x8] sm:$0xf] %v200
                %v202 = vld [vmem:[%s194 + $0x24] sm:$0xf]
                %203 = vst [vmem:[%s195 + $0xc] sm:$0xf] %v202
                %v204 = vld [vmem:[%s194 + $0x30] sm:$0xf]
                %205 = vst [vmem:[%s195 + $0x10] sm:$0xf] %v204
                %v206 = vld [vmem:[%s194 + $0x3c] sm:$0xf]
                %207 = vst [vmem:[%s195 + $0x14] sm:$0xf] %v206
                %v208 = vld [vmem:[%s194 + $0x48] sm:$0xf]
                %209 = vst [vmem:[%s195 + $0x18] sm:$0xf] %v208
                %v210 = vld [vmem:[%s194 + $0x54] sm:$0xf]
                %211 = vst [vmem:[%s195 + $0x1c] sm:$0xf] %v210
                %v212 = vld [vmem:[%s194 + $0x60] sm:$0xf]
                %213 = vst [vmem:[%s195 + $0x20] sm:$0xf] %v212
                %v214 = vld [vmem:[%s194 + $0x6c] sm:$0xf]
                %215 = vst [vmem:[%s195 + $0x24] sm:$0xf] %v214
                %v216 = vld [vmem:[%s194 + $0x78] sm:$0xf]
                %217 = vst [vmem:[%s195 + $0x28] sm:$0xf] %v216
                %v218 = vld [vmem:[%s194 + $0x84] sm:$0xf]
                %219 = vst [vmem:[%s195 + $0x2c] sm:$0xf] %v218
                %v220 = vld [vmem:[%s194 + $0x90] sm:$0xf]
                %221 = vst [vmem:[%s195 + $0x30] sm:$0xf] %v220
                %v222 = vld [vmem:[%s194 + $0x9c] sm:$0xf]
                %223 = vst [vmem:[%s195 + $0x34] sm:$0xf] %v222
                %v224 = vld [vmem:[%s194 + $0xa8] sm:$0xf]
                %225 = vst [vmem:[%s195 + $0x38] sm:$0xf] %v224
                %v226 = vld [vmem:[%s194 + $0xb4] sm:$0xf]
                %227 = vst [vmem:[%s195 + $0x3c] sm:$0xf] %v226
              $region41: #{transformer_forward.13} parent=35 // loop_footer
                %s193 = sadd.s32 1, %s189
              $region42: #{transformer_forward.13} parent=35 // loop_footer_branch
                %188 = sbr.rel target = $region38
              $region43: #{transformer_forward.13} parent=35 // loop_exit
                _
            $region36: #{transformer_forward.13} parent=27 // pred_fallthru
              _
          $region28: #{transformer_forward.13} parent=23 // pred_fallthru
            _
          %279 = vnop
        $region24: #{transformer_forward.13} parent=19 // pred_fallthru
          _
        // Predicated region
        $region62: #{transformer_forward.13} parent=19 // pred_check
          %p280 = pneg %p104
        $region63: #{transformer_forward.13} parent=19 // pred_check_branch
          %282 = sbr.rel (%p280) target = $region65
        $region64: #{transformer_forward.13} parent=19 // pred_region
          %p283 = scmp.lt.s32.totalorder %s17, 2
          %s284 = scalar_select %p283, %s17, 2
          %s285 = scalar_lea.vmem %s2, %s284
        $region65: #{transformer_forward.13} parent=19 // pred_fallthru
          _
      $region20: #{transformer_forward.13} parent=5 // pred_fallthru
        _
      %p286 = scmp.le.s32.totalorder 1, %s9
      %p287 = scmp.lt.s32.totalorder %s9, 4
      %p288 = pnand %p286, %p287
      %p289 = pneg %p288
      // Predicated region
      $region66: #{transformer_forward.13} parent=5 // pred_check
        _
      $region67: #{transformer_forward.13} parent=5 // pred_check_branch
        %291 = sbr.rel (%p288) target = $region69
      $region68: #{transformer_forward.13} parent=5 // pred_region
        %s292 = ssub.s32 %s9, 1
        %s293 = sand.u32 %s71, 1
        %s294 = sand.u32 %s71, 1
        %s295 = smul.addr %s294, 64
        %s296 = scalar_lea.vmem [#allocation3], %s295
        // Predicated region
        $region70: #{transformer_forward.13} parent=68 // pred_check
          %p297 = pneg %p84
        $region71: #{transformer_forward.13} parent=68 // pred_check_branch
          %299 = sbr.rel (%p297) target = $region73
        $region72: #{transformer_forward.13} parent=68 // pred_region
          _
        $region73: #{transformer_forward.13} parent=68 // pred_fallthru
          _
        %s300 = smul.u32 2, %s19
        %p301 = scmp.lt.s32.totalorder %s300, 1
        %s302 = scalar_select %p301, %s300, 1
        %p303 = scmp.lt.s32.totalorder %s21, 0
        %s304 = scalar_select %p303, %s21, 0
        %s305 = sadd.s32 %s304, %s302
        %s306 = smul.addr %s305, 4
        %s307 = scalar_lea.vmem %s0, %s306
        %p308 = pneg %p56
        %p309 = pneg %p53
        %s310 = sand.u32 %s71, 1
        %s311 = sand.u32 %s71, 1
        %s312 = smul.addr %s311, 64
        %s313 = scalar_lea.vmem [#allocation3], %s312
        %p314 = pneg %p84
        %p315 = pneg %p81
        %p316 = scmp.lt.s32.totalorder %s20, 2
        %s317 = scalar_select %p316, %s20, 2
        %s318 = scalar_lea.vmem %s2, %s317
        %p319 = pneg %p110
        %p320 = pneg %p107
        %p321 = pneg %p138
        %p322 = pneg %p135
        %s323 = sand.u32 %s125, 1
        %s324 = sand.u32 %s125, 1
        %s325 = smul.addr %s324, 8
        %s326 = scalar_lea.vmem [#allocation4], %s325
        %s327 = smul.u32 2, %s19
        %p328 = scmp.lt.s32.totalorder %s327, 1
        %s329 = scalar_select %p328, %s327, 1
        %p330 = scmp.lt.s32.totalorder %s21, 0
        %s331 = scalar_select %p330, %s21, 0
        %s332 = sadd.s32 %s331, %s329
        %s333 = smul.addr %s332, 4
        %s334 = scalar_lea.vmem %s0, %s333
        %s335 = smul.u32 2, %s19
        %s336 = smul.u32 16, %s21
        %p337 = scmp.lt.s32.totalorder %s20, 2
        %s338 = scalar_select %p337, %s20, 2
        %s339 = scalar_lea.vmem %s2, %s338
        %s340 = smul.u32 2, %s19
        %p342 = scmp.eq.s32.totalorder %s21, 0
        // Predicated region
        $region74: #{transformer_forward.13} parent=68 // pred_check
          %p343 = pneg %p342
        $region75: #{transformer_forward.13} parent=68 // pred_check_branch
          %345 = sbr.rel (%p343) target = $region77
        $region76: #{transformer_forward.13} parent=68 // pred_region
          %346 = vst [vmem:[#allocation2] sm:$0xff] 0.0
          %347 = vst [vmem:[#allocation2 + $0x8] sm:$0xff] 0.0
        $region77: #{transformer_forward.13} parent=68 // pred_fallthru
          _
        %v348 = vld [vmem:[#allocation2] sm:$0xff]
        %v349 = vld [vmem:[#allocation2 + $0x8] sm:$0xff]
        %v350 = vld [vmem:[%s334] sm:$0xf]
        %v351 = vld [vmem:[%s334 + $0x4] sm:$0xf]
        %v352 = vld [vmem:[%s296] sm:$0xf]
        %v353 = vld [vmem:[%s296 + $0x4] sm:$0xf]
        %v354 = vld [vmem:[%s296 + $0x8] sm:$0xf]
        %v355 = vld [vmem:[%s296 + $0xc] sm:$0xf]
        %v356 = vld [vmem:[%s296 + $0x10] sm:$0xf]
        %v357 = vld [vmem:[%s296 + $0x14] sm:$0xf]
        %v358 = vld [vmem:[%s296 + $0x18] sm:$0xf]
        %v359 = vld [vmem:[%s296 + $0x1c] sm:$0xf]
        %v360 = vld [vmem:[%s296 + $0x20] sm:$0xf]
        %v361 = vld [vmem:[%s296 + $0x24] sm:$0xf]
        %v362 = vld [vmem:[%s296 + $0x28] sm:$0xf]
        %v363 = vld [vmem:[%s296 + $0x2c] sm:$0xf]
        %v364 = vld [vmem:[%s296 + $0x30] sm:$0xf]
        %v365 = vld [vmem:[%s296 + $0x34] sm:$0xf]
        %v366 = vld [vmem:[%s296 + $0x38] sm:$0xf]
        %v367 = vld [vmem:[%s296 + $0x3c] sm:$0xf]
        %v370 = vunpack.c.l.b16 %v350
        %v371 = vunpack.c.l.b16 %v351
        %v372 = vpack.c.b16 %v371, %v370
        %v390 = vunpack.c.l.b16 %v352
        %v391 = vunpack.c.l.b16 %v353
        %v392 = vunpack.c.l.b16 %v354
        %v393 = vunpack.c.l.b16 %v355
        %v394 = vunpack.c.l.b16 %v356
        %v395 = vunpack.c.l.b16 %v357
        %v396 = vunpack.c.l.b16 %v358
        %v397 = vunpack.c.l.b16 %v359
        %v398 = vunpack.c.l.b16 %v360
        %v399 = vunpack.c.l.b16 %v361
        %v400 = vunpack.c.l.b16 %v362
        %v401 = vunpack.c.l.b16 %v363
        %v402 = vunpack.c.l.b16 %v364
        %v403 = vunpack.c.l.b16 %v365
        %v404 = vunpack.c.l.b16 %v366
        %v405 = vunpack.c.l.b16 %v367
        %v406 = vpack.c.b16 %v391, %v390
        %v407 = vpack.c.b16 %v393, %v392
        %v408 = vpack.c.b16 %v395, %v394
        %v409 = vpack.c.b16 %v397, %v396
        %v410 = vpack.c.b16 %v399, %v398
        %v411 = vpack.c.b16 %v401, %v400
        %v412 = vpack.c.b16 %v403, %v402
        %v413 = vpack.c.b16 %v405, %v404
        %422 = vmatprep.subr.bf16.mxu0 0
        %423 = vmatpush1.bf16.msra.mxu0 %v406
        %424 = vmatprep.subr.bf16.mxu0 0
        %425 = vmatpush1.bf16.msra.mxu0 %v407
        %426 = vmatprep.subr.bf16.mxu0 0
        %427 = vmatpush1.bf16.msra.mxu0 %v408
        %428 = vmatprep.subr.bf16.mxu0 0
        %429 = vmatpush1.bf16.msra.mxu0 %v409
        %430 = vmatprep.subr.bf16.mxu0 0
        %431 = vmatpush1.bf16.msra.mxu0 %v410
        %432 = vmatprep.subr.bf16.mxu0 0
        %433 = vmatpush1.bf16.msra.mxu0 %v411
        %434 = vmatprep.subr.bf16.mxu0 0
        %435 = vmatpush1.bf16.msra.mxu0 %v412
        %436 = vmatprep.subr.bf16.mxu0 0
        %437 = vmatpush1.bf16.msra.mxu0 %v413
        %438 = vmatprep.subr.bf16.mxu0 0
        %439 = vmatpush1.bf16.msra.mxu0 0
        %440 = vmatprep.subr.bf16.mxu0 0
        %441 = vmatpush1.bf16.msra.mxu0 0
        %442 = vmatprep.subr.bf16.mxu0 0
        %443 = vmatpush1.bf16.msra.mxu0 0
        %444 = vmatprep.subr.bf16.mxu0 0
        %445 = vmatpush1.bf16.msra.mxu0 0
        %446 = vmatprep.subr.bf16.mxu0 0
        %447 = vmatpush1.bf16.msra.mxu0 0
        %448 = vmatprep.subr.bf16.mxu0 0
        %449 = vmatpush1.bf16.msra.mxu0 0
        %450 = vmatprep.subr.bf16.mxu0 0
        %451 = vmatpush1.bf16.msra.mxu0 0
        %452 = vmatprep.subr.bf16.mxu0 0
        %453 = vmatpush1.bf16.msra.mxu0 0
        %454 = vmatprep.mubr.bf16.mxu0 0
        %455 = vmatmul.mubr.bf16.gmra.mrb[0].mxu0 %v372
        %v456 = vpop.f32.mrb[0].mxu0
        %v457 = vadd.f32 0.0, %v456
        %v458 = vpop.f32.mrb[0].mxu0
        %v459 = vpop.f32.mrb[0].mxu0
        %v460 = vadd.f32 0.0, %v459
        %v461 = vpop.f32.mrb[0].mxu0
        %462 = vdwg.mxu0
        %v463 = vadd.f32 %v348, %v457
        %v464 = vadd.f32 %v349, %v460
        %465 = vst [vmem:[#allocation2] sm:$0xff] %v463
        %466 = vst [vmem:[#allocation2 + $0x8] sm:$0xff] %v464
        // Predicated region
        $region78: #{transformer_forward.13} parent=68 // pred_check
          %p467 = pneg %p342
        $region79: #{transformer_forward.13} parent=68 // pred_check_branch
          %469 = sbr.rel (%p467) target = $region81
        $region80: #{transformer_forward.13} parent=68 // pred_region
          %v470 = vld [vmem:[#allocation2] sm:$0xff]
          %v471 = vld [vmem:[#allocation2 + $0x8] sm:$0xff]
          %v472 = vld [vmem:[%s339] sm:$0x1]
          %v474 = vlaneseq
          %v475 = vshrl.u32 %v474, 7
          %v476 = vsub.s32 0, %v475
          %v477 = vrot.slane %v472, %v476
          %v479 = vadd.f32 %v470, %v477
          %v480 = vadd.f32 %v471, %v477
          %v481 = vpack.c.bf16 %v480, %v479
          %v483 = vunpack.c.l.b16 %v481
          %v484 = vunpack.c.h.b16 %v481
          %v485 = vpack.c.b16 %v483, %v483
          %v486 = vpack.c.b16 %v484, %v484
          %489 = vst [vmem:[%s326] sm:$0xf] %v485
          %490 = vst [vmem:[%s326 + $0x4] sm:$0xf] %v486
        $region81: #{transformer_forward.13} parent=68 // pred_fallthru
          _
        %s491 = sand.u32 %s125, 1
        %s492 = sand.u32 %s125, 1
        %s493 = smul.addr %s492, 8
        %s494 = scalar_lea.vmem [#allocation4], %s493
        // Predicated region
        $region82: #{transformer_forward.13} parent=68 // pred_check
          %p495 = pneg %p135
        $region83: #{transformer_forward.13} parent=68 // pred_check_branch
          %497 = sbr.rel (%p495) target = $region85
        $region84: #{transformer_forward.13} parent=68 // pred_region
          %s498 = smul.u32 2, %s19
          %s499 = smul.addr %s498, 3
          %s500 = sadd.s32 %s20, %s499
          %s501 = smul.addr %s500, 4
          %s502 = scalar_lea.vmem %s3, %s501
          // Predicated region
          $region86: #{transformer_forward.13} parent=84 // pred_check
            _
          $region87: #{transformer_forward.13} parent=84 // pred_check_branch
            %504 = sbr.rel (0) target = $region89
          $region88: #{transformer_forward.13} parent=84 // pred_region
            // Predicated region
            $region90: #{transformer_forward.13} parent=88 // pred_check
              _
            $region91: #{transformer_forward.13} parent=88 // pred_check_branch
              %506 = sbr.rel target = $region93
            $region92: #{transformer_forward.13} parent=88 // pred_region
              // Predicated region
              $region105: #{transformer_forward.13} parent=92 // pred_check
                _
              $region106: #{transformer_forward.13} parent=92 // pred_check_branch
                %523 = sbr.rel (0) target = $region108
              $region107: #{transformer_forward.13} parent=92 // pred_region
                loop: start=0, step=1, limit=1
                $region109: #{transformer_forward.13} parent=107 // loop_pre_header
                  _
                $region110: #{transformer_forward.13} parent=107 // loop_header
                  %s525 = sphi 0, %s529
                  %p526 = scmp.ge.s32.totalorder %s525, 1
                  %s530 = sphi %s494, %s494
                  %s531 = sphi %s502, %s502
                $region111: #{transformer_forward.13} parent=107 // loop_header_branch
                  %528 = sbr.rel (%p526) target = $region115
                $region112: #{transformer_forward.13} parent=107 // loop_body
                  _
                $region113: #{transformer_forward.13} parent=107 // loop_footer
                  %s529 = sadd.s32 1, %s525
                $region114: #{transformer_forward.13} parent=107 // loop_footer_branch
                  %524 = sbr.rel target = $region110
                $region115: #{transformer_forward.13} parent=107 // loop_exit
                  _
                loop: start=0, step=1, limit=1
                $region116: #{transformer_forward.13} parent=107 // loop_pre_header
                  _
                $region117: #{transformer_forward.13} parent=107 // loop_header
                  %s534 = sphi 0, %s538
                  %p535 = scmp.ge.s32.totalorder %s534, 1
                  %s539 = sphi %s494, %s494
                  %s540 = sphi %s502, %s502
                $region118: #{transformer_forward.13} parent=107 // loop_header_branch
                  %537 = sbr.rel (%p535) target = $region122
                $region119: #{transformer_forward.13} parent=107 // loop_body
                  %v541 = vld [vmem:[%s539] sm:$0xf]
                  %542 = vst [vmem:[%s540] sm:$0xf] %v541
                  %v543 = vld [vmem:[%s539 + $0x4] sm:$0xf]
                  %544 = vst [vmem:[%s540 + $0xc] sm:$0xf] %v543
                $region120: #{transformer_forward.13} parent=107 // loop_footer
                  %s538 = sadd.s32 1, %s534
                $region121: #{transformer_forward.13} parent=107 // loop_footer_branch
                  %533 = sbr.rel target = $region117
                $region122: #{transformer_forward.13} parent=107 // loop_exit
                  _
              $region108: #{transformer_forward.13} parent=92 // pred_fallthru
                _
            $region93: #{transformer_forward.13} parent=88 // pred_fallthru
              _
            // Predicated region
            $region94: #{transformer_forward.13} parent=88 // pred_check
              _
            $region95: #{transformer_forward.13} parent=88 // pred_check_branch
              %508 = sbr.rel (0) target = $region97
            $region96: #{transformer_forward.13} parent=88 // pred_region
              loop: start=0, step=1, limit=1
              $region98: #{transformer_forward.13} parent=96 // loop_pre_header
                _
              $region99: #{transformer_forward.13} parent=96 // loop_header
                %s511 = sphi 0, %s515
                %p512 = scmp.ge.s32.totalorder %s511, 1
                %s516 = sphi %s494, %s494
                %s517 = sphi %s502, %s502
              $region100: #{transformer_forward.13} parent=96 // loop_header_branch
                %514 = sbr.rel (%p512) target = $region104
              $region101: #{transformer_forward.13} parent=96 // loop_body
                %v518 = vld [vmem:[%s516] sm:$0xf]
                %519 = vst [vmem:[%s517] sm:$0xf] %v518
                %v520 = vld [vmem:[%s516 + $0x4] sm:$0xf]
                %521 = vst [vmem:[%s517 + $0xc] sm:$0xf] %v520
              $region102: #{transformer_forward.13} parent=96 // loop_footer
                %s515 = sadd.s32 1, %s511
              $region103: #{transformer_forward.13} parent=96 // loop_footer_branch
                %510 = sbr.rel target = $region99
              $region104: #{transformer_forward.13} parent=96 // loop_exit
                _
            $region97: #{transformer_forward.13} parent=88 // pred_fallthru
              _
          $region89: #{transformer_forward.13} parent=84 // pred_fallthru
            _
          %545 = vnop
        $region85: #{transformer_forward.13} parent=68 // pred_fallthru
          _
      $region69: #{transformer_forward.13} parent=5 // pred_fallthru
        _
      %p546 = scmp.le.s32.totalorder 2, %s9
      // Predicated region
      $region123: #{transformer_forward.13} parent=5 // pred_check
        %p547 = pneg %p546
      $region124: #{transformer_forward.13} parent=5 // pred_check_branch
        %549 = sbr.rel (%p547) target = $region126
      $region125: #{transformer_forward.13} parent=5 // pred_region
        %s550 = ssub.s32 %s9, 2
        // Predicated region
        $region127: #{transformer_forward.13} parent=125 // pred_check
          %p551 = pneg %p141
        $region128: #{transformer_forward.13} parent=125 // pred_check_branch
          %553 = sbr.rel (%p551) target = $region130
        $region129: #{transformer_forward.13} parent=125 // pred_region
          %s554 = sand.u32 %s126, 1
          %s555 = sand.u32 %s126, 1
          %s556 = smul.addr %s555, 8
          %s557 = scalar_lea.vmem [#allocation4], %s556
        $region130: #{transformer_forward.13} parent=125 // pred_fallthru
          _
      $region126: #{transformer_forward.13} parent=5 // pred_fallthru
        _
    $region6: #{transformer_forward.13} parent=1 // loop_footer
      %s13 = sadd.s32 1, %s9
    $region7: #{transformer_forward.13} parent=1 // loop_footer_branch
      %8 = sbr.rel target = $region3
    $region8: #{transformer_forward.13} parent=1 // loop_exit
      _

// kernel: transformer_forward.14
$region0: #{transformer_forward.14}
  #allocation0 [shape = 'u32[]', space=smem, size = 0x4, offset = 0x4, fixed_abs, tag = 'smem constant byte address 0x4 - core index']
  #allocation1 [shape = 'u32[144,128]{1,0:T(1,128)}', space=vmem, size = 0x12000, scoped, tag = 'internal scratch']
  #allocation2 [shape = 'f32[4,8,1]{2,1,0:T(8,128)}', space=vmem, size = 0x4000, scoped, tag = 'scratch operand']
  #allocation3 [shape = 'f32[4,8,1]{2,1,0:T(8,128)}', space=vmem, size = 0x4000, scoped, tag = 'scratch operand']
  #allocation4 [shape = 'f32[4,8,32]{2,1,0:T(8,128)}', space=vmem, size = 0x4000, scoped, tag = 'scratch operand']
  #allocation5 [shape = 's32[1]{0}', space=sflag, size = 0x4, scoped, tag = 'scoped memory for transformer_forward.14']
  #allocation6 [shape = 'u8[1024]{0}', space=smem, size = 0x400, scoped, tag = 'prefetched SMEM operand 0']
  %s0 = inlined_call_operand.vmem [shape: s32[2,1], index: 0, kind: input, shape index: {}]
  %s1 = inlined_call_operand.vmem [shape: bf16[2,8,384], index: 1, kind: input, shape index: {}, may-alias: {1,2,3}]
  %s2 = inlined_call_operand.vmem [shape: bf16[2,8,384], index: 2, kind: input, shape index: {}, may-alias: {1,2,3}]
  %s3 = inlined_call_operand.vmem [shape: bf16[2,8,384], index: 3, kind: input, shape index: {}, may-alias: {1,2,3}]
  %s4 = inlined_call_operand.vmem [shape: f32[2,1,8], index: 4, kind: input, shape index: {}]
  %s5 = inlined_call_operand.vmem [shape: bf16[2,8,128], index: 5, kind: output, shape index: {}]
  %s6 = sld [smem:[#allocation0]]
  $region61: #{transformer_forward.14} parent=0
    _
  %s8 = ssub.s32 1, %s6
  %s9 = scalar_select 0, %s8, %s6
  %s10 = sshll.u32 %s0, 4
  %s11 = int_to_ptr.vmem [resolvable:$true] %s10
  %13 = dma.vmem_to_smem %s11, 32, [#allocation6], [#allocation5]
  %14 = dma.done [#allocation5], 32
  %15 = sfence
  loop: start=0, step=1, limit=4
  $region2: #{transformer_forward.14} parent=0 // loop_pre_header
    _
  $region3: #{transformer_forward.14} parent=0 // loop_header
    %s17 = sphi 0, %s21
    %p18 = scmp.ge.s32.totalorder %s17, 4
    %s24 = sphi 0, %s43
    %s25 = sphi 0, %s39
    %s26 = sphi 0, %s35
    %s27 = sphi 0, %s24
    %s28 = sphi 0, %s25
    %s29 = sphi 0, %s26
    %s30 = sphi 0, %s27
    %s31 = sphi 0, %s28
    %s32 = sphi 0, %s29
    %s48 = sphi 0, %s50
    %s51 = sphi 0, %s48
    %s52 = sphi 0, %s51
    %s68 = sphi 0, %s52
    %s76 = sphi 0, %s78
    %s79 = sphi 0, %s76
    %s80 = sphi 0, %s79
    %s96 = sphi 0, %s80
    %s104 = sphi 0, %s106
    %s107 = sphi 0, %s104
    %s108 = sphi 0, %s107
    %s124 = sphi 0, %s108
    %s132 = sphi 0, %s134
    %s135 = sphi 0, %s132
    %s136 = sphi 0, %s135
    %s152 = sphi 0, %s136
    %s160 = sphi 0, %s162
    %s163 = sphi 0, %s160
    %s164 = sphi 0, %s163
    %s180 = sphi 0, %s164
  $region4: #{transformer_forward.14} parent=0 // loop_header_branch
    %20 = sbr.rel (%p18) target = $region8
  $region5: #{transformer_forward.14} parent=0 // loop_body
    %s22 = ssub.s32 %s17, 1
    %s23 = ssub.s32 %s17, 2
    %s33 = sadd.s32 1, %s26
    %p34 = scmp.ge.s32.totalorder %s33, 1
    %s35 = scalar_select %p34, 0, %s33
    %s36 = sadd.s32 1, %s25
    %s37 = scalar_select %p34, %s36, %s25
    %p38 = scmp.ge.s32.totalorder %s37, 1
    %s39 = scalar_select %p38, 0, %s37
    %s40 = sadd.s32 1, %s24
    %s41 = scalar_select %p38, %s40, %s24
    %p42 = scmp.ge.s32.totalorder %s41, 2
    %s43 = scalar_select %p42, 0, %s41
    %s44 = ssub.s32 %s24, %s43
    %s45 = ssub.s32 %s25, %s39
    %s46 = sor.u32 %s44, %s45
    %p47 = scmp.eq.s32.totalorder %s46, 0
    %s49 = sadd.s32 %s48, 1
    %s50 = scalar_select %p47, %s48, %s49
    %p53 = pneg %p47
    %p54 = scmp.eq.s32.totalorder %s17, 1
    %p55 = por %p53, %p54
    %p56 = scmp.ne.s32.totalorder %s48, %s51
    %p57 = scmp.eq.s32.totalorder %s17, 0
    %p58 = por %p56, %p57
    %p59 = scmp.ne.s32.totalorder %s48, %s51
    %p60 = scmp.eq.s32.totalorder %s22, 1
    %p61 = por %p59, %p60
    %p62 = scmp.ne.s32.totalorder %s51, %s52
    %p63 = scmp.eq.s32.totalorder %s22, 0
    %p64 = por %p62, %p63
    %p65 = scmp.ne.s32.totalorder %s51, %s52
    %p66 = scmp.eq.s32.totalorder %s23, 1
    %p67 = por %p65, %p66
    %p69 = scmp.ne.s32.totalorder %s52, %s68
    %p70 = scmp.eq.s32.totalorder %s23, 0
    %p71 = por %p69, %p70
    %s72 = ssub.s32 %s24, %s43
    %s73 = ssub.s32 %s26, %s35
    %s74 = sor.u32 %s72, %s73
    %p75 = scmp.eq.s32.totalorder %s74, 0
    %s77 = sadd.s32 %s76, 1
    %s78 = scalar_select %p75, %s76, %s77
    %p81 = pneg %p75
    %p82 = scmp.eq.s32.totalorder %s17, 1
    %p83 = por %p81, %p82
    %p84 = scmp.ne.s32.totalorder %s76, %s79
    %p85 = scmp.eq.s32.totalorder %s17, 0
    %p86 = por %p84, %p85
    %p87 = scmp.ne.s32.totalorder %s76, %s79
    %p88 = scmp.eq.s32.totalorder %s22, 1
    %p89 = por %p87, %p88
    %p90 = scmp.ne.s32.totalorder %s79, %s80
    %p91 = scmp.eq.s32.totalorder %s22, 0
    %p92 = por %p90, %p91
    %p93 = scmp.ne.s32.totalorder %s79, %s80
    %p94 = scmp.eq.s32.totalorder %s23, 1
    %p95 = por %p93, %p94
    %p97 = scmp.ne.s32.totalorder %s80, %s96
    %p98 = scmp.eq.s32.totalorder %s23, 0
    %p99 = por %p97, %p98
    %s100 = ssub.s32 %s24, %s43
    %s101 = ssub.s32 %s26, %s35
    %s102 = sor.u32 %s100, %s101
    %p103 = scmp.eq.s32.totalorder %s102, 0
    %s105 = sadd.s32 %s104, 1
    %s106 = scalar_select %p103, %s104, %s105
    %p109 = pneg %p103
    %p110 = scmp.eq.s32.totalorder %s17, 1
    %p111 = por %p109, %p110
    %p112 = scmp.ne.s32.totalorder %s104, %s107
    %p113 = scmp.eq.s32.totalorder %s17, 0
    %p114 = por %p112, %p113
    %p115 = scmp.ne.s32.totalorder %s104, %s107
    %p116 = scmp.eq.s32.totalorder %s22, 1
    %p117 = por %p115, %p116
    %p118 = scmp.ne.s32.totalorder %s107, %s108
    %p119 = scmp.eq.s32.totalorder %s22, 0
    %p120 = por %p118, %p119
    %p121 = scmp.ne.s32.totalorder %s107, %s108
    %p122 = scmp.eq.s32.totalorder %s23, 1
    %p123 = por %p121, %p122
    %p125 = scmp.ne.s32.totalorder %s108, %s124
    %p126 = scmp.eq.s32.totalorder %s23, 0
    %p127 = por %p125, %p126
    %s128 = ssub.s32 %s24, %s43
    %s129 = ssub.s32 %s26, %s35
    %s130 = sor.u32 %s128, %s129
    %p131 = scmp.eq.s32.totalorder %s130, 0
    %s133 = sadd.s32 %s132, 1
    %s134 = scalar_select %p131, %s132, %s133
    %p137 = pneg %p131
    %p138 = scmp.eq.s32.totalorder %s17, 1
    %p139 = por %p137, %p138
    %p140 = scmp.ne.s32.totalorder %s132, %s135
    %p141 = scmp.eq.s32.totalorder %s17, 0
    %p142 = por %p140, %p141
    %p143 = scmp.ne.s32.totalorder %s132, %s135
    %p144 = scmp.eq.s32.totalorder %s22, 1
    %p145 = por %p143, %p144
    %p146 = scmp.ne.s32.totalorder %s135, %s136
    %p147 = scmp.eq.s32.totalorder %s22, 0
    %p148 = por %p146, %p147
    %p149 = scmp.ne.s32.totalorder %s135, %s136
    %p150 = scmp.eq.s32.totalorder %s23, 1
    %p151 = por %p149, %p150
    %p153 = scmp.ne.s32.totalorder %s136, %s152
    %p154 = scmp.eq.s32.totalorder %s23, 0
    %p155 = por %p153, %p154
    %s156 = ssub.s32 %s24, %s43
    %s157 = ssub.s32 %s25, %s39
    %s158 = sor.u32 %s156, %s157
    %p159 = scmp.eq.s32.totalorder %s158, 0
    %s161 = sadd.s32 %s160, 1
    %s162 = scalar_select %p159, %s160, %s161
    %p165 = pneg %p159
    %p166 = scmp.eq.s32.totalorder %s17, 1
    %p167 = por %p165, %p166
    %p168 = scmp.ne.s32.totalorder %s160, %s163
    %p169 = scmp.eq.s32.totalorder %s17, 0
    %p170 = por %p168, %p169
    %p171 = scmp.ne.s32.totalorder %s160, %s163
    %p172 = scmp.eq.s32.totalorder %s22, 1
    %p173 = por %p171, %p172
    %p174 = scmp.ne.s32.totalorder %s163, %s164
    %p175 = scmp.eq.s32.totalorder %s22, 0
    %p176 = por %p174, %p175
    %p177 = scmp.ne.s32.totalorder %s163, %s164
    %p178 = scmp.eq.s32.totalorder %s23, 1
    %p179 = por %p177, %p178
    %p181 = scmp.ne.s32.totalorder %s164, %s180
    %p182 = scmp.eq.s32.totalorder %s23, 0
    %p183 = por %p181, %p182
    %p184 = scmp.le.s32.totalorder 1, %s17
    %p185 = scmp.lt.s32.totalorder %s17, 3
    %p186 = pnand %p184, %p185
    %p187 = pneg %p186
    // Predicated region
    $region9: #{transformer_forward.14} parent=5 // pred_check
      _
    $region10: #{transformer_forward.14} parent=5 // pred_check_branch
      %189 = sbr.rel (%p186) target = $region12
    $region11: #{transformer_forward.14} parent=5 // pred_region
      %s190 = ssub.s32 %s17, 1
    $region12: #{transformer_forward.14} parent=5 // pred_fallthru
      _
    %p191 = scmp.lt.s32.totalorder %s17, 2
    // Predicated region
    $region13: #{transformer_forward.14} parent=5 // pred_check
      %p192 = pneg %p191
    $region14: #{transformer_forward.14} parent=5 // pred_check_branch
      %194 = sbr.rel (%p192) target = $region16
    $region15: #{transformer_forward.14} parent=5 // pred_region
      // Predicated region
      $region17: #{transformer_forward.14} parent=15 // pred_check
        %p195 = pneg %p58
      $region18: #{transformer_forward.14} parent=15 // pred_check_branch
        %197 = sbr.rel (%p195) target = $region20
      $region19: #{transformer_forward.14} parent=15 // pred_region
        %p198 = scmp.lt.s32.totalorder %s24, 1
        %s199 = scalar_select %p198, %s24, 1
        %p200 = scmp.lt.s32.totalorder %s25, 0
        %s201 = scalar_select %p200, %s25, 0
        %s202 = smul.addr %s201, 3
        %s203 = smul.addr %s199, 3
        %s204 = sadd.s32 %s202, %s203
        %s205 = smul.addr %s204, 4
        %s206 = scalar_lea.vmem %s1, %s205
      $region20: #{transformer_forward.14} parent=15 // pred_fallthru
        _
      // Predicated region
      $region21: #{transformer_forward.14} parent=15 // pred_check
        %p207 = pneg %p86
      $region22: #{transformer_forward.14} parent=15 // pred_check_branch
        %209 = sbr.rel (%p207) target = $region24
      $region23: #{transformer_forward.14} parent=15 // pred_region
        %p210 = scmp.lt.s32.totalorder %s24, 1
        %s211 = scalar_select %p210, %s24, 1
        %p212 = scmp.lt.s32.totalorder %s26, 0
        %s213 = scalar_select %p212, %s26, 0
        %s214 = smul.addr %s213, 3
        %s215 = sadd.s32 1, %s214
        %s216 = smul.addr %s211, 3
        %s217 = sadd.s32 %s215, %s216
        %s218 = smul.addr %s217, 4
        %s219 = scalar_lea.vmem %s2, %s218
      $region24: #{transformer_forward.14} parent=15 // pred_fallthru
        _
      // Predicated region
      $region25: #{transformer_forward.14} parent=15 // pred_check
        %p220 = pneg %p114
      $region26: #{transformer_forward.14} parent=15 // pred_check_branch
        %222 = sbr.rel (%p220) target = $region28
      $region27: #{transformer_forward.14} parent=15 // pred_region
        %p223 = scmp.lt.s32.totalorder %s24, 1
        %s224 = scalar_select %p223, %s24, 1
        %p225 = scmp.lt.s32.totalorder %s26, 0
        %s226 = scalar_select %p225, %s26, 0
        %s227 = smul.addr %s226, 3
        %s228 = sadd.s32 2, %s227
        %s229 = smul.addr %s224, 3
        %s230 = sadd.s32 %s228, %s229
        %s231 = smul.addr %s230, 4
        %s232 = scalar_lea.vmem %s3, %s231
      $region28: #{transformer_forward.14} parent=15 // pred_fallthru
        _
      // Predicated region
      $region29: #{transformer_forward.14} parent=15 // pred_check
        %p233 = pneg %p142
      $region30: #{transformer_forward.14} parent=15 // pred_check_branch
        %235 = sbr.rel (%p233) target = $region32
      $region31: #{transformer_forward.14} parent=15 // pred_region
        %p236 = scmp.lt.s32.totalorder %s24, 1
        %s237 = scalar_select %p236, %s24, 1
        %p238 = scmp.lt.s32.totalorder %s26, 0
        %s239 = scalar_select %p238, %s26, 0
        %s240 = sadd.s32 %s239, %s237
        %s241 = scalar_lea.vmem %s4, %s240
      $region32: #{transformer_forward.14} parent=15 // pred_fallthru
        _
    $region16: #{transformer_forward.14} parent=5 // pred_fallthru
      _
    %p242 = scmp.le.s32.totalorder 1, %s17
    %p243 = scmp.lt.s32.totalorder %s17, 3
    %p244 = pnand %p242, %p243
    %p245 = pneg %p244
    // Predicated region
    $region33: #{transformer_forward.14} parent=5 // pred_check
      _
    $region34: #{transformer_forward.14} parent=5 // pred_check_branch
      %247 = sbr.rel (%p244) target = $region36
    $region35: #{transformer_forward.14} parent=5 // pred_region
      %s248 = ssub.s32 %s17, 1
      %p249 = scmp.lt.s32.totalorder %s27, 1
      %s250 = scalar_select %p249, %s27, 1
      %p251 = scmp.lt.s32.totalorder %s28, 0
      %s252 = scalar_select %p251, %s28, 0
      %s253 = smul.addr %s252, 3
      %s254 = smul.addr %s250, 3
      %s255 = sadd.s32 %s253, %s254
      %s256 = smul.addr %s255, 4
      %s257 = scalar_lea.vmem %s1, %s256
      %p258 = pneg %p64
      %p259 = pneg %p61
      %p260 = scmp.lt.s32.totalorder %s27, 1
      %s261 = scalar_select %p260, %s27, 1
      %p262 = scmp.lt.s32.totalorder %s29, 0
      %s263 = scalar_select %p262, %s29, 0
      %s264 = smul.addr %s263, 3
      %s265 = sadd.s32 1, %s264
      %s266 = smul.addr %s261, 3
      %s267 = sadd.s32 %s265, %s266
      %s268 = smul.addr %s267, 4
      %s269 = scalar_lea.vmem %s2, %s268
      %p270 = pneg %p92
      %p271 = pneg %p89
      %p272 = scmp.lt.s32.totalorder %s27, 1
      %s273 = scalar_select %p272, %s27, 1
      %p274 = scmp.lt.s32.totalorder %s29, 0
      %s275 = scalar_select %p274, %s29, 0
      %s276 = smul.addr %s275, 3
      %s277 = sadd.s32 2, %s276
      %s278 = smul.addr %s273, 3
      %s279 = sadd.s32 %s277, %s278
      %s280 = smul.addr %s279, 4
      %s281 = scalar_lea.vmem %s3, %s280
      %p282 = pneg %p120
      %p283 = pneg %p117
      %p284 = scmp.lt.s32.totalorder %s27, 1
      %s285 = scalar_select %p284, %s27, 1
      %p286 = scmp.lt.s32.totalorder %s29, 0
      %s287 = scalar_select %p286, %s29, 0
      %s288 = sadd.s32 %s287, %s285
      %s289 = scalar_lea.vmem %s4, %s288
      %p290 = pneg %p148
      %p291 = pneg %p145
      %p292 = pneg %p176
      %p293 = pneg %p173
      %p294 = scmp.lt.s32.totalorder %s27, 1
      %s295 = scalar_select %p294, %s27, 1
      %p296 = scmp.lt.s32.totalorder %s28, 0
      %s297 = scalar_select %p296, %s28, 0
      %s298 = sadd.s32 %s297, %s295
      %s299 = smul.addr %s298, 4
      %s300 = scalar_lea.vmem %s5, %s299
      %p301 = scmp.lt.s32.totalorder %s27, 1
      %s302 = scalar_select %p301, %s27, 1
      %p303 = scmp.lt.s32.totalorder %s28, 0
      %s304 = scalar_select %p303, %s28, 0
      %s305 = smul.addr %s304, 3
      %s306 = smul.addr %s302, 3
      %s307 = sadd.s32 %s305, %s306
      %s308 = smul.addr %s307, 4
      %s309 = scalar_lea.vmem %s1, %s308
      %p310 = scmp.lt.s32.totalorder %s27, 1
      %s311 = scalar_select %p310, %s27, 1
      %p312 = scmp.lt.s32.totalorder %s29, 0
      %s313 = scalar_select %p312, %s29, 0
      %s314 = smul.addr %s313, 3
      %s315 = sadd.s32 1, %s314
      %s316 = smul.addr %s311, 3
      %s317 = sadd.s32 %s315, %s316
      %s318 = smul.addr %s317, 4
      %s319 = scalar_lea.vmem %s2, %s318
      %p320 = scmp.lt.s32.totalorder %s27, 1
      %s321 = scalar_select %p320, %s27, 1
      %p322 = scmp.lt.s32.totalorder %s29, 0
      %s323 = scalar_select %p322, %s29, 0
      %s324 = smul.addr %s323, 3
      %s325 = sadd.s32 2, %s324
      %s326 = smul.addr %s321, 3
      %s327 = sadd.s32 %s325, %s326
      %s328 = smul.addr %s327, 4
      %s329 = scalar_lea.vmem %s3, %s328
      %p330 = scmp.lt.s32.totalorder %s27, 1
      %s331 = scalar_select %p330, %s27, 1
      %p332 = scmp.lt.s32.totalorder %s29, 0
      %s333 = scalar_select %p332, %s29, 0
      %s334 = sadd.s32 %s333, %s331
      %s335 = scalar_lea.vmem %s4, %s334
      %p336 = scmp.lt.s32.totalorder %s27, 1
      %s337 = scalar_select %p336, %s27, 1
      %p338 = scmp.lt.s32.totalorder %s28, 0
      %s339 = scalar_select %p338, %s28, 0
      %s340 = sadd.s32 %s339, %s337
      %s341 = smul.addr %s340, 4
      %s342 = scalar_lea.vmem %s5, %s341
      %p345 = scmp.eq.s32.totalorder %s29, 0
      // Predicated region
      $region37: #{transformer_forward.14} parent=35 // pred_check
        %p346 = pneg %p345
      $region38: #{transformer_forward.14} parent=35 // pred_check_branch
        %348 = sbr.rel (%p346) target = $region40
      $region39: #{transformer_forward.14} parent=35 // pred_region
        %vm349 = vcmask 7168
        %350 = vst.msk [vmem:[#allocation2] sm:$0xff] %vm349, -inf
        %351 = vst.msk [vmem:[#allocation2 + $0x8] sm:$0xff] %vm349, -inf
        %352 = vst.msk [vmem:[#allocation2 + $0x10] sm:$0xff] %vm349, -inf
        %353 = vst.msk [vmem:[#allocation2 + $0x18] sm:$0xff] %vm349, -inf
        %354 = vst.msk [vmem:[#allocation3] sm:$0xff] %vm349, 0.0
        %355 = vst.msk [vmem:[#allocation3 + $0x8] sm:$0xff] %vm349, 0.0
        %356 = vst.msk [vmem:[#allocation3 + $0x10] sm:$0xff] %vm349, 0.0
        %357 = vst.msk [vmem:[#allocation3 + $0x18] sm:$0xff] %vm349, 0.0
        %vm358 = vcmask 261120
        %359 = vst.msk [vmem:[#allocation4] sm:$0xff] %vm358, 0.0
        %360 = vst.msk [vmem:[#allocation4 + $0x8] sm:$0xff] %vm358, 0.0
        %361 = vst.msk [vmem:[#allocation4 + $0x10] sm:$0xff] %vm358, 0.0
        %362 = vst.msk [vmem:[#allocation4 + $0x18] sm:$0xff] %vm358, 0.0
      $region40: #{transformer_forward.14} parent=35 // pred_fallthru
        _
      %s363 = sshra.s32 %s29, 7
      %s364 = sand.u32 %s29, 127
      %s365 = sadd.s32 %s363, %s27
      %s366 = smul.u32 %s365, 128
      %s367 = sshra.s32 %s29, 7
      %s368 = sand.u32 %s29, 127
      %s369 = sadd.s32 %s366, %s368
      %s370 = sld [smem:[#allocation6 + %s369]]
      %p371 = scmp.gt.s32.totalorder %s370, 0
      // Predicated region
      $region41: #{transformer_forward.14} parent=35 // pred_check
        %p372 = pneg %p371
      $region42: #{transformer_forward.14} parent=35 // pred_check_branch
        %374 = sbr.rel (%p372) target = $region44
      $region43: #{transformer_forward.14} parent=35 // pred_region
        %v375 = vld [vmem:[%s309] sm:$0xf]
        %v376 = vld [vmem:[%s319] sm:$0xf]
        %v377 = vld [vmem:[%s329] sm:$0xf]
        %v378 = vld [vmem:[%s335] sm:$0x1]
        %v379 = vmul.bf16 %v375, 1043676725
        %v381 = vlaneseq
        %v382 = vshrl.u32 %v381, 7
        %v383 = vsub.s32 0, %v382
        %v384 = vrot.slane %v378, %v383
        %vm386 = vcmask 261120
        %v388 = vsel %vm386, %v379, 0
        %v391 = vsel %vm386, %v376, 0
        %393 = vmatprep.subr.bf16.mxu0 0
        %394 = vmatpush1.bf16.xpose.msra.mxu0 %v391
        %395 = vmatprep.subr.bf16.mxu0 0
        %396 = vmatpush1.bf16.xpose.msra.mxu0 0
        %397 = vmatprep.subr.bf16.mxu0 0
        %398 = vmatpush1.bf16.xpose.msra.mxu0 0
        %399 = vmatprep.subr.bf16.mxu0 0
        %400 = vmatpush1.bf16.xpose.msra.mxu0 0
        %401 = vmatprep.subr.bf16.mxu0 0
        %402 = vmatpush1.bf16.xpose.msra.mxu0 0
        %403 = vmatprep.subr.bf16.mxu0 0
        %404 = vmatpush1.bf16.xpose.msra.mxu0 0
        %405 = vmatprep.subr.bf16.mxu0 0
        %406 = vmatpush1.bf16.xpose.msra.mxu0 0
        %407 = vmatprep.subr.bf16.mxu0 0
        %408 = vmatpush1.bf16.xpose.msra.mxu0 0
        %409 = vmatprep.subr.bf16.mxu0 0
        %410 = vmatpush1.bf16.xpose.msra.mxu0 0
        %411 = vmatprep.subr.bf16.mxu0 0
        %412 = vmatpush1.bf16.xpose.msra.mxu0 0
        %413 = vmatprep.subr.bf16.mxu0 0
        %414 = vmatpush1.bf16.xpose.msra.mxu0 0
        %415 = vmatprep.subr.bf16.mxu0 0
        %416 = vmatpush1.bf16.xpose.msra.mxu0 0
        %417 = vmatprep.subr.bf16.mxu0 0
        %418 = vmatpush1.bf16.xpose.msra.mxu0 0
        %419 = vmatprep.subr.bf16.mxu0 0
        %420 = vmatpush1.bf16.xpose.msra.mxu0 0
        %421 = vmatprep.subr.bf16.mxu0 0
        %422 = vmatpush1.bf16.xpose.msra.mxu0 0
        %423 = vmatprep.subr.bf16.mxu0 0
        %424 = vmatpush1.bf16.xpose.msra.mxu0 0
        %425 = vmatprep.mubr.bf16.mxu0 0
        %426 = vmatmul.mubr.bf16.gmra.mrb[0].mxu0 %v388
        %v427 = vpop.f32.mrb[0].mxu0
        %v428 = vadd.f32 %v384, %v427
        %v429 = vpop.f32.mrb[0].mxu0
        %v430 = vpop.f32.mrb[0].mxu0
        %v431 = vpop.f32.mrb[0].mxu0
        %432 = vdwg.mxu0
        %v433 = vld [vmem:[#allocation2] sm:$0xff]
        %v434 = vld [vmem:[#allocation3] sm:$0xff]
        %vm435 = vcmask 64512
        %v436 = vsel %vm435, %v428, -inf
        %437 = vmax.xlane.f32.xlu0 %v436
        %v438 = vpop.xlane.xlu0 %437
        %v439 = vmax.f32 %v433, %v438
        %v440 = vsub.f32 %v433, %v439
        %v441 = vmul.f32 %v440, 1.442695
        %v442 = vpow.pop %v441
        %444 = vset.pattern.permute.xlu0 0
        %445 = vperm.xlu0 %444, %v439
        %v446 = vpop.permute.xlu0 %445
        %v448 = vsub.f32 %v428, %v446
        %v449 = vpack.c.bf16 %v448, %v448
        %v451 = vmul.bf16 %v449, 1069105081
        %v452 = vpow.bf16.pop %v451
        %v453 = vmul.f32 %v442, %v434
        %v454 = vunpack.c.l.bf16 %v452
        %v455 = vsel %vm435, %v454, 0.0
        %456 = vadd.xlane.f32.xlu0 %v455
        %v457 = vpop.xlane.xlu0 %456
        %v458 = vadd.f32 %v453, %v457
        %vm459 = vcmask 7168
        %460 = vst.msk [vmem:[#allocation3] sm:$0xff] %vm459, %v458
        %v461 = vld [vmem:[#allocation4] sm:$0xff]
        %463 = vset.pattern.permute.xlu0 0
        %464 = vperm.xlu0 %463, %v442
        %v465 = vpop.permute.xlu0 %464
        %v467 = vmul.f32 %v465, %v461
        %v469 = vsel %vm435, %v452, 0
        %vm471 = vcmask 1043456
        %v473 = vsel %vm471, %v377, 0
        %475 = vmatprep.subr.bf16.mxu0 0
        %476 = vmatpush1.bf16.msra.mxu0 %v473
        %477 = vmatprep.subr.bf16.mxu0 0
        %478 = vmatpush1.bf16.msra.mxu0 0
        %479 = vmatprep.subr.bf16.mxu0 0
        %480 = vmatpush1.bf16.msra.mxu0 0
        %481 = vmatprep.subr.bf16.mxu0 0
        %482 = vmatpush1.bf16.msra.mxu0 0
        %483 = vmatprep.subr.bf16.mxu0 0
        %484 = vmatpush1.bf16.msra.mxu0 0
        %485 = vmatprep.subr.bf16.mxu0 0
        %486 = vmatpush1.bf16.msra.mxu0 0
        %487 = vmatprep.subr.bf16.mxu0 0
        %488 = vmatpush1.bf16.msra.mxu0 0
        %489 = vmatprep.subr.bf16.mxu0 0
        %490 = vmatpush1.bf16.msra.mxu0 0
        %491 = vmatprep.subr.bf16.mxu0 0
        %492 = vmatpush1.bf16.msra.mxu0 0
        %493 = vmatprep.subr.bf16.mxu0 0
        %494 = vmatpush1.bf16.msra.mxu0 0
        %495 = vmatprep.subr.bf16.mxu0 0
        %496 = vmatpush1.bf16.msra.mxu0 0
        %497 = vmatprep.subr.bf16.mxu0 0
        %498 = vmatpush1.bf16.msra.mxu0 0
        %499 = vmatprep.subr.bf16.mxu0 0
        %500 = vmatpush1.bf16.msra.mxu0 0
        %501 = vmatprep.subr.bf16.mxu0 0
        %502 = vmatpush1.bf16.msra.mxu0 0
        %503 = vmatprep.subr.bf16.mxu0 0
        %504 = vmatpush1.bf16.msra.mxu0 0
        %505 = vmatprep.subr.bf16.mxu0 0
        %506 = vmatpush1.bf16.msra.mxu0 0
        %507 = vmatprep.mubr.bf16.mxu0 0
        %508 = vmatmul.mubr.bf16.gmra.mrb[0].mxu0 %v469
        %v509 = vpop.f32.mrb[0].mxu0
        %v510 = vadd.f32 0.0, %v509
        %v511 = vpop.f32.mrb[0].mxu0
        %v512 = vpop.f32.mrb[0].mxu0
        %v513 = vpop.f32.mrb[0].mxu0
        %514 = vdwg.mxu0
        %v515 = vadd.f32 %v467, %v510
        %516 = vst.msk [vmem:[#allocation4] sm:$0xff] %vm386, %v515
        %517 = vst.msk [vmem:[#allocation2] sm:$0xff] %vm459, %v439
        %v519 = vunpack.c.l.b16 %v379
        %v520 = vpack.c.b16 %v519, %v519
        %521 = vrot.lane.b32.xlu0 %v520, 96
        %v522 = vpop.permute.xlu0 %521
        %v524 = vunpack.c.l.b16 %v376
        %v525 = vpack.c.b16 %v524, %v524
        %526 = vrot.lane.b32.xlu0 %v525, 96
        %v527 = vpop.permute.xlu0 %526
        %v529 = vsel %vm386, %v522, 0
        %v532 = vsel %vm386, %v527, 0
        %534 = vmatprep.subr.bf16.mxu0 0
        %535 = vmatpush1.bf16.xpose.msra.mxu0 %v532
        %536 = vmatprep.subr.bf16.mxu0 0
        %537 = vmatpush1.bf16.xpose.msra.mxu0 0
        %538 = vmatprep.subr.bf16.mxu0 0
        %539 = vmatpush1.bf16.xpose.msra.mxu0 0
        %540 = vmatprep.subr.bf16.mxu0 0
        %541 = vmatpush1.bf16.xpose.msra.mxu0 0
        %542 = vmatprep.subr.bf16.mxu0 0
        %543 = vmatpush1.bf16.xpose.msra.mxu0 0
        %544 = vmatprep.subr.bf16.mxu0 0
        %545 = vmatpush1.bf16.xpose.msra.mxu0 0
        %546 = vmatprep.subr.bf16.mxu0 0
        %547 = vmatpush1.bf16.xpose.msra.mxu0 0
        %548 = vmatprep.subr.bf16.mxu0 0
        %549 = vmatpush1.bf16.xpose.msra.mxu0 0
        %550 = vmatprep.subr.bf16.mxu0 0
        %551 = vmatpush1.bf16.xpose.msra.mxu0 0
        %552 = vmatprep.subr.bf16.mxu0 0
        %553 = vmatpush1.bf16.xpose.msra.mxu0 0
        %554 = vmatprep.subr.bf16.mxu0 0
        %555 = vmatpush1.bf16.xpose.msra.mxu0 0
        %556 = vmatprep.subr.bf16.mxu0 0
        %557 = vmatpush1.bf16.xpose.msra.mxu0 0
        %558 = vmatprep.subr.bf16.mxu0 0
        %559 = vmatpush1.bf16.xpose.msra.mxu0 0
        %560 = vmatprep.subr.bf16.mxu0 0
        %561 = vmatpush1.bf16.xpose.msra.mxu0 0
        %562 = vmatprep.subr.bf16.mxu0 0
        %563 = vmatpush1.bf16.xpose.msra.mxu0 0
        %564 = vmatprep.subr.bf16.mxu0 0
        %565 = vmatpush1.bf16.xpose.msra.mxu0 0
        %566 = vmatprep.mubr.bf16.mxu0 0
        %567 = vmatmul.mubr.bf16.gmra.mrb[0].mxu0 %v529
        %v568 = vpop.f32.mrb[0].mxu0
        %v569 = vadd.f32 %v384, %v568
        %v570 = vpop.f32.mrb[0].mxu0
        %v571 = vpop.f32.mrb[0].mxu0
        %v572 = vpop.f32.mrb[0].mxu0
        %573 = vdwg.mxu0
        %s574 = scalar_lea.vmem [#allocation2], 8
        %v575 = vld [vmem:[%s574] sm:$0xff]
        %s576 = scalar_lea.vmem [#allocation3], 8
        %v577 = vld [vmem:[%s576] sm:$0xff]
        %v578 = vsel %vm435, %v569, -inf
        %579 = vmax.xlane.f32.xlu0 %v578
        %v580 = vpop.xlane.xlu0 %579
        %v581 = vmax.f32 %v575, %v580
        %v582 = vsub.f32 %v575, %v581
        %v583 = vmul.f32 %v582, 1.442695
        %v584 = vpow.pop %v583
        %586 = vset.pattern.permute.xlu0 0
        %587 = vperm.xlu0 %586, %v581
        %v588 = vpop.permute.xlu0 %587
        %v590 = vsub.f32 %v569, %v588
        %v591 = vpack.c.bf16 %v590, %v590
        %v593 = vmul.bf16 %v591, 1069105081
        %v594 = vpow.bf16.pop %v593
        %v595 = vmul.f32 %v584, %v577
        %v596 = vunpack.c.l.bf16 %v594
        %v597 = vsel %vm435, %v596, 0.0
        %598 = vadd.xlane.f32.xlu0 %v597
        %v599 = vpop.xlane.xlu0 %598
        %v600 = vadd.f32 %v595, %v599
        %601 = vst.msk [vmem:[%s576] sm:$0xff] %vm459, %v600
        %s602 = scalar_lea.vmem [#allocation4], 8
        %v603 = vld [vmem:[%s602] sm:$0xff]
        %605 = vset.pattern.permute.xlu0 0
        %606 = vperm.xlu0 %605, %v584
        %v607 = vpop.permute.xlu0 %606
        %v609 = vmul.f32 %v607, %v603
        %v611 = vunpack.c.l.b16 %v377
        %v612 = vpack.c.b16 %v611, %v611
        %613 = vrot.lane.b32.xlu0 %v612, 96
        %v614 = vpop.permute.xlu0 %613
        %v616 = vsel %vm435, %v594, 0
        %v619 = vsel %vm471, %v614, 0
        %621 = vmatprep.subr.bf16.mxu0 0
        %622 = vmatpush1.bf16.msra.mxu0 %v619
        %623 = vmatprep.subr.bf16.mxu0 0
        %624 = vmatpush1.bf16.msra.mxu0 0
        %625 = vmatprep.subr.bf16.mxu0 0
        %626 = vmatpush1.bf16.msra.mxu0 0
        %627 = vmatprep.subr.bf16.mxu0 0
        %628 = vmatpush1.bf16.msra.mxu0 0
        %629 = vmatprep.subr.bf16.mxu0 0
        %630 = vmatpush1.bf16.msra.mxu0 0
        %631 = vmatprep.subr.bf16.mxu0 0
        %632 = vmatpush1.bf16.msra.mxu0 0
        %633 = vmatprep.subr.bf16.mxu0 0
        %634 = vmatpush1.bf16.msra.mxu0 0
        %635 = vmatprep.subr.bf16.mxu0 0
        %636 = vmatpush1.bf16.msra.mxu0 0
        %637 = vmatprep.subr.bf16.mxu0 0
        %638 = vmatpush1.bf16.msra.mxu0 0
        %639 = vmatprep.subr.bf16.mxu0 0
        %640 = vmatpush1.bf16.msra.mxu0 0
        %641 = vmatprep.subr.bf16.mxu0 0
        %642 = vmatpush1.bf16.msra.mxu0 0
        %643 = vmatprep.subr.bf16.mxu0 0
        %644 = vmatpush1.bf16.msra.mxu0 0
        %645 = vmatprep.subr.bf16.mxu0 0
        %646 = vmatpush1.bf16.msra.mxu0 0
        %647 = vmatprep.subr.bf16.mxu0 0
        %648 = vmatpush1.bf16.msra.mxu0 0
        %649 = vmatprep.subr.bf16.mxu0 0
        %650 = vmatpush1.bf16.msra.mxu0 0
        %651 = vmatprep.subr.bf16.mxu0 0
        %652 = vmatpush1.bf16.msra.mxu0 0
        %653 = vmatprep.mubr.bf16.mxu0 0
        %654 = vmatmul.mubr.bf16.gmra.mrb[0].mxu0 %v616
        %v655 = vpop.f32.mrb[0].mxu0
        %v656 = vadd.f32 0.0, %v655
        %v657 = vpop.f32.mrb[0].mxu0
        %v658 = vpop.f32.mrb[0].mxu0
        %v659 = vpop.f32.mrb[0].mxu0
        %660 = vdwg.mxu0
        %v661 = vadd.f32 %v609, %v656
        %662 = vst.msk [vmem:[%s602] sm:$0xff] %vm386, %v661
        %663 = vst.msk [vmem:[%s574] sm:$0xff] %vm459, %v581
        %664 = vrot.lane.b32.xlu0 %v520, 64
        %v665 = vpop.permute.xlu0 %664
        %666 = vrot.lane.b32.xlu0 %v525, 64
        %v667 = vpop.permute.xlu0 %666
        %v669 = vsel %vm386, %v665, 0
        %v672 = vsel %vm386, %v667, 0
        %674 = vmatprep.subr.bf16.mxu0 0
        %675 = vmatpush1.bf16.xpose.msra.mxu0 %v672
        %676 = vmatprep.subr.bf16.mxu0 0
        %677 = vmatpush1.bf16.xpose.msra.mxu0 0
        %678 = vmatprep.subr.bf16.mxu0 0
        %679 = vmatpush1.bf16.xpose.msra.mxu0 0
        %680 = vmatprep.subr.bf16.mxu0 0
        %681 = vmatpush1.bf16.xpose.msra.mxu0 0
        %682 = vmatprep.subr.bf16.mxu0 0
        %683 = vmatpush1.bf16.xpose.msra.mxu0 0
        %684 = vmatprep.subr.bf16.mxu0 0
        %685 = vmatpush1.bf16.xpose.msra.mxu0 0
        %686 = vmatprep.subr.bf16.mxu0 0
        %687 = vmatpush1.bf16.xpose.msra.mxu0 0
        %688 = vmatprep.subr.bf16.mxu0 0
        %689 = vmatpush1.bf16.xpose.msra.mxu0 0
        %690 = vmatprep.subr.bf16.mxu0 0
        %691 = vmatpush1.bf16.xpose.msra.mxu0 0
        %692 = vmatprep.subr.bf16.mxu0 0
        %693 = vmatpush1.bf16.xpose.msra.mxu0 0
        %694 = vmatprep.subr.bf16.mxu0 0
        %695 = vmatpush1.bf16.xpose.msra.mxu0 0
        %696 = vmatprep.subr.bf16.mxu0 0
        %697 = vmatpush1.bf16.xpose.msra.mxu0 0
        %698 = vmatprep.subr.bf16.mxu0 0
        %699 = vmatpush1.bf16.xpose.msra.mxu0 0
        %700 = vmatprep.subr.bf16.mxu0 0
        %701 = vmatpush1.bf16.xpose.msra.mxu0 0
        %702 = vmatprep.subr.bf16.mxu0 0
        %703 = vmatpush1.bf16.xpose.msra.mxu0 0
        %704 = vmatprep.subr.bf16.mxu0 0
        %705 = vmatpush1.bf16.xpose.msra.mxu0 0
        %706 = vmatprep.mubr.bf16.mxu0 0
        %707 = vmatmul.mubr.bf16.gmra.mrb[0].mxu0 %v669
        %v708 = vpop.f32.mrb[0].mxu0
        %v709 = vadd.f32 %v384, %v708
        %v710 = vpop.f32.mrb[0].mxu0
        %v711 = vpop.f32.mrb[0].mxu0
        %v712 = vpop.f32.mrb[0].mxu0
        %713 = vdwg.mxu0
        %s714 = scalar_lea.vmem [#allocation2], 16
        %v715 = vld [vmem:[%s714] sm:$0xff]
        %s716 = scalar_lea.vmem [#allocation3], 16
        %v717 = vld [vmem:[%s716] sm:$0xff]
        %v718 = vsel %vm435, %v709, -inf
        %719 = vmax.xlane.f32.xlu0 %v718
        %v720 = vpop.xlane.xlu0 %719
        %v721 = vmax.f32 %v715, %v720
        %v722 = vsub.f32 %v715, %v721
        %v723 = vmul.f32 %v722, 1.442695
        %v724 = vpow.pop %v723
        %726 = vset.pattern.permute.xlu0 0
        %727 = vperm.xlu0 %726, %v721
        %v728 = vpop.permute.xlu0 %727
        %v730 = vsub.f32 %v709, %v728
        %v731 = vpack.c.bf16 %v730, %v730
        %v733 = vmul.bf16 %v731, 1069105081
        %v734 = vpow.bf16.pop %v733
        %v735 = vmul.f32 %v724, %v717
        %v736 = vunpack.c.l.bf16 %v734
        %v737 = vsel %vm435, %v736, 0.0
        %738 = vadd.xlane.f32.xlu0 %v737
        %v739 = vpop.xlane.xlu0 %738
        %v740 = vadd.f32 %v735, %v739
        %741 = vst.msk [vmem:[%s716] sm:$0xff] %vm459, %v740
        %s742 = scalar_lea.vmem [#allocation4], 16
        %v743 = vld [vmem:[%s742] sm:$0xff]
        %745 = vset.pattern.permute.xlu0 0
        %746 = vperm.xlu0 %745, %v724
        %v747 = vpop.permute.xlu0 %746
        %v749 = vmul.f32 %v747, %v743
        %750 = vrot.lane.b32.xlu0 %v612, 64
        %v751 = vpop.permute.xlu0 %750
        %v753 = vsel %vm435, %v734, 0
        %v756 = vsel %vm471, %v751, 0
        %758 = vmatprep.subr.bf16.mxu0 0
        %759 = vmatpush1.bf16.msra.mxu0 %v756
        %760 = vmatprep.subr.bf16.mxu0 0
        %761 = vmatpush1.bf16.msra.mxu0 0
        %762 = vmatprep.subr.bf16.mxu0 0
        %763 = vmatpush1.bf16.msra.mxu0 0
        %764 = vmatprep.subr.bf16.mxu0 0
        %765 = vmatpush1.bf16.msra.mxu0 0
        %766 = vmatprep.subr.bf16.mxu0 0
        %767 = vmatpush1.bf16.msra.mxu0 0
        %768 = vmatprep.subr.bf16.mxu0 0
        %769 = vmatpush1.bf16.msra.mxu0 0
        %770 = vmatprep.subr.bf16.mxu0 0
        %771 = vmatpush1.bf16.msra.mxu0 0
        %772 = vmatprep.subr.bf16.mxu0 0
        %773 = vmatpush1.bf16.msra.mxu0 0
        %774 = vmatprep.subr.bf16.mxu0 0
        %775 = vmatpush1.bf16.msra.mxu0 0
        %776 = vmatprep.subr.bf16.mxu0 0
        %777 = vmatpush1.bf16.msra.mxu0 0
        %778 = vmatprep.subr.bf16.mxu0 0
        %779 = vmatpush1.bf16.msra.mxu0 0
        %780 = vmatprep.subr.bf16.mxu0 0
        %781 = vmatpush1.bf16.msra.mxu0 0
        %782 = vmatprep.subr.bf16.mxu0 0
        %783 = vmatpush1.bf16.msra.mxu0 0
        %784 = vmatprep.subr.bf16.mxu0 0
        %785 = vmatpush1.bf16.msra.mxu0 0
        %786 = vmatprep.subr.bf16.mxu0 0
        %787 = vmatpush1.bf16.msra.mxu0 0
        %788 = vmatprep.subr.bf16.mxu0 0
        %789 = vmatpush1.bf16.msra.mxu0 0
        %790 = vmatprep.mubr.bf16.mxu0 0
        %791 = vmatmul.mubr.bf16.gmra.mrb[0].mxu0 %v753
        %v792 = vpop.f32.mrb[0].mxu0
        %v793 = vadd.f32 0.0, %v792
        %v794 = vpop.f32.mrb[0].mxu0
        %v795 = vpop.f32.mrb[0].mxu0
        %v796 = vpop.f32.mrb[0].mxu0
        %797 = vdwg.mxu0
        %v798 = vadd.f32 %v749, %v793
        %799 = vst.msk [vmem:[%s742] sm:$0xff] %vm386, %v798
        %800 = vst.msk [vmem:[%s714] sm:$0xff] %vm459, %v721
        %801 = vrot.lane.b32.xlu0 %v520, 32
        %v802 = vpop.permute.xlu0 %801
        %803 = vrot.lane.b32.xlu0 %v525, 32
        %v804 = vpop.permute.xlu0 %803
        %v806 = vsel %vm386, %v802, 0
        %v809 = vsel %vm386, %v804, 0
        %811 = vmatprep.subr.bf16.mxu0 0
        %812 = vmatpush1.bf16.xpose.msra.mxu0 %v809
        %813 = vmatprep.subr.bf16.mxu0 0
        %814 = vmatpush1.bf16.xpose.msra.mxu0 0
        %815 = vmatprep.subr.bf16.mxu0 0
        %816 = vmatpush1.bf16.xpose.msra.mxu0 0
        %817 = vmatprep.subr.bf16.mxu0 0
        %818 = vmatpush1.bf16.xpose.msra.mxu0 0
        %819 = vmatprep.subr.bf16.mxu0 0
        %820 = vmatpush1.bf16.xpose.msra.mxu0 0
        %821 = vmatprep.subr.bf16.mxu0 0
        %822 = vmatpush1.bf16.xpose.msra.mxu0 0
        %823 = vmatprep.subr.bf16.mxu0 0
        %824 = vmatpush1.bf16.xpose.msra.mxu0 0
        %825 = vmatprep.subr.bf16.mxu0 0
        %826 = vmatpush1.bf16.xpose.msra.mxu0 0
        %827 = vmatprep.subr.bf16.mxu0 0
        %828 = vmatpush1.bf16.xpose.msra.mxu0 0
        %829 = vmatprep.subr.bf16.mxu0 0
        %830 = vmatpush1.bf16.xpose.msra.mxu0 0
        %831 = vmatprep.subr.bf16.mxu0 0
        %832 = vmatpush1.bf16.xpose.msra.mxu0 0
        %833 = vmatprep.subr.bf16.mxu0 0
        %834 = vmatpush1.bf16.xpose.msra.mxu0 0
        %835 = vmatprep.subr.bf16.mxu0 0
        %836 = vmatpush1.bf16.xpose.msra.mxu0 0
        %837 = vmatprep.subr.bf16.mxu0 0
        %838 = vmatpush1.bf16.xpose.msra.mxu0 0
        %839 = vmatprep.subr.bf16.mxu0 0
        %840 = vmatpush1.bf16.xpose.msra.mxu0 0
        %841 = vmatprep.subr.bf16.mxu0 0
        %842 = vmatpush1.bf16.xpose.msra.mxu0 0
        %843 = vmatprep.mubr.bf16.mxu0 0
        %844 = vmatmul.mubr.bf16.gmra.mrb[0].mxu0 %v806
        %v845 = vpop.f32.mrb[0].mxu0
        %v846 = vadd.f32 %v384, %v845
        %v847 = vpop.f32.mrb[0].mxu0
        %v848 = vpop.f32.mrb[0].mxu0
        %v849 = vpop.f32.mrb[0].mxu0
        %850 = vdwg.mxu0
        %s851 = scalar_lea.vmem [#allocation2], 24
        %v852 = vld [vmem:[%s851] sm:$0xff]
        %s853 = scalar_lea.vmem [#allocation3], 24
        %v854 = vld [vmem:[%s853] sm:$0xff]
        %v855 = vsel %vm435, %v846, -inf
        %856 = vmax.xlane.f32.xlu0 %v855
        %v857 = vpop.xlane.xlu0 %856
        %v858 = vmax.f32 %v852, %v857
        %v859 = vsub.f32 %v852, %v858
        %v860 = vmul.f32 %v859, 1.442695
        %v861 = vpow.pop %v860
        %863 = vset.pattern.permute.xlu0 0
        %864 = vperm.xlu0 %863, %v858
        %v865 = vpop.permute.xlu0 %864
        %v867 = vsub.f32 %v846, %v865
        %v868 = vpack.c.bf16 %v867, %v867
        %v870 = vmul.bf16 %v868, 1069105081
        %v871 = vpow.bf16.pop %v870
        %v872 = vmul.f32 %v861, %v854
        %v873 = vunpack.c.l.bf16 %v871
        %v874 = vsel %vm435, %v873, 0.0
        %875 = vadd.xlane.f32.xlu0 %v874
        %v876 = vpop.xlane.xlu0 %875
        %v877 = vadd.f32 %v872, %v876
        %878 = vst.msk [vmem:[%s853] sm:$0xff] %vm459, %v877
        %s879 = scalar_lea.vmem [#allocation4], 24
        %v880 = vld [vmem:[%s879] sm:$0xff]
        %882 = vset.pattern.permute.xlu0 0
        %883 = vperm.xlu0 %882, %v861
        %v884 = vpop.permute.xlu0 %883
        %v886 = vmul.f32 %v884, %v880
        %887 = vrot.lane.b32.xlu0 %v612, 32
        %v888 = vpop.permute.xlu0 %887
        %v890 = vsel %vm435, %v871, 0
        %v893 = vsel %vm471, %v888, 0
        %895 = vmatprep.subr.bf16.mxu0 0
        %896 = vmatpush1.bf16.msra.mxu0 %v893
        %897 = vmatprep.subr.bf16.mxu0 0
        %898 = vmatpush1.bf16.msra.mxu0 0
        %899 = vmatprep.subr.bf16.mxu0 0
        %900 = vmatpush1.bf16.msra.mxu0 0
        %901 = vmatprep.subr.bf16.mxu0 0
        %902 = vmatpush1.bf16.msra.mxu0 0
        %903 = vmatprep.subr.bf16.mxu0 0
        %904 = vmatpush1.bf16.msra.mxu0 0
        %905 = vmatprep.subr.bf16.mxu0 0
        %906 = vmatpush1.bf16.msra.mxu0 0
        %907 = vmatprep.subr.bf16.mxu0 0
        %908 = vmatpush1.bf16.msra.mxu0 0
        %909 = vmatprep.subr.bf16.mxu0 0
        %910 = vmatpush1.bf16.msra.mxu0 0
        %911 = vmatprep.subr.bf16.mxu0 0
        %912 = vmatpush1.bf16.msra.mxu0 0
        %913 = vmatprep.subr.bf16.mxu0 0
        %914 = vmatpush1.bf16.msra.mxu0 0
        %915 = vmatprep.subr.bf16.mxu0 0
        %916 = vmatpush1.bf16.msra.mxu0 0
        %917 = vmatprep.subr.bf16.mxu0 0
        %918 = vmatpush1.bf16.msra.mxu0 0
        %919 = vmatprep.subr.bf16.mxu0 0
        %920 = vmatpush1.bf16.msra.mxu0 0
        %921 = vmatprep.subr.bf16.mxu0 0
        %922 = vmatpush1.bf16.msra.mxu0 0
        %923 = vmatprep.subr.bf16.mxu0 0
        %924 = vmatpush1.bf16.msra.mxu0 0
        %925 = vmatprep.subr.bf16.mxu0 0
        %926 = vmatpush1.bf16.msra.mxu0 0
        %927 = vmatprep.mubr.bf16.mxu0 0
        %928 = vmatmul.mubr.bf16.gmra.mrb[0].mxu0 %v890
        %v929 = vpop.f32.mrb[0].mxu0
        %v930 = vadd.f32 0.0, %v929
        %v931 = vpop.f32.mrb[0].mxu0
        %v932 = vpop.f32.mrb[0].mxu0
        %v933 = vpop.f32.mrb[0].mxu0
        %934 = vdwg.mxu0
        %v935 = vadd.f32 %v886, %v930
        %936 = vst.msk [vmem:[%s879] sm:$0xff] %vm386, %v935
        %937 = vst.msk [vmem:[%s851] sm:$0xff] %vm459, %v858
      $region44: #{transformer_forward.14} parent=35 // pred_fallthru
        _
      // Predicated region
      $region45: #{transformer_forward.14} parent=35 // pred_check
        %p938 = pneg %p345
      $region46: #{transformer_forward.14} parent=35 // pred_check_branch
        %940 = sbr.rel (%p938) target = $region48
      $region47: #{transformer_forward.14} parent=35 // pred_region
        %v941 = vld [vmem:[#allocation3] sm:$0xff]
        %v942 = vmax.f32 %v941, 1e-30
        %v943 = vrcp.pop %v942
        %v944 = vld [vmem:[#allocation4] sm:$0xff]
        %946 = vset.pattern.permute.xlu0 0
        %947 = vperm.xlu0 %946, %v943
        %v948 = vpop.permute.xlu0 %947
        %v950 = vmul.f32 %v944, %v948
        %s951 = scalar_lea.vmem [#allocation3], 8
        %v952 = vld [vmem:[%s951] sm:$0xff]
        %v953 = vmax.f32 %v952, 1e-30
        %v954 = vrcp.pop %v953
        %s955 = scalar_lea.vmem [#allocation4], 8
        %v956 = vld [vmem:[%s955] sm:$0xff]
        %958 = vset.pattern.permute.xlu0 0
        %959 = vperm.xlu0 %958, %v954
        %v960 = vpop.permute.xlu0 %959
        %v962 = vmul.f32 %v956, %v960
        %s963 = scalar_lea.vmem [#allocation3], 16
        %v964 = vld [vmem:[%s963] sm:$0xff]
        %v965 = vmax.f32 %v964, 1e-30
        %v966 = vrcp.pop %v965
        %s967 = scalar_lea.vmem [#allocation4], 16
        %v968 = vld [vmem:[%s967] sm:$0xff]
        %970 = vset.pattern.permute.xlu0 0
        %971 = vperm.xlu0 %970, %v966
        %v972 = vpop.permute.xlu0 %971
        %v974 = vmul.f32 %v968, %v972
        %s975 = scalar_lea.vmem [#allocation3], 24
        %v976 = vld [vmem:[%s975] sm:$0xff]
        %v977 = vmax.f32 %v976, 1e-30
        %v978 = vrcp.pop %v977
        %s979 = scalar_lea.vmem [#allocation4], 24
        %v980 = vld [vmem:[%s979] sm:$0xff]
        %982 = vset.pattern.permute.xlu0 0
        %983 = vperm.xlu0 %982, %v978
        %v984 = vpop.permute.xlu0 %983
        %v986 = vmul.f32 %v980, %v984
        %988 = vrot.lane.b32.xlu0 %v962, 32
        %v989 = vpop.permute.xlu0 %988
        %992 = vrot.lane.b32.xlu0 %v974, 64
        %v993 = vpop.permute.xlu0 %992
        %996 = vrot.lane.b32.xlu0 %v986, 96
        %v997 = vpop.permute.xlu0 %996
        %vm999 = vcmask 261120
        %v1000 = vsel %vm999, %v950, %v989
        %vm1001 = vcmask 523264
        %v1002 = vsel %vm1001, %v1000, %v993
        %vm1003 = vcmask 785408
        %v1004 = vsel %vm1003, %v1002, %v997
        %v1005 = vpack.c.bf16 %v1004, %v1004
        %1006 = vst [vmem:[%s342] sm:$0xf] %v1005
      $region48: #{transformer_forward.14} parent=35 // pred_fallthru
        _
      %p1007 = scmp.lt.s32.totalorder %s27, 1
      %s1008 = scalar_select %p1007, %s27, 1
      %p1009 = scmp.lt.s32.totalorder %s28, 0
      %s1010 = scalar_select %p1009, %s28, 0
      %s1011 = sadd.s32 %s1010, %s1008
      %s1012 = smul.addr %s1011, 4
      %s1013 = scalar_lea.vmem %s5, %s1012
      // Predicated region
      $region49: #{transformer_forward.14} parent=35 // pred_check
        %p1014 = pneg %p173
      $region50: #{transformer_forward.14} parent=35 // pred_check_branch
        %1016 = sbr.rel (%p1014) target = $region52
      $region51: #{transformer_forward.14} parent=35 // pred_region
        _
      $region52: #{transformer_forward.14} parent=35 // pred_fallthru
        _
    $region36: #{transformer_forward.14} parent=5 // pred_fallthru
      _
    %p1017 = scmp.le.s32.totalorder 2, %s17
    // Predicated region
    $region53: #{transformer_forward.14} parent=5 // pred_check
      %p1018 = pneg %p1017
    $region54: #{transformer_forward.14} parent=5 // pred_check_branch
      %1020 = sbr.rel (%p1018) target = $region56
    $region55: #{transformer_forward.14} parent=5 // pred_region
      %s1021 = ssub.s32 %s17, 2
      // Predicated region
      $region57: #{transformer_forward.14} parent=55 // pred_check
        %p1022 = pneg %p179
      $region58: #{transformer_forward.14} parent=55 // pred_check_branch
        %1024 = sbr.rel (%p1022) target = $region60
      $region59: #{transformer_forward.14} parent=55 // pred_region
        %p1025 = scmp.lt.s32.totalorder %s30, 1
        %s1026 = scalar_select %p1025, %s30, 1
        %p1027 = scmp.lt.s32.totalorder %s31, 0
        %s1028 = scalar_select %p1027, %s31, 0
        %s1029 = sadd.s32 %s1028, %s1026
        %s1030 = smul.addr %s1029, 4
        %s1031 = scalar_lea.vmem %s5, %s1030
      $region60: #{transformer_forward.14} parent=55 // pred_fallthru
        _
    $region56: #{transformer_forward.14} parent=5 // pred_fallthru
      _
  $region6: #{transformer_forward.14} parent=0 // loop_footer
    %s21 = sadd.s32 1, %s17
  $region7: #{transformer_forward.14} parent=0 // loop_footer_branch
    %16 = sbr.rel target = $region3
  $region8: #{transformer_forward.14} parent=0 // loop_exit
    _

// kernel: transformer_forward.16
$region0: #{transformer_forward.16}
  #allocation0 [shape = 'u32[]', space=smem, size = 0x4, offset = 0x4, fixed_abs, tag = 'smem constant byte address 0x4 - core index']
  #allocation1 [shape = 'u32[144,128]{1,0:T(1,128)}', space=vmem, size = 0x12000, scoped, tag = 'internal scratch']
  #allocation2 [shape = 'f32[16,256]{1,0:T(8,128)}', space=vmem, size = 0x4000, scoped, tag = 'scratch operand']
  %s0 = inlined_call_operand.vmem [shape: bf16[16,128], index: 0, kind: input, shape index: {}]
  %s1 = inlined_call_operand.vmem [shape: bf16[128,256], index: 1, kind: input, shape index: {}]
  %s2 = inlined_call_operand.vmem [shape: f32[1,256], index: 2, kind: input, shape index: {}]
  %s3 = inlined_call_operand.vmem [shape: bf16[16,256], index: 3, kind: output, shape index: {}]
  %s4 = sld [smem:[#allocation0]]
  $region30: #{transformer_forward.16} parent=0
    _
  %s6 = ssub.s32 1, %s4
  %s7 = scalar_select 0, %s6, %s4
  // Predicated region
  $region2: #{transformer_forward.16} parent=0 // pred_check
    _
  $region3: #{transformer_forward.16} parent=0 // pred_check_branch
    %9 = sbr.rel (0) target = $region5
  $region4: #{transformer_forward.16} parent=0 // pred_region
    _
  $region5: #{transformer_forward.16} parent=0 // pred_fallthru
    _
  // Predicated region
  $region6: #{transformer_forward.16} parent=0 // pred_check
    _
  $region7: #{transformer_forward.16} parent=0 // pred_check_branch
    %11 = sbr.rel (0) target = $region9
  $region8: #{transformer_forward.16} parent=0 // pred_region
    _
  $region9: #{transformer_forward.16} parent=0 // pred_fallthru
    _
  // Predicated region
  $region10: #{transformer_forward.16} parent=0 // pred_check
    _
  $region11: #{transformer_forward.16} parent=0 // pred_check_branch
    %13 = sbr.rel (0) target = $region13
  $region12: #{transformer_forward.16} parent=0 // pred_region
    _
  $region13: #{transformer_forward.16} parent=0 // pred_fallthru
    _
  %p15 = scmp.eq.s32.totalorder 0, 0
  // Predicated region
  $region14: #{transformer_forward.16} parent=0 // pred_check
    %p16 = pneg %p15
  $region15: #{transformer_forward.16} parent=0 // pred_check_branch
    %18 = sbr.rel (%p16) target = $region17
  $region16: #{transformer_forward.16} parent=0 // pred_region
    %19 = vst [vmem:[#allocation2] sm:$0xff] 0.0
    %20 = vst [vmem:[#allocation2 + $0x8] sm:$0xff] 0.0
    %21 = vst [vmem:[#allocation2 + $0x10] sm:$0xff] 0.0
    %22 = vst [vmem:[#allocation2 + $0x18] sm:$0xff] 0.0
  $region17: #{transformer_forward.16} parent=0 // pred_fallthru
    _
  %v23 = vld [vmem:[#allocation2] sm:$0xff]
  %v24 = vld [vmem:[#allocation2 + $0x8] sm:$0xff]
  %v25 = vld [vmem:[#allocation2 + $0x10] sm:$0xff]
  %v26 = vld [vmem:[#allocation2 + $0x18] sm:$0xff]
  %v27 = vld [vmem:[%s0] sm:$0xf]
  %v28 = vld [vmem:[%s0 + $0x4] sm:$0xf]
  %v29 = vld [vmem:[%s1] sm:$0xff]
  %v30 = vld [vmem:[%s1 + $0x8] sm:$0xff]
  %v31 = vld [vmem:[%s1 + $0x10] sm:$0xff]
  %v32 = vld [vmem:[%s1 + $0x18] sm:$0xff]
  %v33 = vld [vmem:[%s1 + $0x20] sm:$0xff]
  %v34 = vld [vmem:[%s1 + $0x28] sm:$0xff]
  %v35 = vld [vmem:[%s1 + $0x30] sm:$0xff]
  %v36 = vld [vmem:[%s1 + $0x38] sm:$0xff]
  %v37 = vld [vmem:[%s1 + $0x40] sm:$0xff]
  %v38 = vld [vmem:[%s1 + $0x48] sm:$0xff]
  %v39 = vld [vmem:[%s1 + $0x50] sm:$0xff]
  %v40 = vld [vmem:[%s1 + $0x58] sm:$0xff]
  %v41 = vld [vmem:[%s1 + $0x60] sm:$0xff]
  %v42 = vld [vmem:[%s1 + $0x68] sm:$0xff]
  %v43 = vld [vmem:[%s1 + $0x70] sm:$0xff]
  %v44 = vld [vmem:[%s1 + $0x78] sm:$0xff]
  %v47 = vunpack.c.l.b16 %v27
  %v48 = vunpack.c.l.b16 %v28
  %v49 = vpack.c.b16 %v48, %v47
  %v67 = vunpack.c.l.b16 %v29
  %v68 = vunpack.c.h.b16 %v29
  %v69 = vunpack.c.l.b16 %v30
  %v70 = vunpack.c.h.b16 %v30
  %v71 = vunpack.c.l.b16 %v31
  %v72 = vunpack.c.h.b16 %v31
  %v73 = vunpack.c.l.b16 %v32
  %v74 = vunpack.c.h.b16 %v32
  %v75 = vunpack.c.l.b16 %v33
  %v76 = vunpack.c.h.b16 %v33
  %v77 = vunpack.c.l.b16 %v34
  %v78 = vunpack.c.h.b16 %v34
  %v79 = vunpack.c.l.b16 %v35
  %v80 = vunpack.c.h.b16 %v35
  %v81 = vunpack.c.l.b16 %v36
  %v82 = vunpack.c.h.b16 %v36
  %v83 = vunpack.c.l.b16 %v37
  %v84 = vunpack.c.h.b16 %v37
  %v85 = vunpack.c.l.b16 %v38
  %v86 = vunpack.c.h.b16 %v38
  %v87 = vunpack.c.l.b16 %v39
  %v88 = vunpack.c.h.b16 %v39
  %v89 = vunpack.c.l.b16 %v40
  %v90 = vunpack.c.h.b16 %v40
  %v91 = vunpack.c.l.b16 %v41
  %v92 = vunpack.c.h.b16 %v41
  %v93 = vunpack.c.l.b16 %v42
  %v94 = vunpack.c.h.b16 %v42
  %v95 = vunpack.c.l.b16 %v43
  %v96 = vunpack.c.h.b16 %v43
  %v97 = vunpack.c.l.b16 %v44
  %v98 = vunpack.c.h.b16 %v44
  %v99 = vpack.c.b16 %v69, %v67
  %v100 = vpack.c.b16 %v70, %v68
  %v101 = vpack.c.b16 %v73, %v71
  %v102 = vpack.c.b16 %v74, %v72
  %v103 = vpack.c.b16 %v77, %v75
  %v104 = vpack.c.b16 %v78, %v76
  %v105 = vpack.c.b16 %v81, %v79
  %v106 = vpack.c.b16 %v82, %v80
  %v107 = vpack.c.b16 %v85, %v83
  %v108 = vpack.c.b16 %v86, %v84
  %v109 = vpack.c.b16 %v89, %v87
  %v110 = vpack.c.b16 %v90, %v88
  %v111 = vpack.c.b16 %v93, %v91
  %v112 = vpack.c.b16 %v94, %v92
  %v113 = vpack.c.b16 %v97, %v95
  %v114 = vpack.c.b16 %v98, %v96
  %131 = vmatprep.subr.bf16.mxu0 %v100
  %132 = vmatpush1.bf16.msra.mxu0 %v99
  %133 = vmatprep.subr.bf16.mxu0 %v102
  %134 = vmatpush1.bf16.msra.mxu0 %v101
  %135 = vmatprep.subr.bf16.mxu0 %v104
  %136 = vmatpush1.bf16.msra.mxu0 %v103
  %137 = vmatprep.subr.bf16.mxu0 %v106
  %138 = vmatpush1.bf16.msra.mxu0 %v105
  %139 = vmatprep.subr.bf16.mxu0 %v108
  %140 = vmatpush1.bf16.msra.mxu0 %v107
  %141 = vmatprep.subr.bf16.mxu0 %v110
  %142 = vmatpush1.bf16.msra.mxu0 %v109
  %143 = vmatprep.subr.bf16.mxu0 %v112
  %144 = vmatpush1.bf16.msra.mxu0 %v111
  %145 = vmatprep.subr.bf16.mxu0 %v114
  %146 = vmatpush1.bf16.msra.mxu0 %v113
  %147 = vmatprep.subr.bf16.mxu0 0
  %148 = vmatpush1.bf16.msra.mxu0 0
  %149 = vmatprep.subr.bf16.mxu0 0
  %150 = vmatpush1.bf16.msra.mxu0 0
  %151 = vmatprep.subr.bf16.mxu0 0
  %152 = vmatpush1.bf16.msra.mxu0 0
  %153 = vmatprep.subr.bf16.mxu0 0
  %154 = vmatpush1.bf16.msra.mxu0 0
  %155 = vmatprep.subr.bf16.mxu0 0
  %156 = vmatpush1.bf16.msra.mxu0 0
  %157 = vmatprep.subr.bf16.mxu0 0
  %158 = vmatpush1.bf16.msra.mxu0 0
  %159 = vmatprep.subr.bf16.mxu0 0
  %160 = vmatpush1.bf16.msra.mxu0 0
  %161 = vmatprep.subr.bf16.mxu0 0
  %162 = vmatpush1.bf16.msra.mxu0 0
  %163 = vmatprep.mubr.bf16.mxu0 0
  %164 = vmatmul.mubr.bf16.gmra.mrb[0].mxu0 %v49
  %v165 = vpop.f32.mrb[0].mxu0
  %v166 = vadd.f32 0.0, %v165
  %v167 = vpop.f32.mrb[0].mxu0
  %v168 = vadd.f32 0.0, %v167
  %v169 = vpop.f32.mrb[0].mxu0
  %v170 = vadd.f32 0.0, %v169
  %v171 = vpop.f32.mrb[0].mxu0
  %v172 = vadd.f32 0.0, %v171
  %173 = vdwg.mxu0
  %v174 = vadd.f32 %v23, %v166
  %v175 = vadd.f32 %v24, %v168
  %v176 = vadd.f32 %v25, %v170
  %v177 = vadd.f32 %v26, %v172
  %178 = vst [vmem:[#allocation2] sm:$0xff] %v174
  %179 = vst [vmem:[#allocation2 + $0x8] sm:$0xff] %v175
  %180 = vst [vmem:[#allocation2 + $0x10] sm:$0xff] %v176
  %181 = vst [vmem:[#allocation2 + $0x18] sm:$0xff] %v177
  // Predicated region
  $region18: #{transformer_forward.16} parent=0 // pred_check
    %p182 = pneg %p15
  $region19: #{transformer_forward.16} parent=0 // pred_check_branch
    %184 = sbr.rel (%p182) target = $region21
  $region20: #{transformer_forward.16} parent=0 // pred_region
    %v185 = vld [vmem:[#allocation2] sm:$0xff]
    %v186 = vld [vmem:[#allocation2 + $0x8] sm:$0xff]
    %v187 = vld [vmem:[#allocation2 + $0x10] sm:$0xff]
    %v188 = vld [vmem:[#allocation2 + $0x18] sm:$0xff]
    %v189 = vld [vmem:[%s2] sm:$0x3]
    %v191 = vlaneseq
    %v192 = vshrl.u32 %v191, 7
    %v193 = vsub.s32 0, %v192
    %v194 = vrot.slane %v189, %v193
    %v195 = vlaneseq
    %v196 = vshrl.u32 %v195, 7
    %v197 = vsub.s32 1, %v196
    %v198 = vrot.slane %v189, %v197
    %v201 = vadd.f32 %v185, %v194
    %v202 = vadd.f32 %v186, %v198
    %v203 = vadd.f32 %v187, %v194
    %v204 = vadd.f32 %v188, %v198
    %v205 = vmul.f32 %v201, %v201
    %v206 = vmul.f32 %v202, %v202
    %v207 = vmul.f32 %v203, %v203
    %v208 = vmul.f32 %v204, %v204
    %v209 = vmul.f32 %v201, %v205
    %v210 = vmul.f32 %v202, %v206
    %v211 = vmul.f32 %v203, %v207
    %v212 = vmul.f32 %v204, %v208
    %v213 = vmul.f32 %v209, 0.044715
    %v214 = vmul.f32 %v210, 0.044715
    %v215 = vmul.f32 %v211, 0.044715
    %v216 = vmul.f32 %v212, 0.044715
    %v217 = vadd.f32 %v201, %v213
    %v218 = vadd.f32 %v202, %v214
    %v219 = vadd.f32 %v203, %v215
    %v220 = vadd.f32 %v204, %v216
    %v221 = vmul.f32 %v217, 0.7978846
    %v222 = vmul.f32 %v218, 0.7978846
    %v223 = vmul.f32 %v219, 0.7978846
    %v224 = vmul.f32 %v220, 0.7978846
    %v225 = vtanh.pop %v221
    %v226 = vtanh.pop %v222
    %v227 = vtanh.pop %v223
    %v228 = vtanh.pop %v224
    %v229 = vadd.f32 %v225, 1.0
    %v230 = vadd.f32 %v226, 1.0
    %v231 = vadd.f32 %v227, 1.0
    %v232 = vadd.f32 %v228, 1.0
    %v233 = vmul.f32 %v229, 0.5
    %v234 = vmul.f32 %v230, 0.5
    %v235 = vmul.f32 %v231, 0.5
    %v236 = vmul.f32 %v232, 0.5
    %v237 = vmul.f32 %v201, %v233
    %v238 = vmul.f32 %v202, %v234
    %v239 = vmul.f32 %v203, %v235
    %v240 = vmul.f32 %v204, %v236
    %v241 = vpack.c.bf16 %v239, %v237
    %v242 = vpack.c.bf16 %v240, %v238
    %v245 = vunpack.c.l.b16 %v241
    %v246 = vunpack.c.l.b16 %v242
    %v247 = vunpack.c.h.b16 %v241
    %v248 = vunpack.c.h.b16 %v242
    %v249 = vpack.c.b16 %v246, %v245
    %v250 = vpack.c.b16 %v248, %v247
    %253 = vst [vmem:[%s3] sm:$0xff] %v249
    %254 = vst [vmem:[%s3 + $0x8] sm:$0xff] %v250
  $region21: #{transformer_forward.16} parent=0 // pred_fallthru
    _
  // Predicated region
  $region22: #{transformer_forward.16} parent=0 // pred_check
    _
  $region23: #{transformer_forward.16} parent=0 // pred_check_branch
    %256 = sbr.rel (0) target = $region25
  $region24: #{transformer_forward.16} parent=0 // pred_region
    _
  $region25: #{transformer_forward.16} parent=0 // pred_fallthru
    _
  // Predicated region
  $region26: #{transformer_forward.16} parent=0 // pred_check
    _
  $region27: #{transformer_forward.16} parent=0 // pred_check_branch
    %258 = sbr.rel (0) target = $region29
  $region28: #{transformer_forward.16} parent=0 // pred_region
    _
  $region29: #{transformer_forward.16} parent=0 // pred_fallthru
    _

// kernel: transformer_forward.17
$region0: #{transformer_forward.17}
  #allocation0 [shape = 'u32[]', space=smem, size = 0x4, offset = 0x4, fixed_abs, tag = 'smem constant byte address 0x4 - core index']
  #allocation1 [shape = 'u32[144,128]{1,0:T(1,128)}', space=vmem, size = 0x12000, scoped, tag = 'internal scratch']
  #allocation2 [shape = 'f32[16,128]{1,0:T(8,128)}', space=vmem, size = 0x2000, scoped, tag = 'scratch operand']
  %s0 = inlined_call_operand.vmem [shape: bf16[16,256], index: 0, kind: input, shape index: {}]
  %s1 = inlined_call_operand.vmem [shape: bf16[256,128], index: 1, kind: input, shape index: {}]
  %s2 = inlined_call_operand.vmem [shape: f32[1,128], index: 2, kind: input, shape index: {}]
  %s3 = inlined_call_operand.vmem [shape: bf16[16,128], index: 3, kind: input, shape index: {}]
  %s4 = inlined_call_operand.vmem [shape: f32[1,128], index: 4, kind: input, shape index: {}]
  %s5 = inlined_call_operand.vmem [shape: f32[1,128], index: 5, kind: input, shape index: {}]
  %s6 = inlined_call_operand.vmem [shape: bf16[16,128], index: 6, kind: output, shape index: {}]
  %s7 = sld [smem:[#allocation0]]
  $region42: #{transformer_forward.17} parent=0
    _
  %s9 = ssub.s32 1, %s7
  %s10 = scalar_select 0, %s9, %s7
  // Predicated region
  $region2: #{transformer_forward.17} parent=0 // pred_check
    _
  $region3: #{transformer_forward.17} parent=0 // pred_check_branch
    %12 = sbr.rel (0) target = $region5
  $region4: #{transformer_forward.17} parent=0 // pred_region
    _
  $region5: #{transformer_forward.17} parent=0 // pred_fallthru
    _
  // Predicated region
  $region6: #{transformer_forward.17} parent=0 // pred_check
    _
  $region7: #{transformer_forward.17} parent=0 // pred_check_branch
    %14 = sbr.rel (0) target = $region9
  $region8: #{transformer_forward.17} parent=0 // pred_region
    _
  $region9: #{transformer_forward.17} parent=0 // pred_fallthru
    _
  // Predicated region
  $region10: #{transformer_forward.17} parent=0 // pred_check
    _
  $region11: #{transformer_forward.17} parent=0 // pred_check_branch
    %16 = sbr.rel (0) target = $region13
  $region12: #{transformer_forward.17} parent=0 // pred_region
    _
  $region13: #{transformer_forward.17} parent=0 // pred_fallthru
    _
  // Predicated region
  $region14: #{transformer_forward.17} parent=0 // pred_check
    _
  $region15: #{transformer_forward.17} parent=0 // pred_check_branch
    %18 = sbr.rel (0) target = $region17
  $region16: #{transformer_forward.17} parent=0 // pred_region
    _
  $region17: #{transformer_forward.17} parent=0 // pred_fallthru
    _
  // Predicated region
  $region18: #{transformer_forward.17} parent=0 // pred_check
    _
  $region19: #{transformer_forward.17} parent=0 // pred_check_branch
    %20 = sbr.rel (0) target = $region21
  $region20: #{transformer_forward.17} parent=0 // pred_region
    _
  $region21: #{transformer_forward.17} parent=0 // pred_fallthru
    _
  // Predicated region
  $region22: #{transformer_forward.17} parent=0 // pred_check
    _
  $region23: #{transformer_forward.17} parent=0 // pred_check_branch
    %22 = sbr.rel (0) target = $region25
  $region24: #{transformer_forward.17} parent=0 // pred_region
    _
  $region25: #{transformer_forward.17} parent=0 // pred_fallthru
    _
  %p24 = scmp.eq.s32.totalorder 0, 0
  // Predicated region
  $region26: #{transformer_forward.17} parent=0 // pred_check
    %p25 = pneg %p24
  $region27: #{transformer_forward.17} parent=0 // pred_check_branch
    %27 = sbr.rel (%p25) target = $region29
  $region28: #{transformer_forward.17} parent=0 // pred_region
    %28 = vst [vmem:[#allocation2] sm:$0xff] 0.0
    %29 = vst [vmem:[#allocation2 + $0x8] sm:$0xff] 0.0
  $region29: #{transformer_forward.17} parent=0 // pred_fallthru
    _
  %v30 = vld [vmem:[#allocation2] sm:$0xff]
  %v31 = vld [vmem:[#allocation2 + $0x8] sm:$0xff]
  %v32 = vld [vmem:[%s0] sm:$0xff]
  %v33 = vld [vmem:[%s0 + $0x8] sm:$0xff]
  %v34 = vld [vmem:[%s1] sm:$0xf]
  %v35 = vld [vmem:[%s1 + $0x4] sm:$0xf]
  %v36 = vld [vmem:[%s1 + $0x8] sm:$0xf]
  %v37 = vld [vmem:[%s1 + $0xc] sm:$0xf]
  %v38 = vld [vmem:[%s1 + $0x10] sm:$0xf]
  %v39 = vld [vmem:[%s1 + $0x14] sm:$0xf]
  %v40 = vld [vmem:[%s1 + $0x18] sm:$0xf]
  %v41 = vld [vmem:[%s1 + $0x1c] sm:$0xf]
  %v42 = vld [vmem:[%s1 + $0x20] sm:$0xf]
  %v43 = vld [vmem:[%s1 + $0x24] sm:$0xf]
  %v44 = vld [vmem:[%s1 + $0x28] sm:$0xf]
  %v45 = vld [vmem:[%s1 + $0x2c] sm:$0xf]
  %v46 = vld [vmem:[%s1 + $0x30] sm:$0xf]
  %v47 = vld [vmem:[%s1 + $0x34] sm:$0xf]
  %v48 = vld [vmem:[%s1 + $0x38] sm:$0xf]
  %v49 = vld [vmem:[%s1 + $0x3c] sm:$0xf]
  %v50 = vld [vmem:[%s1 + $0x40] sm:$0xf]
  %v51 = vld [vmem:[%s1 + $0x44] sm:$0xf]
  %v52 = vld [vmem:[%s1 + $0x48] sm:$0xf]
  %v53 = vld [vmem:[%s1 + $0x4c] sm:$0xf]
  %v54 = vld [vmem:[%s1 + $0x50] sm:$0xf]
  %v55 = vld [vmem:[%s1 + $0x54] sm:$0xf]
  %v56 = vld [vmem:[%s1 + $0x58] sm:$0xf]
  %v57 = vld [vmem:[%s1 + $0x5c] sm:$0xf]
  %v58 = vld [vmem:[%s1 + $0x60] sm:$0xf]
  %v59 = vld [vmem:[%s1 + $0x64] sm:$0xf]
  %v60 = vld [vmem:[%s1 + $0x68] sm:$0xf]
  %v61 = vld [vmem:[%s1 + $0x6c] sm:$0xf]
  %v62 = vld [vmem:[%s1 + $0x70] sm:$0xf]
  %v63 = vld [vmem:[%s1 + $0x74] sm:$0xf]
  %v64 = vld [vmem:[%s1 + $0x78] sm:$0xf]
  %v65 = vld [vmem:[%s1 + $0x7c] sm:$0xf]
  %v68 = vunpack.c.l.b16 %v32
  %v69 = vunpack.c.h.b16 %v32
  %v70 = vunpack.c.l.b16 %v33
  %v71 = vunpack.c.h.b16 %v33
  %v72 = vpack.c.b16 %v70, %v68
  %v73 = vpack.c.b16 %v71, %v69
  %v108 = vunpack.c.l.b16 %v34
  %v109 = vunpack.c.l.b16 %v35
  %v110 = vunpack.c.l.b16 %v36
  %v111 = vunpack.c.l.b16 %v37
  %v112 = vunpack.c.l.b16 %v38
  %v113 = vunpack.c.l.b16 %v39
  %v114 = vunpack.c.l.b16 %v40
  %v115 = vunpack.c.l.b16 %v41
  %v116 = vunpack.c.l.b16 %v42
  %v117 = vunpack.c.l.b16 %v43
  %v118 = vunpack.c.l.b16 %v44
  %v119 = vunpack.c.l.b16 %v45
  %v120 = vunpack.c.l.b16 %v46
  %v121 = vunpack.c.l.b16 %v47
  %v122 = vunpack.c.l.b16 %v48
  %v123 = vunpack.c.l.b16 %v49
  %v124 = vunpack.c.l.b16 %v50
  %v125 = vunpack.c.l.b16 %v51
  %v126 = vunpack.c.l.b16 %v52
  %v127 = vunpack.c.l.b16 %v53
  %v128 = vunpack.c.l.b16 %v54
  %v129 = vunpack.c.l.b16 %v55
  %v130 = vunpack.c.l.b16 %v56
  %v131 = vunpack.c.l.b16 %v57
  %v132 = vunpack.c.l.b16 %v58
  %v133 = vunpack.c.l.b16 %v59
  %v134 = vunpack.c.l.b16 %v60
  %v135 = vunpack.c.l.b16 %v61
  %v136 = vunpack.c.l.b16 %v62
  %v137 = vunpack.c.l.b16 %v63
  %v138 = vunpack.c.l.b16 %v64
  %v139 = vunpack.c.l.b16 %v65
  %v140 = vpack.c.b16 %v109, %v108
  %v141 = vpack.c.b16 %v111, %v110
  %v142 = vpack.c.b16 %v113, %v112
  %v143 = vpack.c.b16 %v115, %v114
  %v144 = vpack.c.b16 %v117, %v116
  %v145 = vpack.c.b16 %v119, %v118
  %v146 = vpack.c.b16 %v121, %v120
  %v147 = vpack.c.b16 %v123, %v122
  %v148 = vpack.c.b16 %v125, %v124
  %v149 = vpack.c.b16 %v127, %v126
  %v150 = vpack.c.b16 %v129, %v128
  %v151 = vpack.c.b16 %v131, %v130
  %v152 = vpack.c.b16 %v133, %v132
  %v153 = vpack.c.b16 %v135, %v134
  %v154 = vpack.c.b16 %v137, %v136
  %v155 = vpack.c.b16 %v139, %v138
  %172 = vmatprep.subr.bf16.mxu0 0
  %173 = vmatpush1.bf16.msra.mxu0 %v140
  %174 = vmatprep.subr.bf16.mxu0 0
  %175 = vmatpush1.bf16.msra.mxu0 %v141
  %176 = vmatprep.subr.bf16.mxu0 0
  %177 = vmatpush1.bf16.msra.mxu0 %v142
  %178 = vmatprep.subr.bf16.mxu0 0
  %179 = vmatpush1.bf16.msra.mxu0 %v143
  %180 = vmatprep.subr.bf16.mxu0 0
  %181 = vmatpush1.bf16.msra.mxu0 %v144
  %182 = vmatprep.subr.bf16.mxu0 0
  %183 = vmatpush1.bf16.msra.mxu0 %v145
  %184 = vmatprep.subr.bf16.mxu0 0
  %185 = vmatpush1.bf16.msra.mxu0 %v146
  %186 = vmatprep.subr.bf16.mxu0 0
  %187 = vmatpush1.bf16.msra.mxu0 %v147
  %188 = vmatprep.subr.bf16.mxu0 0
  %189 = vmatpush1.bf16.msra.mxu0 %v148
  %190 = vmatprep.subr.bf16.mxu0 0
  %191 = vmatpush1.bf16.msra.mxu0 %v149
  %192 = vmatprep.subr.bf16.mxu0 0
  %193 = vmatpush1.bf16.msra.mxu0 %v150
  %194 = vmatprep.subr.bf16.mxu0 0
  %195 = vmatpush1.bf16.msra.mxu0 %v151
  %196 = vmatprep.subr.bf16.mxu0 0
  %197 = vmatpush1.bf16.msra.mxu0 %v152
  %198 = vmatprep.subr.bf16.mxu0 0
  %199 = vmatpush1.bf16.msra.mxu0 %v153
  %200 = vmatprep.subr.bf16.mxu0 0
  %201 = vmatpush1.bf16.msra.mxu0 %v154
  %202 = vmatprep.subr.bf16.mxu0 0
  %203 = vmatpush1.bf16.msra.mxu0 %v155
  %204 = vmatprep.mubr.bf16.mxu0 %v73
  %205 = vmatmul.mubr.bf16.gmra.mrb[0].mxu0 %v72
  %v206 = vpop.f32.mrb[0].mxu0
  %v207 = vadd.f32 0.0, %v206
  %v208 = vpop.f32.mrb[0].mxu0
  %v209 = vpop.f32.mrb[0].mxu0
  %v210 = vadd.f32 0.0, %v209
  %v211 = vpop.f32.mrb[0].mxu0
  %212 = vdwg.mxu0
  %v213 = vadd.f32 %v30, %v207
  %v214 = vadd.f32 %v31, %v210
  %215 = vst [vmem:[#allocation2] sm:$0xff] %v213
  %216 = vst [vmem:[#allocation2 + $0x8] sm:$0xff] %v214
  // Predicated region
  $region30: #{transformer_forward.17} parent=0 // pred_check
    %p217 = pneg %p24
  $region31: #{transformer_forward.17} parent=0 // pred_check_branch
    %219 = sbr.rel (%p217) target = $region33
  $region32: #{transformer_forward.17} parent=0 // pred_region
    %v220 = vld [vmem:[#allocation2] sm:$0xff]
    %v221 = vld [vmem:[#allocation2 + $0x8] sm:$0xff]
    %v222 = vld [vmem:[%s2] sm:$0x1]
    %v224 = vlaneseq
    %v225 = vshrl.u32 %v224, 7
    %v226 = vsub.s32 0, %v225
    %v227 = vrot.slane %v222, %v226
    %v229 = vadd.f32 %v220, %v227
    %v230 = vadd.f32 %v221, %v227
    %v231 = vld [vmem:[%s3] sm:$0xf]
    %v232 = vld [vmem:[%s3 + $0x4] sm:$0xf]
    %v233 = vunpack.c.l.bf16 %v231
    %v234 = vunpack.c.l.bf16 %v232
    %v235 = vadd.f32 %v229, %v233
    %v236 = vadd.f32 %v230, %v234
    %237 = vadd.xlane.f32.xlu0 %v235
    %v238 = vpop.xlane.xlu0 %237
    %239 = vadd.xlane.f32.xlu0 %v236
    %v240 = vpop.xlane.xlu0 %239
    %v241 = vrcp.pop 128.0
    %v242 = vmul.f32 %v238, %v241
    %v243 = vmul.f32 %v240, %v241
    %v244 = vsub.f32 %v235, %v242
    %v245 = vsub.f32 %v236, %v243
    %v246 = vmul.f32 %v244, %v244
    %v247 = vmul.f32 %v245, %v245
    %248 = vadd.xlane.f32.xlu0 %v246
    %v249 = vpop.xlane.xlu0 %248
    %250 = vadd.xlane.f32.xlu0 %v247
    %v251 = vpop.xlane.xlu0 %250
    %v252 = vmul.f32 %v249, %v241
    %v253 = vmul.f32 %v251, %v241
    %v254 = vadd.f32 %v252, 1e-12
    %v255 = vadd.f32 %v253, 1e-12
    %v256 = vrsqrt.pop %v254
    %v257 = vrsqrt.pop %v255
    %v258 = vmul.f32 %v244, %v256
    %v259 = vmul.f32 %v245, %v257
    %v260 = vld [vmem:[%s4] sm:$0x1]
    %v262 = vlaneseq
    %v263 = vshrl.u32 %v262, 7
    %v264 = vsub.s32 0, %v263
    %v265 = vrot.slane %v260, %v264
    %v267 = vmul.f32 %v258, %v265
    %v268 = vmul.f32 %v259, %v265
    %v269 = vld [vmem:[%s5] sm:$0x1]
    %v271 = vlaneseq
    %v272 = vshrl.u32 %v271, 7
    %v273 = vsub.s32 0, %v272
    %v274 = vrot.slane %v269, %v273
    %v276 = vadd.f32 %v267, %v274
    %v277 = vadd.f32 %v268, %v274
    %v278 = vpack.c.bf16 %v277, %v276
    %v280 = vunpack.c.l.b16 %v278
    %v281 = vunpack.c.h.b16 %v278
    %v282 = vpack.c.b16 %v280, %v280
    %v283 = vpack.c.b16 %v281, %v281
    %286 = vst [vmem:[%s6] sm:$0xf] %v282
    %287 = vst [vmem:[%s6 + $0x4] sm:$0xf] %v283
  $region33: #{transformer_forward.17} parent=0 // pred_fallthru
    _
  // Predicated region
  $region34: #{transformer_forward.17} parent=0 // pred_check
    _
  $region35: #{transformer_forward.17} parent=0 // pred_check_branch
    %289 = sbr.rel (0) target = $region37
  $region36: #{transformer_forward.17} parent=0 // pred_region
    _
  $region37: #{transformer_forward.17} parent=0 // pred_fallthru
    _
  // Predicated region
  $region38: #{transformer_forward.17} parent=0 // pred_check
    _
  $region39: #{transformer_forward.17} parent=0 // pred_check_branch
    %291 = sbr.rel (0) target = $region41
  $region40: #{transformer_forward.17} parent=0 // pred_region
    _
  $region41: #{transformer_forward.17} parent=0 // pred_fallthru
    _

// kernel: transformer_forward.23
$region0: #{transformer_forward.23}
  #allocation0 [shape = 'u32[]', space=smem, size = 0x4, offset = 0x4, fixed_abs, tag = 'smem constant byte address 0x4 - core index']
  #allocation1 [shape = 'u32[144,128]{1,0:T(1,128)}', space=vmem, size = 0x12000, scoped, tag = 'internal scratch']
  #allocation2 [shape = 'f32[2,128]{1,0:T(2,128)}', space=vmem, size = 0x400, scoped, tag = 'scratch operand']
  %s0 = inlined_call_operand.vmem [shape: bf16[2,128], index: 0, kind: input, shape index: {}]
  %s1 = inlined_call_operand.vmem [shape: bf16[128,128], index: 1, kind: input, shape index: {}]
  %s2 = inlined_call_operand.vmem [shape: f32[1,128], index: 2, kind: input, shape index: {}]
  %s3 = inlined_call_operand.hbm [shape: bf16[2,128], index: 3, kind: output, shape index: {}]
  %s4 = sld [smem:[#allocation0]]
  $region30: #{transformer_forward.23} parent=0
    _
  %s6 = ssub.s32 1, %s4
  %s7 = scalar_select 0, %s6, %s4
  $region1: #{transformer_forward.23} parent=0
    #allocation3 [shape = 'u8[512]{0}', space=vmem, size = 0x400, scoped, tag = 'output window, operand 0, single buffered']
    #allocation4 [shape = 's32[1]{0}', space=sflag, size = 0x4, scoped, tag = 'scoped memory for transformer_forward.23']
    %8 = vsyncpa [#allocation4], 0
    // Predicated region
    $region2: #{transformer_forward.23} parent=1 // pred_check
      _
    $region3: #{transformer_forward.23} parent=1 // pred_check_branch
      %10 = sbr.rel (0) target = $region5
    $region4: #{transformer_forward.23} parent=1 // pred_region
      _
    $region5: #{transformer_forward.23} parent=1 // pred_fallthru
      _
    // Predicated region
    $region6: #{transformer_forward.23} parent=1 // pred_check
      _
    $region7: #{transformer_forward.23} parent=1 // pred_check_branch
      %12 = sbr.rel (0) target = $region9
    $region8: #{transformer_forward.23} parent=1 // pred_region
      _
    $region9: #{transformer_forward.23} parent=1 // pred_fallthru
      _
    // Predicated region
    $region10: #{transformer_forward.23} parent=1 // pred_check
      _
    $region11: #{transformer_forward.23} parent=1 // pred_check_branch
      %14 = sbr.rel (0) target = $region13
    $region12: #{transformer_forward.23} parent=1 // pred_region
      _
    $region13: #{transformer_forward.23} parent=1 // pred_fallthru
      _
    %p16 = scmp.eq.s32.totalorder 0, 0
    // Predicated region
    $region14: #{transformer_forward.23} parent=1 // pred_check
      %p17 = pneg %p16
    $region15: #{transformer_forward.23} parent=1 // pred_check_branch
      %19 = sbr.rel (%p17) target = $region17
    $region16: #{transformer_forward.23} parent=1 // pred_region
      %20 = vst [vmem:[#allocation2] sm:$0x3] 0.0
    $region17: #{transformer_forward.23} parent=1 // pred_fallthru
      _
    %v21 = vld [vmem:[#allocation2] sm:$0x3]
    %v22 = vld [vmem:[%s0] sm:$0x1]
    %v23 = vld [vmem:[%s1] sm:$0xf]
    %v24 = vld [vmem:[%s1 + $0x4] sm:$0xf]
    %v25 = vld [vmem:[%s1 + $0x8] sm:$0xf]
    %v26 = vld [vmem:[%s1 + $0xc] sm:$0xf]
    %v27 = vld [vmem:[%s1 + $0x10] sm:$0xf]
    %v28 = vld [vmem:[%s1 + $0x14] sm:$0xf]
    %v29 = vld [vmem:[%s1 + $0x18] sm:$0xf]
    %v30 = vld [vmem:[%s1 + $0x1c] sm:$0xf]
    %v31 = vld [vmem:[%s1 + $0x20] sm:$0xf]
    %v32 = vld [vmem:[%s1 + $0x24] sm:$0xf]
    %v33 = vld [vmem:[%s1 + $0x28] sm:$0xf]
    %v34 = vld [vmem:[%s1 + $0x2c] sm:$0xf]
    %v35 = vld [vmem:[%s1 + $0x30] sm:$0xf]
    %v36 = vld [vmem:[%s1 + $0x34] sm:$0xf]
    %v37 = vld [vmem:[%s1 + $0x38] sm:$0xf]
    %v38 = vld [vmem:[%s1 + $0x3c] sm:$0xf]
    %v55 = vunpack.c.l.b16 %v23
    %v56 = vunpack.c.l.b16 %v24
    %v57 = vunpack.c.l.b16 %v25
    %v58 = vunpack.c.l.b16 %v26
    %v59 = vunpack.c.l.b16 %v27
    %v60 = vunpack.c.l.b16 %v28
    %v61 = vunpack.c.l.b16 %v29
    %v62 = vunpack.c.l.b16 %v30
    %v63 = vunpack.c.l.b16 %v31
    %v64 = vunpack.c.l.b16 %v32
    %v65 = vunpack.c.l.b16 %v33
    %v66 = vunpack.c.l.b16 %v34
    %v67 = vunpack.c.l.b16 %v35
    %v68 = vunpack.c.l.b16 %v36
    %v69 = vunpack.c.l.b16 %v37
    %v70 = vunpack.c.l.b16 %v38
    %v71 = vpack.c.b16 %v56, %v55
    %v72 = vpack.c.b16 %v58, %v57
    %v73 = vpack.c.b16 %v60, %v59
    %v74 = vpack.c.b16 %v62, %v61
    %v75 = vpack.c.b16 %v64, %v63
    %v76 = vpack.c.b16 %v66, %v65
    %v77 = vpack.c.b16 %v68, %v67
    %v78 = vpack.c.b16 %v70, %v69
    %87 = vmatprep.subr.bf16.mxu0 0
    %88 = vmatpush1.bf16.msra.mxu0 %v71
    %89 = vmatprep.subr.bf16.mxu0 0
    %90 = vmatpush1.bf16.msra.mxu0 %v72
    %91 = vmatprep.subr.bf16.mxu0 0
    %92 = vmatpush1.bf16.msra.mxu0 %v73
    %93 = vmatprep.subr.bf16.mxu0 0
    %94 = vmatpush1.bf16.msra.mxu0 %v74
    %95 = vmatprep.subr.bf16.mxu0 0
    %96 = vmatpush1.bf16.msra.mxu0 %v75
    %97 = vmatprep.subr.bf16.mxu0 0
    %98 = vmatpush1.bf16.msra.mxu0 %v76
    %99 = vmatprep.subr.bf16.mxu0 0
    %100 = vmatpush1.bf16.msra.mxu0 %v77
    %101 = vmatprep.subr.bf16.mxu0 0
    %102 = vmatpush1.bf16.msra.mxu0 %v78
    %103 = vmatprep.subr.bf16.mxu0 0
    %104 = vmatpush1.bf16.msra.mxu0 0
    %105 = vmatprep.subr.bf16.mxu0 0
    %106 = vmatpush1.bf16.msra.mxu0 0
    %107 = vmatprep.subr.bf16.mxu0 0
    %108 = vmatpush1.bf16.msra.mxu0 0
    %109 = vmatprep.subr.bf16.mxu0 0
    %110 = vmatpush1.bf16.msra.mxu0 0
    %111 = vmatprep.subr.bf16.mxu0 0
    %112 = vmatpush1.bf16.msra.mxu0 0
    %113 = vmatprep.subr.bf16.mxu0 0
    %114 = vmatpush1.bf16.msra.mxu0 0
    %115 = vmatprep.subr.bf16.mxu0 0
    %116 = vmatpush1.bf16.msra.mxu0 0
    %117 = vmatprep.subr.bf16.mxu0 0
    %118 = vmatpush1.bf16.msra.mxu0 0
    %119 = vmatprep.mubr.bf16.mxu0 0
    %120 = vmatmul.mubr.bf16.gmra.mrb[0].mxu0 %v22
    %v121 = vpop.f32.mrb[0].mxu0
    %v122 = vadd.f32 0.0, %v121
    %v123 = vpop.f32.mrb[0].mxu0
    %v124 = vpop.f32.mrb[0].mxu0
    %v125 = vpop.f32.mrb[0].mxu0
    %126 = vdwg.mxu0
    %v127 = vadd.f32 %v21, %v122
    %128 = vst [vmem:[#allocation2] sm:$0x3] %v127
    // Predicated region
    $region18: #{transformer_forward.23} parent=1 // pred_check
      %p129 = pneg %p16
    $region19: #{transformer_forward.23} parent=1 // pred_check_branch
      %131 = sbr.rel (%p129) target = $region21
    $region20: #{transformer_forward.23} parent=1 // pred_region
      %v132 = vld [vmem:[#allocation2] sm:$0x3]
      %v133 = vld [vmem:[%s2] sm:$0x1]
      %v135 = vlaneseq
      %v136 = vshrl.u32 %v135, 7
      %v137 = vsub.s32 0, %v136
      %v138 = vrot.slane %v133, %v137
      %v140 = vadd.f32 %v132, %v138
      %v141 = vtanh.pop %v140
      %v142 = vpack.c.bf16 %v141, %v141
      %143 = vst [vmem:[#allocation3] sm:$0x1] %v142
    $region21: #{transformer_forward.23} parent=1 // pred_fallthru
      _
    // Predicated region
    $region22: #{transformer_forward.23} parent=1 // pred_check
      _
    $region23: #{transformer_forward.23} parent=1 // pred_check_branch
      %145 = sbr.rel (0) target = $region25
    $region24: #{transformer_forward.23} parent=1 // pred_region
      %s147 = ssub.s32 16, 16
      %148 = vsyncadd [#allocation4], %s147
      %s150 = sshll.u32 [#allocation3], 4
      %s151 = int_to_ptr.vmem [resolvable:$true] %s150
      %153 = dma.vmem_to_hbm [thread:$0]  %s151, 16, %s3, [#allocation4]
    $region25: #{transformer_forward.23} parent=1 // pred_fallthru
      _
    // Predicated region
    $region26: #{transformer_forward.23} parent=1 // pred_check
      _
    $region27: #{transformer_forward.23} parent=1 // pred_check_branch
      %155 = sbr.rel (0) target = $region29
    $region28: #{transformer_forward.23} parent=1 // pred_region
      %156 = dma.done [#allocation4], 16
    $region29: #{transformer_forward.23} parent=1 // pred_fallthru
      _
    %157 = vsyncpa [#allocation4], 1

</llo_original>
